<compile_context>
chip_gen: v6e
topology: v6e:2x2x1
jax: 0.10.0
libtpu: 0.0.40
codegen_flags: <defaults>
</compile_context>

<pallas_src>
import jax
import jax.numpy as jnp
from jax.experimental import pallas as pl
from jax.experimental.pallas import tpu as pltpu

LANE = 128       # hidden dim padded to the lane width
SUBLANE = 8      # batch padded to the sublane width
NEMB_PAD = 128   # embedding rows padded so the one-hot gather is a single lane-dense matmul


# ----------------------------------------------------------------------------
# Fused kernel: grid=(num_layers,)
#   every layer : hoisted input projection + unrolled GRU recurrence
#   l == 0      : in-kernel embedding gather (one-hot MXU matmul)
#   l == L-1    : mean over time + lane-dense CNN + fused bmm score
# ----------------------------------------------------------------------------
def zero_shot_kernel(idx_ref, len_ref, emb_ref, wih_ref, whh_ref, bih_ref, bhh_ref,
                     taps_ref, wc_ref, bc_ref, wp_ref, bp_ref,
                     out_ref, seq_ref):
    l = pl.program_id(0)
    num_layers = pl.num_programs(0)
    T, Bp, Hp = seq_ref.shape
    TB = T * Bp
    NEp = emb_ref.shape[0]

    # ---- layer-0 input: embedding gather via one-hot matmul (exact, f32) ----
    @pl.when(l == 0)
    def _():
        idx = idx_ref[...]                                                  # (T*Bp, 1) int32
        onehot = (jax.lax.broadcasted_iota(jnp.int32, (TB, NEp), 1)
                  == idx).astype(jnp.float32)                               # (T*Bp, NEp)
        x0 = jnp.dot(onehot, emb_ref[...], preferred_element_type=jnp.float32)
        seq_ref[...] = x0.reshape(T, Bp, Hp)

    # ---- hoisted input projection for ALL timesteps: one MXU matmul per layer ----
    seq_f = seq_ref[...].reshape(TB, Hp)
    gi_all = jnp.dot(seq_f.astype(wih_ref.dtype), wih_ref[...],
                     preferred_element_type=jnp.float32) + bih_ref[...]     # (T*Bp, 3Hp), vreg resident

    w_hh = whh_ref[...]
    b_hh = bhh_ref[...]
    len_b = len_ref[...]                                                    # (Bp, 1) f32 lengths
    not_last = l < num_layers - 1

    h = jnp.zeros((Bp, Hp), jnp.float32)
    acc = jnp.zeros((Bp, Hp), jnp.float32)

    # Static Python unroll: gi slices are static 8-row (sublane-aligned) sub-slices of gi_all,
    # so there is no per-step scratch store/load; masks are built in-kernel from len_b.
    for t in range(T):
        gi = gi_all[t * Bp:(t + 1) * Bp, :]                                 # (Bp, 3Hp)
        gh = jnp.dot(h.astype(w_hh.dtype), w_hh,
                     preferred_element_type=jnp.float32) + b_hh             # (Bp, 3Hp)
        # Gate blocks are 128-aligned (each gate padded to Hp).
        r = jax.nn.sigmoid(gi[:, :Hp] + gh[:, :Hp])
        z = jax.nn.sigmoid(gi[:, Hp:2 * Hp] + gh[:, Hp:2 * Hp])
        n = jnp.tanh(gi[:, 2 * Hp:] + r * gh[:, 2 * Hp:])
        h_new = (1.0 - z) * n + z * h

        m = jnp.where(len_b > t, 1.0, 0.0)                                  # (Bp, 1)
        out_t = m * h_new                                                   # zero past text_length
        h = out_t + (1.0 - m) * h                                           # freeze hidden past length
        acc = acc + out_t

        @pl.when(not_last)                                                  # last layer never re-read
        def _(t=t, out_t=out_t):
            seq_ref[t] = out_t

    # ---- last layer: time-mean + lane-dense CNN + fused bmm score ----
    @pl.when(l == num_layers - 1)
    def _():
        enc = acc * (1.0 / T)                                               # torch.mean over full T

        C = wc_ref.shape[1]
        FT = taps_ref.shape[2]
        inv_area = 1.0 / FT
        lane_ids = jax.lax.broadcasted_iota(jnp.int32, (Bp, LANE), 1)

        taps = [taps_ref[s] for s in range(9)]                              # 9 x (Bp, F*Tt), lane-dense
        pooled = jnp.zeros((Bp, LANE), jnp.float32)
        for c in range(C):
            a = taps[0] * wc_ref[0, c]
            for s in range(1, 9):
                a = a + wc_ref[s, c] * taps[s]                              # scalar * dense plane
            a = jnp.maximum(a + bc_ref[0, c], 0.0)                          # bias + ReLU on full vregs
            col = jnp.sum(a, axis=-1, keepdims=True) * inv_area             # GAP -> (Bp, 1)
            pooled = pooled + jnp.where(lane_ids == c, col, 0.0)            # channel c onto lane c

        cnn_out = jnp.dot(pooled.astype(wp_ref.dtype), wp_ref[...],
                          preferred_element_type=jnp.float32) + bp_ref[...]  # (Bp, Hp)

        # Fused torch.bmm(enc.unsqueeze(1), cnn.unsqueeze(2)).squeeze(): per-row dot product.
        score = jnp.sum(enc * cnn_out, axis=-1, keepdims=True)              # (Bp, 1)
        out_ref[...] = jnp.broadcast_to(score, out_ref.shape)               # lane-dense store


def zero_shot_pallas(idx_col, len_col, emb_p, w_ih, w_hh, b_ih, b_hh,
                     taps, w_conv, b_conv, w_proj, b_proj, *, T, Bp):
    L, Hp, G = w_ih.shape
    NEp = emb_p.shape[0]
    FT = taps.shape[2]
    Cp = w_proj.shape[0]
    return pl.pallas_call(
        zero_shot_kernel,
        out_shape=jax.ShapeDtypeStruct((Bp, LANE), jnp.float32),
        grid_spec=pltpu.PrefetchScalarGridSpec(
            num_scalar_prefetch=0,
            grid=(L,),
            in_specs=[
                pl.BlockSpec((T * Bp, 1), lambda l: (0, 0)),        # token ids (int32)
                pl.BlockSpec((Bp, 1), lambda l: (0, 0)),            # text lengths (f32)
                pl.BlockSpec((NEp, Hp), lambda l: (0, 0)),          # embedding table (f32)
                pl.BlockSpec((None, Hp, G), lambda l: (l, 0, 0)),   # W_ih (bf16)
                pl.BlockSpec((None, Hp, G), lambda l: (l, 0, 0)),   # W_hh (bf16)
                pl.BlockSpec((None, 1, G), lambda l: (l, 0, 0)),    # b_ih (f32)
                pl.BlockSpec((None, 1, G), lambda l: (l, 0, 0)),    # b_hh (f32)
                pl.BlockSpec((9, Bp, FT), lambda l: (0, 0, 0)),     # conv taps, lane-dense
                pl.BlockSpec(memory_space=pltpu.MemorySpace.SMEM),  # w_conv (9, C) scalars
                pl.BlockSpec(memory_space=pltpu.MemorySpace.SMEM),  # b_conv (1, C) scalars
                pl.BlockSpec((Cp, Hp), lambda l: (0, 0)),           # w_proj (bf16)
                pl.BlockSpec((1, Hp), lambda l: (0, 0)),            # b_proj (f32)
            ],
            out_specs=pl.BlockSpec((Bp, LANE), lambda l: (0, 0)),
            scratch_shapes=[pltpu.VMEM((T, Bp, Hp), jnp.float32)],  # per-layer output sequence
        ),
        compiler_params=pltpu.CompilerParams(
            dimension_semantics=("arbitrary",)),                    # layers are sequential
    )(idx_col, len_col, emb_p, w_ih, w_hh, b_ih, b_hh, taps, w_conv, b_conv, w_proj, b_proj)


# ----------------------------------------------------------------------------
# Parameter init + padding to lane/sublane-dense shapes
# ----------------------------------------------------------------------------
def init_params(num_embeddings, hidden_dim, num_layers, c_mid):
    key = jax.random.PRNGKey(42)
    ks = jax.random.split(key, 8)
    s = 0.1
    return {
        "emb": s * jax.random.normal(ks[0], (num_embeddings, hidden_dim), jnp.float32),
        # NOTE: kernel convention is x @ W with W of shape (H, 3H), gate order (r, z, n);
        # torch stores weight_ih_l{k} as (3H, H) -- transpose when porting real checkpoints.
        "w_ih": s * jax.random.normal(ks[1], (num_layers, hidden_dim, 3 * hidden_dim), jnp.float32),
        "w_hh": s * jax.random.normal(ks[2], (num_layers, hidden_dim, 3 * hidden_dim), jnp.float32),
        "b_ih": s * jax.random.normal(ks[3], (num_layers, 3 * hidden_dim), jnp.float32),
        "b_hh": s * jax.random.normal(ks[4], (num_layers, 3 * hidden_dim), jnp.float32),
        "w_conv": s * jax.random.normal(ks[5], (9, c_mid), jnp.float32),
        "b_conv": s * jax.random.normal(ks[6], (1, c_mid), jnp.float32),
        "w_proj": s * jax.random.normal(ks[7], (c_mid, hidden_dim), jnp.float32),
        "b_proj": jnp.zeros((1, hidden_dim), jnp.float32),
    }


def _pad_gate_mat(w, H, Hp):
    """(H, 3H) -> (Hp, 3Hp): each gate block placed at a 128-aligned column offset."""
    out = jnp.zeros((Hp, 3 * Hp), jnp.float32)
    for g in range(3):
        out = out.at[:H, g * Hp:g * Hp + H].set(w[:, g * H:(g + 1) * H])
    return out


def _pad_gate_vec(b, H, Hp):
    out = jnp.zeros((1, 3 * Hp), jnp.float32)
    for g in range(3):
        out = out.at[0, g * Hp:g * Hp + H].set(b[g * H:(g + 1) * H])
    return out


def prepare_params(params, H, Hp):
    """Pad weights to lane-dense shapes; bf16 only for MXU operands (f32 accumulate)."""
    L = params["w_ih"].shape[0]
    NE = params["emb"].shape[0]
    C = params["w_proj"].shape[0]
    assert NE <= NEMB_PAD and C <= LANE
    emb_p = jnp.zeros((NEMB_PAD, Hp), jnp.float32).at[:NE, :H].set(params["emb"])
    w_ih = jnp.stack([_pad_gate_mat(params["w_ih"][l], H, Hp) for l in range(L)])
    w_hh = jnp.stack([_pad_gate_mat(params["w_hh"][l], H, Hp) for l in range(L)])
    b_ih = jnp.stack([_pad_gate_vec(params["b_ih"][l], H, Hp) for l in range(L)])
    b_hh = jnp.stack([_pad_gate_vec(params["b_hh"][l], H, Hp) for l in range(L)])
    w_proj = jnp.zeros((LANE, Hp), jnp.float32).at[:C, :H].set(params["w_proj"])
    b_proj = jnp.zeros((1, Hp), jnp.float32).at[:, :H].set(params["b_proj"])
    return {
        "emb": emb_p,                          # f32 (exact one-hot gather in-kernel)
        "w_ih": w_ih.astype(jnp.bfloat16),     # MXU operand
        "w_hh": w_hh.astype(jnp.bfloat16),
        "b_ih": b_ih,                          # biases added post-matmul, stay f32
        "b_hh": b_hh,
        "w_conv": params["w_conv"],            # consumed as SMEM scalars
        "b_conv": params["b_conv"],
        "w_proj": w_proj.astype(jnp.bfloat16),
        "b_proj": b_proj,
    }


# ----------------------------------------------------------------------------
# Forward
# ----------------------------------------------------------------------------
@jax.jit
def zero_shot_forward(pp, text_indexes, text_lengths, spectrogram_features):
    B, T_seq = text_indexes.shape
    Bp = ((B + SUBLANE - 1) // SUBLANE) * SUBLANE

    # --- tiny layout plumbing (all O(KB)): time-major ids + length column ---
    idx_tb = jnp.transpose(text_indexes.astype(jnp.int32), (1, 0))          # (T, B)
    idx_col = jnp.pad(idx_tb, ((0, 0), (0, Bp - B))).reshape(T_seq * Bp, 1)  # (T*Bp, 1)
    len_col = jnp.pad(text_lengths.astype(jnp.float32), (0, Bp - B))[:, None]  # (Bp, 1)

    # --- wrapper-side im2col: 9 shifted 3x3-SAME taps with (F,Tt) flattened onto lanes ---
    spec = spectrogram_features[:, 0]                                       # (B, F, Tt)
    _, F, Tt = spec.shape
    xp = jnp.pad(spec, ((0, Bp - B), (1, 1), (1, 1)))                       # batch + SAME pad
    taps = jnp.stack([xp[:, di:di + F, dj:dj + Tt].reshape(Bp, F * Tt)
                      for di in range(3) for dj in range(3)], axis=0)       # (9, Bp, F*Tt)

    scores = zero_shot_pallas(idx_col, len_col, pp["emb"], pp["w_ih"], pp["w_hh"],
                              pp["b_ih"], pp["b_hh"], taps, pp["w_conv"], pp["b_conv"],
                              pp["w_proj"], pp["b_proj"], T=T_seq, Bp=Bp)   # (Bp, 128)

    return scores[:B, 0]                                                    # == bmm(...).squeeze()


if __name__ == "__main__":
    B, T_seq, H = 2, 8, 32
    num_embeddings, num_layers = 50, 2
    F, T_spec, C_mid = 16, 16, 16

    key = jax.random.PRNGKey(0)
    k1, k2 = jax.random.split(key)
    text_indexes = jax.random.randint(k1, (B, T_seq), 0, num_embeddings)
    text_lengths = jnp.array([T_seq, 5], dtype=jnp.int32)
    spectrogram = jax.random.normal(k2, (B, 1, F, T_spec), dtype=jnp.float32)

    params = init_params(num_embeddings, H, num_layers, C_mid)
    padded_params = prepare_params(params, H, LANE)

    out = zero_shot_forward(padded_params, text_indexes, text_lengths, spectrogram)
    out = jax.block_until_ready(out)

    assert out.shape == (B,), out.shape
    assert bool(jnp.all(jnp.isfinite(out)))
    print("KERNEL_OK")
</pallas_src>

<mosaic_0001>
module attributes {stable_mosaic.version = 11 : i64} {
  func.func @zero_shot_kernel(%arg0: i32, %arg1: memref<64x1xi32, #tpu.memory_space<vmem>>, %arg2: memref<8x1xf32, #tpu.memory_space<vmem>>, %arg3: memref<128x128xf32, #tpu.memory_space<vmem>>, %arg4: memref<1x128x384xbf16, #tpu.memory_space<vmem>>, %arg5: memref<1x128x384xbf16, #tpu.memory_space<vmem>>, %arg6: memref<1x1x384xf32, #tpu.memory_space<vmem>>, %arg7: memref<1x1x384xf32, #tpu.memory_space<vmem>>, %arg8: memref<9x8x256xf32, #tpu.memory_space<vmem>>, %arg9: memref<9x16xf32, #tpu.memory_space<smem>>, %arg10: memref<1x16xf32, #tpu.memory_space<smem>>, %arg11: memref<128x128xbf16, #tpu.memory_space<vmem>>, %arg12: memref<1x128xf32, #tpu.memory_space<vmem>>, %arg13: memref<8x128xf32, #tpu.memory_space<vmem>>, %arg14: memref<8x8x128xf32, #tpu.memory_space<vmem>>) attributes {dimension_semantics = [#tpu.dimension_semantics<arbitrary>], iteration_bounds = array<i64: 2>, scalar_prefetch = 0 : i64, scratch_operands = 1 : i64, tpu.core_type = #tpu.core_type<tc>, window_params = [{pipeline_mode = #tpu.pipeline_mode<synchronous>, transform_indices = @transform_0, window_bounds = array<i64: 64, 1>}, {pipeline_mode = #tpu.pipeline_mode<synchronous>, transform_indices = @transform_1, window_bounds = array<i64: 8, 1>}, {pipeline_mode = #tpu.pipeline_mode<synchronous>, transform_indices = @transform_2, window_bounds = array<i64: 128, 128>}, {transform_indices = @transform_3, window_bounds = array<i64: 1, 128, 384>}, {transform_indices = @transform_4, window_bounds = array<i64: 1, 128, 384>}, {transform_indices = @transform_5, window_bounds = array<i64: 1, 1, 384>}, {transform_indices = @transform_6, window_bounds = array<i64: 1, 1, 384>}, {pipeline_mode = #tpu.pipeline_mode<synchronous>, transform_indices = @transform_7, window_bounds = array<i64: 9, 8, 256>}, {transform_indices = @transform_8, window_bounds = array<i64: 9, 16>}, {transform_indices = @transform_9, window_bounds = array<i64: 1, 16>}, {pipeline_mode = #tpu.pipeline_mode<synchronous>, transform_indices = @transform_10, window_bounds = array<i64: 128, 128>}, {pipeline_mode = #tpu.pipeline_mode<synchronous>, transform_indices = @transform_11, window_bounds = array<i64: 1, 128>}, {pipeline_mode = #tpu.pipeline_mode<synchronous>, transform_indices = @transform_12, window_bounds = array<i64: 8, 128>}]} {
    %c0_i32 = arith.constant 0 : i32
    %0 = arith.cmpi eq, %arg0, %c0_i32 : i32
    %1 = arith.extui %0 : i1 to i32
    %c0_i32_0 = arith.constant 0 : i32
    %2 = arith.cmpi ne, %1, %c0_i32_0 : i32
    scf.if %2 {
      %c0_92 = arith.constant 0 : index
      %c0_93 = arith.constant 0 : index
      %387 = vector.load %arg1[%c0_92, %c0_93] : memref<64x1xi32, #tpu.memory_space<vmem>>, vector<64x1xi32>
      %388 = tpu.iota {dimensions = array<i32: 1>} : vector<64x128xi32>
      %389 = vector.broadcast %387 : vector<64x1xi32> to vector<64x128xi32>
      %390 = arith.cmpi eq, %388, %389 : vector<64x128xi32>
      %391 = arith.extui %390 : vector<64x128xi1> to vector<64x128xi32>
      %392 = arith.sitofp %391 : vector<64x128xi32> to vector<64x128xf32>
      %c0_94 = arith.constant 0 : index
      %c0_95 = arith.constant 0 : index
      %393 = vector.load %arg3[%c0_94, %c0_95] : memref<128x128xf32, #tpu.memory_space<vmem>>, vector<128x128xf32>
      %cst_96 = arith.constant dense<0.000000e+00> : vector<64x128xf32>
      %394 = tpu.matmul %392, %393, %cst_96 {dimension_numbers = #tpu.dot_dimension_numbers<[1], [0], [0], [1], [0, 0, 1, 1], [], []>} : vector<64x128xf32>, vector<128x128xf32>, vector<64x128xf32> -> vector<64x128xf32>
      %395 = vector.shape_cast %394 : vector<64x128xf32> to vector<8x8x128xf32>
      %c0_97 = arith.constant 0 : index
      %c0_98 = arith.constant 0 : index
      %c0_99 = arith.constant 0 : index
      %396 = vector.load %arg14[%c0_97, %c0_98, %c0_99] : memref<8x8x128xf32, #tpu.memory_space<vmem>>, vector<8x8x128xf32>
      tpu.vector_store %arg14[%c0_97, %c0_98, %c0_99], %395 {strides = array<i32>} : memref<8x8x128xf32, #tpu.memory_space<vmem>>, vector<8x8x128xf32>,
    } else {
    }
    %c0 = arith.constant 0 : index
    %c0_1 = arith.constant 0 : index
    %c0_2 = arith.constant 0 : index
    %3 = vector.load %arg14[%c0, %c0_1, %c0_2] : memref<8x8x128xf32, #tpu.memory_space<vmem>>, vector<8x8x128xf32>
    %4 = vector.shape_cast %3 : vector<8x8x128xf32> to vector<64x128xf32>
    %5 = arith.truncf %4 : vector<64x128xf32> to vector<64x128xbf16>
    %c0_3 = arith.constant 0 : index
    %c0_4 = arith.constant 0 : index
    %c0_5 = arith.constant 0 : index
    %6 = vector.load %arg4[%c0_3, %c0_4, %c0_5] : memref<1x128x384xbf16, #tpu.memory_space<vmem>>, vector<1x128x384xbf16>
    %7 = vector.shape_cast %6 : vector<1x128x384xbf16> to vector<128x384xbf16>
    %cst = arith.constant dense<0.000000e+00> : vector<64x384xf32>
    %8 = tpu.matmul %5, %7, %cst {dimension_numbers = #tpu.dot_dimension_numbers<[1], [0], [0], [1], [0, 0, 1, 1], [], []>} : vector<64x128xbf16>, vector<128x384xbf16>, vector<64x384xf32> -> vector<64x384xf32>
    %c0_6 = arith.constant 0 : index
    %c0_7 = arith.constant 0 : index
    %c0_8 = arith.constant 0 : index
    %9 = vector.load %arg6[%c0_6, %c0_7, %c0_8] : memref<1x1x384xf32, #tpu.memory_space<vmem>>, vector<1x1x384xf32>
    %10 = vector.shape_cast %9 : vector<1x1x384xf32> to vector<1x384xf32>
    %11 = vector.broadcast %10 : vector<1x384xf32> to vector<64x384xf32>
    %12 = arith.addf %8, %11 : vector<64x384xf32>
    %c0_9 = arith.constant 0 : index
    %c0_10 = arith.constant 0 : index
    %c0_11 = arith.constant 0 : index
    %13 = vector.load %arg5[%c0_9, %c0_10, %c0_11] : memref<1x128x384xbf16, #tpu.memory_space<vmem>>, vector<1x128x384xbf16>
    %14 = vector.shape_cast %13 : vector<1x128x384xbf16> to vector<128x384xbf16>
    %c0_12 = arith.constant 0 : index
    %c0_13 = arith.constant 0 : index
    %c0_14 = arith.constant 0 : index
    %15 = vector.load %arg7[%c0_12, %c0_13, %c0_14] : memref<1x1x384xf32, #tpu.memory_space<vmem>>, vector<1x1x384xf32>
    %16 = vector.shape_cast %15 : vector<1x1x384xf32> to vector<1x384xf32>
    %c0_15 = arith.constant 0 : index
    %c0_16 = arith.constant 0 : index
    %17 = vector.load %arg2[%c0_15, %c0_16] : memref<8x1xf32, #tpu.memory_space<vmem>>, vector<8x1xf32>
    %c1_i32 = arith.constant 1 : i32
    %18 = arith.cmpi slt, %arg0, %c1_i32 : i32
    %cst_17 = arith.constant 0.000000e+00 : f32
    %19 = vector.broadcast %cst_17 : f32 to vector<8x128xf32>
    %cst_18 = arith.constant 0.000000e+00 : f32
    %20 = vector.broadcast %cst_18 : f32 to vector<8x128xf32>
    %21 = vector.extract_strided_slice %12 {offsets = [0, 0], sizes = [8, 384], strides = [1, 1]} : vector<64x384xf32> to vector<8x384xf32>
    %22 = arith.truncf %19 : vector<8x128xf32> to vector<8x128xbf16>
    %cst_19 = arith.constant dense<0.000000e+00> : vector<8x384xf32>
    %23 = tpu.matmul %22, %14, %cst_19 {dimension_numbers = #tpu.dot_dimension_numbers<[1], [0], [0], [1], [0, 0, 1, 1], [], []>} : vector<8x128xbf16>, vector<128x384xbf16>, vector<8x384xf32> -> vector<8x384xf32>
    %24 = vector.broadcast %16 : vector<1x384xf32> to vector<8x384xf32>
    %25 = arith.addf %23, %24 : vector<8x384xf32>
    %26 = vector.extract_strided_slice %21 {offsets = [0, 0], sizes = [8, 128], strides = [1, 1]} : vector<8x384xf32> to vector<8x128xf32>
    %27 = vector.extract_strided_slice %25 {offsets = [0, 0], sizes = [8, 128], strides = [1, 1]} : vector<8x384xf32> to vector<8x128xf32>
    %28 = arith.addf %26, %27 : vector<8x128xf32>
    %29 = arith.negf %28 : vector<8x128xf32>
    %30 = math.exp %29 : vector<8x128xf32>
    %cst_20 = arith.constant 1.000000e+00 : f32
    %31 = vector.broadcast %cst_20 : f32 to vector<8x128xf32>
    %32 = arith.addf %31, %30 : vector<8x128xf32>
    %33 = arith.divf %31, %32 : vector<8x128xf32>
    %34 = vector.extract_strided_slice %21 {offsets = [0, 128], sizes = [8, 128], strides = [1, 1]} : vector<8x384xf32> to vector<8x128xf32>
    %35 = vector.extract_strided_slice %25 {offsets = [0, 128], sizes = [8, 128], strides = [1, 1]} : vector<8x384xf32> to vector<8x128xf32>
    %36 = arith.addf %34, %35 : vector<8x128xf32>
    %37 = arith.negf %36 : vector<8x128xf32>
    %38 = math.exp %37 : vector<8x128xf32>
    %cst_21 = arith.constant 1.000000e+00 : f32
    %39 = vector.broadcast %cst_21 : f32 to vector<8x128xf32>
    %40 = arith.addf %39, %38 : vector<8x128xf32>
    %41 = arith.divf %39, %40 : vector<8x128xf32>
    %42 = vector.extract_strided_slice %21 {offsets = [0, 256], sizes = [8, 128], strides = [1, 1]} : vector<8x384xf32> to vector<8x128xf32>
    %43 = vector.extract_strided_slice %25 {offsets = [0, 256], sizes = [8, 128], strides = [1, 1]} : vector<8x384xf32> to vector<8x128xf32>
    %44 = arith.mulf %33, %43 : vector<8x128xf32>
    %45 = arith.addf %42, %44 : vector<8x128xf32>
    %46 = math.tanh %45 : vector<8x128xf32>
    %cst_22 = arith.constant 1.000000e+00 : f32
    %47 = vector.broadcast %cst_22 : f32 to vector<8x128xf32>
    %48 = arith.subf %47, %41 : vector<8x128xf32>
    %49 = arith.mulf %48, %46 : vector<8x128xf32>
    %50 = arith.mulf %41, %19 : vector<8x128xf32>
    %51 = arith.addf %49, %50 : vector<8x128xf32>
    %cst_23 = arith.constant 0.000000e+00 : f32
    %52 = vector.broadcast %cst_23 : f32 to vector<8x1xf32>
    %53 = arith.cmpf ogt, %17, %52 : vector<8x1xf32>
    %cst_24 = arith.constant 1.000000e+00 : f32
    %cst_25 = arith.constant 0.000000e+00 : f32
    %54 = vector.broadcast %cst_24 : f32 to vector<8x1xf32>
    %55 = vector.broadcast %cst_25 : f32 to vector<8x1xf32>
    %56 = arith.select %53, %54, %55 : vector<8x1xi1>, vector<8x1xf32>
    %57 = vector.broadcast %56 : vector<8x1xf32> to vector<8x128xf32>
    %58 = arith.mulf %57, %51 : vector<8x128xf32>
    %cst_26 = arith.constant 1.000000e+00 : f32
    %59 = vector.broadcast %cst_26 : f32 to vector<8x1xf32>
    %60 = arith.subf %59, %56 : vector<8x1xf32>
    %61 = vector.broadcast %60 : vector<8x1xf32> to vector<8x128xf32>
    %62 = arith.mulf %61, %19 : vector<8x128xf32>
    %63 = arith.addf %58, %62 : vector<8x128xf32>
    %64 = arith.addf %20, %58 : vector<8x128xf32>
    %65 = arith.extui %18 : i1 to i32
    %c0_i32_27 = arith.constant 0 : i32
    %66 = arith.cmpi ne, %65, %c0_i32_27 : i32
    scf.if %66 {
      %c0_92 = arith.constant 0 : index
      %c0_93 = arith.constant 0 : index
      %c0_94 = arith.constant 0 : index
      %387 = vector.load %arg14[%c0_92, %c0_93, %c0_94] : memref<8x8x128xf32, #tpu.memory_space<vmem>>, vector<1x8x128xf32>
      %388 = vector.shape_cast %387 : vector<1x8x128xf32> to vector<8x128xf32>
      %389 = vector.shape_cast %58 : vector<8x128xf32> to vector<1x8x128xf32>
      tpu.vector_store %arg14[%c0_92, %c0_93, %c0_94], %389 {strides = array<i32>} : memref<8x8x128xf32, #tpu.memory_space<vmem>>, vector<1x8x128xf32>,
    } else {
    }
    %67 = vector.extract_strided_slice %12 {offsets = [8, 0], sizes = [8, 384], strides = [1, 1]} : vector<64x384xf32> to vector<8x384xf32>
    %68 = arith.truncf %63 : vector<8x128xf32> to vector<8x128xbf16>
    %cst_28 = arith.constant dense<0.000000e+00> : vector<8x384xf32>
    %69 = tpu.matmul %68, %14, %cst_28 {dimension_numbers = #tpu.dot_dimension_numbers<[1], [0], [0], [1], [0, 0, 1, 1], [], []>} : vector<8x128xbf16>, vector<128x384xbf16>, vector<8x384xf32> -> vector<8x384xf32>
    %70 = vector.broadcast %16 : vector<1x384xf32> to vector<8x384xf32>
    %71 = arith.addf %69, %70 : vector<8x384xf32>
    %72 = vector.extract_strided_slice %67 {offsets = [0, 0], sizes = [8, 128], strides = [1, 1]} : vector<8x384xf32> to vector<8x128xf32>
    %73 = vector.extract_strided_slice %71 {offsets = [0, 0], sizes = [8, 128], strides = [1, 1]} : vector<8x384xf32> to vector<8x128xf32>
    %74 = arith.addf %72, %73 : vector<8x128xf32>
    %75 = arith.negf %74 : vector<8x128xf32>
    %76 = math.exp %75 : vector<8x128xf32>
    %cst_29 = arith.constant 1.000000e+00 : f32
    %77 = vector.broadcast %cst_29 : f32 to vector<8x128xf32>
    %78 = arith.addf %77, %76 : vector<8x128xf32>
    %79 = arith.divf %77, %78 : vector<8x128xf32>
    %80 = vector.extract_strided_slice %67 {offsets = [0, 128], sizes = [8, 128], strides = [1, 1]} : vector<8x384xf32> to vector<8x128xf32>
    %81 = vector.extract_strided_slice %71 {offsets = [0, 128], sizes = [8, 128], strides = [1, 1]} : vector<8x384xf32> to vector<8x128xf32>
    %82 = arith.addf %80, %81 : vector<8x128xf32>
    %83 = arith.negf %82 : vector<8x128xf32>
    %84 = math.exp %83 : vector<8x128xf32>
    %cst_30 = arith.constant 1.000000e+00 : f32
    %85 = vector.broadcast %cst_30 : f32 to vector<8x128xf32>
    %86 = arith.addf %85, %84 : vector<8x128xf32>
    %87 = arith.divf %85, %86 : vector<8x128xf32>
    %88 = vector.extract_strided_slice %67 {offsets = [0, 256], sizes = [8, 128], strides = [1, 1]} : vector<8x384xf32> to vector<8x128xf32>
    %89 = vector.extract_strided_slice %71 {offsets = [0, 256], sizes = [8, 128], strides = [1, 1]} : vector<8x384xf32> to vector<8x128xf32>
    %90 = arith.mulf %79, %89 : vector<8x128xf32>
    %91 = arith.addf %88, %90 : vector<8x128xf32>
    %92 = math.tanh %91 : vector<8x128xf32>
    %cst_31 = arith.constant 1.000000e+00 : f32
    %93 = vector.broadcast %cst_31 : f32 to vector<8x128xf32>
    %94 = arith.subf %93, %87 : vector<8x128xf32>
    %95 = arith.mulf %94, %92 : vector<8x128xf32>
    %96 = arith.mulf %87, %63 : vector<8x128xf32>
    %97 = arith.addf %95, %96 : vector<8x128xf32>
    %cst_32 = arith.constant 1.000000e+00 : f32
    %98 = vector.broadcast %cst_32 : f32 to vector<8x1xf32>
    %99 = arith.cmpf ogt, %17, %98 : vector<8x1xf32>
    %cst_33 = arith.constant 1.000000e+00 : f32
    %cst_34 = arith.constant 0.000000e+00 : f32
    %100 = vector.broadcast %cst_33 : f32 to vector<8x1xf32>
    %101 = vector.broadcast %cst_34 : f32 to vector<8x1xf32>
    %102 = arith.select %99, %100, %101 : vector<8x1xi1>, vector<8x1xf32>
    %103 = vector.broadcast %102 : vector<8x1xf32> to vector<8x128xf32>
    %104 = arith.mulf %103, %97 : vector<8x128xf32>
    %cst_35 = arith.constant 1.000000e+00 : f32
    %105 = vector.broadcast %cst_35 : f32 to vector<8x1xf32>
    %106 = arith.subf %105, %102 : vector<8x1xf32>
    %107 = vector.broadcast %106 : vector<8x1xf32> to vector<8x128xf32>
    %108 = arith.mulf %107, %63 : vector<8x128xf32>
    %109 = arith.addf %104, %108 : vector<8x128xf32>
    %110 = arith.addf %64, %104 : vector<8x128xf32>
    %111 = arith.extui %18 : i1 to i32
    %c0_i32_36 = arith.constant 0 : i32
    %112 = arith.cmpi ne, %111, %c0_i32_36 : i32
    scf.if %112 {
      %c1 = arith.constant 1 : index
      %c0_92 = arith.constant 0 : index
      %c0_93 = arith.constant 0 : index
      %387 = vector.load %arg14[%c1, %c0_92, %c0_93] : memref<8x8x128xf32, #tpu.memory_space<vmem>>, vector<1x8x128xf32>
      %388 = vector.shape_cast %387 : vector<1x8x128xf32> to vector<8x128xf32>
      %389 = vector.shape_cast %104 : vector<8x128xf32> to vector<1x8x128xf32>
      tpu.vector_store %arg14[%c1, %c0_92, %c0_93], %389 {strides = array<i32>} : memref<8x8x128xf32, #tpu.memory_space<vmem>>, vector<1x8x128xf32>,
    } else {
    }
    %113 = vector.extract_strided_slice %12 {offsets = [16, 0], sizes = [8, 384], strides = [1, 1]} : vector<64x384xf32> to vector<8x384xf32>
    %114 = arith.truncf %109 : vector<8x128xf32> to vector<8x128xbf16>
    %cst_37 = arith.constant dense<0.000000e+00> : vector<8x384xf32>
    %115 = tpu.matmul %114, %14, %cst_37 {dimension_numbers = #tpu.dot_dimension_numbers<[1], [0], [0], [1], [0, 0, 1, 1], [], []>} : vector<8x128xbf16>, vector<128x384xbf16>, vector<8x384xf32> -> vector<8x384xf32>
    %116 = vector.broadcast %16 : vector<1x384xf32> to vector<8x384xf32>
    %117 = arith.addf %115, %116 : vector<8x384xf32>
    %118 = vector.extract_strided_slice %113 {offsets = [0, 0], sizes = [8, 128], strides = [1, 1]} : vector<8x384xf32> to vector<8x128xf32>
    %119 = vector.extract_strided_slice %117 {offsets = [0, 0], sizes = [8, 128], strides = [1, 1]} : vector<8x384xf32> to vector<8x128xf32>
    %120 = arith.addf %118, %119 : vector<8x128xf32>
    %121 = arith.negf %120 : vector<8x128xf32>
    %122 = math.exp %121 : vector<8x128xf32>
    %cst_38 = arith.constant 1.000000e+00 : f32
    %123 = vector.broadcast %cst_38 : f32 to vector<8x128xf32>
    %124 = arith.addf %123, %122 : vector<8x128xf32>
    %125 = arith.divf %123, %124 : vector<8x128xf32>
    %126 = vector.extract_strided_slice %113 {offsets = [0, 128], sizes = [8, 128], strides = [1, 1]} : vector<8x384xf32> to vector<8x128xf32>
    %127 = vector.extract_strided_slice %117 {offsets = [0, 128], sizes = [8, 128], strides = [1, 1]} : vector<8x384xf32> to vector<8x128xf32>
    %128 = arith.addf %126, %127 : vector<8x128xf32>
    %129 = arith.negf %128 : vector<8x128xf32>
    %130 = math.exp %129 : vector<8x128xf32>
    %cst_39 = arith.constant 1.000000e+00 : f32
    %131 = vector.broadcast %cst_39 : f32 to vector<8x128xf32>
    %132 = arith.addf %131, %130 : vector<8x128xf32>
    %133 = arith.divf %131, %132 : vector<8x128xf32>
    %134 = vector.extract_strided_slice %113 {offsets = [0, 256], sizes = [8, 128], strides = [1, 1]} : vector<8x384xf32> to vector<8x128xf32>
    %135 = vector.extract_strided_slice %117 {offsets = [0, 256], sizes = [8, 128], strides = [1, 1]} : vector<8x384xf32> to vector<8x128xf32>
    %136 = arith.mulf %125, %135 : vector<8x128xf32>
    %137 = arith.addf %134, %136 : vector<8x128xf32>
    %138 = math.tanh %137 : vector<8x128xf32>
    %cst_40 = arith.constant 1.000000e+00 : f32
    %139 = vector.broadcast %cst_40 : f32 to vector<8x128xf32>
    %140 = arith.subf %139, %133 : vector<8x128xf32>
    %141 = arith.mulf %140, %138 : vector<8x128xf32>
    %142 = arith.mulf %133, %109 : vector<8x128xf32>
    %143 = arith.addf %141, %142 : vector<8x128xf32>
    %cst_41 = arith.constant 2.000000e+00 : f32
    %144 = vector.broadcast %cst_41 : f32 to vector<8x1xf32>
    %145 = arith.cmpf ogt, %17, %144 : vector<8x1xf32>
    %cst_42 = arith.constant 1.000000e+00 : f32
    %cst_43 = arith.constant 0.000000e+00 : f32
    %146 = vector.broadcast %cst_42 : f32 to vector<8x1xf32>
    %147 = vector.broadcast %cst_43 : f32 to vector<8x1xf32>
    %148 = arith.select %145, %146, %147 : vector<8x1xi1>, vector<8x1xf32>
    %149 = vector.broadcast %148 : vector<8x1xf32> to vector<8x128xf32>
    %150 = arith.mulf %149, %143 : vector<8x128xf32>
    %cst_44 = arith.constant 1.000000e+00 : f32
    %151 = vector.broadcast %cst_44 : f32 to vector<8x1xf32>
    %152 = arith.subf %151, %148 : vector<8x1xf32>
    %153 = vector.broadcast %152 : vector<8x1xf32> to vector<8x128xf32>
    %154 = arith.mulf %153, %109 : vector<8x128xf32>
    %155 = arith.addf %150, %154 : vector<8x128xf32>
    %156 = arith.addf %110, %150 : vector<8x128xf32>
    %157 = arith.extui %18 : i1 to i32
    %c0_i32_45 = arith.constant 0 : i32
    %158 = arith.cmpi ne, %157, %c0_i32_45 : i32
    scf.if %158 {
      %c2 = arith.constant 2 : index
      %c0_92 = arith.constant 0 : index
      %c0_93 = arith.constant 0 : index
      %387 = vector.load %arg14[%c2, %c0_92, %c0_93] : memref<8x8x128xf32, #tpu.memory_space<vmem>>, vector<1x8x128xf32>
      %388 = vector.shape_cast %387 : vector<1x8x128xf32> to vector<8x128xf32>
      %389 = vector.shape_cast %150 : vector<8x128xf32> to vector<1x8x128xf32>
      tpu.vector_store %arg14[%c2, %c0_92, %c0_93], %389 {strides = array<i32>} : memref<8x8x128xf32, #tpu.memory_space<vmem>>, vector<1x8x128xf32>,
    } else {
    }
    %159 = vector.extract_strided_slice %12 {offsets = [24, 0], sizes = [8, 384], strides = [1, 1]} : vector<64x384xf32> to vector<8x384xf32>
    %160 = arith.truncf %155 : vector<8x128xf32> to vector<8x128xbf16>
    %cst_46 = arith.constant dense<0.000000e+00> : vector<8x384xf32>
    %161 = tpu.matmul %160, %14, %cst_46 {dimension_numbers = #tpu.dot_dimension_numbers<[1], [0], [0], [1], [0, 0, 1, 1], [], []>} : vector<8x128xbf16>, vector<128x384xbf16>, vector<8x384xf32> -> vector<8x384xf32>
    %162 = vector.broadcast %16 : vector<1x384xf32> to vector<8x384xf32>
    %163 = arith.addf %161, %162 : vector<8x384xf32>
    %164 = vector.extract_strided_slice %159 {offsets = [0, 0], sizes = [8, 128], strides = [1, 1]} : vector<8x384xf32> to vector<8x128xf32>
    %165 = vector.extract_strided_slice %163 {offsets = [0, 0], sizes = [8, 128], strides = [1, 1]} : vector<8x384xf32> to vector<8x128xf32>
    %166 = arith.addf %164, %165 : vector<8x128xf32>
    %167 = arith.negf %166 : vector<8x128xf32>
    %168 = math.exp %167 : vector<8x128xf32>
    %cst_47 = arith.constant 1.000000e+00 : f32
    %169 = vector.broadcast %cst_47 : f32 to vector<8x128xf32>
    %170 = arith.addf %169, %168 : vector<8x128xf32>
    %171 = arith.divf %169, %170 : vector<8x128xf32>
    %172 = vector.extract_strided_slice %159 {offsets = [0, 128], sizes = [8, 128], strides = [1, 1]} : vector<8x384xf32> to vector<8x128xf32>
    %173 = vector.extract_strided_slice %163 {offsets = [0, 128], sizes = [8, 128], strides = [1, 1]} : vector<8x384xf32> to vector<8x128xf32>
    %174 = arith.addf %172, %173 : vector<8x128xf32>
    %175 = arith.negf %174 : vector<8x128xf32>
    %176 = math.exp %175 : vector<8x128xf32>
    %cst_48 = arith.constant 1.000000e+00 : f32
    %177 = vector.broadcast %cst_48 : f32 to vector<8x128xf32>
    %178 = arith.addf %177, %176 : vector<8x128xf32>
    %179 = arith.divf %177, %178 : vector<8x128xf32>
    %180 = vector.extract_strided_slice %159 {offsets = [0, 256], sizes = [8, 128], strides = [1, 1]} : vector<8x384xf32> to vector<8x128xf32>
    %181 = vector.extract_strided_slice %163 {offsets = [0, 256], sizes = [8, 128], strides = [1, 1]} : vector<8x384xf32> to vector<8x128xf32>
    %182 = arith.mulf %171, %181 : vector<8x128xf32>
    %183 = arith.addf %180, %182 : vector<8x128xf32>
    %184 = math.tanh %183 : vector<8x128xf32>
    %cst_49 = arith.constant 1.000000e+00 : f32
    %185 = vector.broadcast %cst_49 : f32 to vector<8x128xf32>
    %186 = arith.subf %185, %179 : vector<8x128xf32>
    %187 = arith.mulf %186, %184 : vector<8x128xf32>
    %188 = arith.mulf %179, %155 : vector<8x128xf32>
    %189 = arith.addf %187, %188 : vector<8x128xf32>
    %cst_50 = arith.constant 3.000000e+00 : f32
    %190 = vector.broadcast %cst_50 : f32 to vector<8x1xf32>
    %191 = arith.cmpf ogt, %17, %190 : vector<8x1xf32>
    %cst_51 = arith.constant 1.000000e+00 : f32
    %cst_52 = arith.constant 0.000000e+00 : f32
    %192 = vector.broadcast %cst_51 : f32 to vector<8x1xf32>
    %193 = vector.broadcast %cst_52 : f32 to vector<8x1xf32>
    %194 = arith.select %191, %192, %193 : vector<8x1xi1>, vector<8x1xf32>
    %195 = vector.broadcast %194 : vector<8x1xf32> to vector<8x128xf32>
    %196 = arith.mulf %195, %189 : vector<8x128xf32>
    %cst_53 = arith.constant 1.000000e+00 : f32
    %197 = vector.broadcast %cst_53 : f32 to vector<8x1xf32>
    %198 = arith.subf %197, %194 : vector<8x1xf32>
    %199 = vector.broadcast %198 : vector<8x1xf32> to vector<8x128xf32>
    %200 = arith.mulf %199, %155 : vector<8x128xf32>
    %201 = arith.addf %196, %200 : vector<8x128xf32>
    %202 = arith.addf %156, %196 : vector<8x128xf32>
    %203 = arith.extui %18 : i1 to i32
    %c0_i32_54 = arith.constant 0 : i32
    %204 = arith.cmpi ne, %203, %c0_i32_54 : i32
    scf.if %204 {
      %c3 = arith.constant 3 : index
      %c0_92 = arith.constant 0 : index
      %c0_93 = arith.constant 0 : index
      %387 = vector.load %arg14[%c3, %c0_92, %c0_93] : memref<8x8x128xf32, #tpu.memory_space<vmem>>, vector<1x8x128xf32>
      %388 = vector.shape_cast %387 : vector<1x8x128xf32> to vector<8x128xf32>
      %389 = vector.shape_cast %196 : vector<8x128xf32> to vector<1x8x128xf32>
      tpu.vector_store %arg14[%c3, %c0_92, %c0_93], %389 {strides = array<i32>} : memref<8x8x128xf32, #tpu.memory_space<vmem>>, vector<1x8x128xf32>,
    } else {
    }
    %205 = vector.extract_strided_slice %12 {offsets = [32, 0], sizes = [8, 384], strides = [1, 1]} : vector<64x384xf32> to vector<8x384xf32>
    %206 = arith.truncf %201 : vector<8x128xf32> to vector<8x128xbf16>
    %cst_55 = arith.constant dense<0.000000e+00> : vector<8x384xf32>
    %207 = tpu.matmul %206, %14, %cst_55 {dimension_numbers = #tpu.dot_dimension_numbers<[1], [0], [0], [1], [0, 0, 1, 1], [], []>} : vector<8x128xbf16>, vector<128x384xbf16>, vector<8x384xf32> -> vector<8x384xf32>
    %208 = vector.broadcast %16 : vector<1x384xf32> to vector<8x384xf32>
    %209 = arith.addf %207, %208 : vector<8x384xf32>
    %210 = vector.extract_strided_slice %205 {offsets = [0, 0], sizes = [8, 128], strides = [1, 1]} : vector<8x384xf32> to vector<8x128xf32>
    %211 = vector.extract_strided_slice %209 {offsets = [0, 0], sizes = [8, 128], strides = [1, 1]} : vector<8x384xf32> to vector<8x128xf32>
    %212 = arith.addf %210, %211 : vector<8x128xf32>
    %213 = arith.negf %212 : vector<8x128xf32>
    %214 = math.exp %213 : vector<8x128xf32>
    %cst_56 = arith.constant 1.000000e+00 : f32
    %215 = vector.broadcast %cst_56 : f32 to vector<8x128xf32>
    %216 = arith.addf %215, %214 : vector<8x128xf32>
    %217 = arith.divf %215, %216 : vector<8x128xf32>
    %218 = vector.extract_strided_slice %205 {offsets = [0, 128], sizes = [8, 128], strides = [1, 1]} : vector<8x384xf32> to vector<8x128xf32>
    %219 = vector.extract_strided_slice %209 {offsets = [0, 128], sizes = [8, 128], strides = [1, 1]} : vector<8x384xf32> to vector<8x128xf32>
    %220 = arith.addf %218, %219 : vector<8x128xf32>
    %221 = arith.negf %220 : vector<8x128xf32>
    %222 = math.exp %221 : vector<8x128xf32>
    %cst_57 = arith.constant 1.000000e+00 : f32
    %223 = vector.broadcast %cst_57 : f32 to vector<8x128xf32>
    %224 = arith.addf %223, %222 : vector<8x128xf32>
    %225 = arith.divf %223, %224 : vector<8x128xf32>
    %226 = vector.extract_strided_slice %205 {offsets = [0, 256], sizes = [8, 128], strides = [1, 1]} : vector<8x384xf32> to vector<8x128xf32>
    %227 = vector.extract_strided_slice %209 {offsets = [0, 256], sizes = [8, 128], strides = [1, 1]} : vector<8x384xf32> to vector<8x128xf32>
    %228 = arith.mulf %217, %227 : vector<8x128xf32>
    %229 = arith.addf %226, %228 : vector<8x128xf32>
    %230 = math.tanh %229 : vector<8x128xf32>
    %cst_58 = arith.constant 1.000000e+00 : f32
    %231 = vector.broadcast %cst_58 : f32 to vector<8x128xf32>
    %232 = arith.subf %231, %225 : vector<8x128xf32>
    %233 = arith.mulf %232, %230 : vector<8x128xf32>
    %234 = arith.mulf %225, %201 : vector<8x128xf32>
    %235 = arith.addf %233, %234 : vector<8x128xf32>
    %cst_59 = arith.constant 4.000000e+00 : f32
    %236 = vector.broadcast %cst_59 : f32 to vector<8x1xf32>
    %237 = arith.cmpf ogt, %17, %236 : vector<8x1xf32>
    %cst_60 = arith.constant 1.000000e+00 : f32
    %cst_61 = arith.constant 0.000000e+00 : f32
    %238 = vector.broadcast %cst_60 : f32 to vector<8x1xf32>
    %239 = vector.broadcast %cst_61 : f32 to vector<8x1xf32>
    %240 = arith.select %237, %238, %239 : vector<8x1xi1>, vector<8x1xf32>
    %241 = vector.broadcast %240 : vector<8x1xf32> to vector<8x128xf32>
    %242 = arith.mulf %241, %235 : vector<8x128xf32>
    %cst_62 = arith.constant 1.000000e+00 : f32
    %243 = vector.broadcast %cst_62 : f32 to vector<8x1xf32>
    %244 = arith.subf %243, %240 : vector<8x1xf32>
    %245 = vector.broadcast %244 : vector<8x1xf32> to vector<8x128xf32>
    %246 = arith.mulf %245, %201 : vector<8x128xf32>
    %247 = arith.addf %242, %246 : vector<8x128xf32>
    %248 = arith.addf %202, %242 : vector<8x128xf32>
    %249 = arith.extui %18 : i1 to i32
    %c0_i32_63 = arith.constant 0 : i32
    %250 = arith.cmpi ne, %249, %c0_i32_63 : i32
    scf.if %250 {
      %c4 = arith.constant 4 : index
      %c0_92 = arith.constant 0 : index
      %c0_93 = arith.constant 0 : index
      %387 = vector.load %arg14[%c4, %c0_92, %c0_93] : memref<8x8x128xf32, #tpu.memory_space<vmem>>, vector<1x8x128xf32>
      %388 = vector.shape_cast %387 : vector<1x8x128xf32> to vector<8x128xf32>
      %389 = vector.shape_cast %242 : vector<8x128xf32> to vector<1x8x128xf32>
      tpu.vector_store %arg14[%c4, %c0_92, %c0_93], %389 {strides = array<i32>} : memref<8x8x128xf32, #tpu.memory_space<vmem>>, vector<1x8x128xf32>,
    } else {
    }
    %251 = vector.extract_strided_slice %12 {offsets = [40, 0], sizes = [8, 384], strides = [1, 1]} : vector<64x384xf32> to vector<8x384xf32>
    %252 = arith.truncf %247 : vector<8x128xf32> to vector<8x128xbf16>
    %cst_64 = arith.constant dense<0.000000e+00> : vector<8x384xf32>
    %253 = tpu.matmul %252, %14, %cst_64 {dimension_numbers = #tpu.dot_dimension_numbers<[1], [0], [0], [1], [0, 0, 1, 1], [], []>} : vector<8x128xbf16>, vector<128x384xbf16>, vector<8x384xf32> -> vector<8x384xf32>
    %254 = vector.broadcast %16 : vector<1x384xf32> to vector<8x384xf32>
    %255 = arith.addf %253, %254 : vector<8x384xf32>
    %256 = vector.extract_strided_slice %251 {offsets = [0, 0], sizes = [8, 128], strides = [1, 1]} : vector<8x384xf32> to vector<8x128xf32>
    %257 = vector.extract_strided_slice %255 {offsets = [0, 0], sizes = [8, 128], strides = [1, 1]} : vector<8x384xf32> to vector<8x128xf32>
    %258 = arith.addf %256, %257 : vector<8x128xf32>
    %259 = arith.negf %258 : vector<8x128xf32>
    %260 = math.exp %259 : vector<8x128xf32>
    %cst_65 = arith.constant 1.000000e+00 : f32
    %261 = vector.broadcast %cst_65 : f32 to vector<8x128xf32>
    %262 = arith.addf %261, %260 : vector<8x128xf32>
    %263 = arith.divf %261, %262 : vector<8x128xf32>
    %264 = vector.extract_strided_slice %251 {offsets = [0, 128], sizes = [8, 128], strides = [1, 1]} : vector<8x384xf32> to vector<8x128xf32>
    %265 = vector.extract_strided_slice %255 {offsets = [0, 128], sizes = [8, 128], strides = [1, 1]} : vector<8x384xf32> to vector<8x128xf32>
    %266 = arith.addf %264, %265 : vector<8x128xf32>
    %267 = arith.negf %266 : vector<8x128xf32>
    %268 = math.exp %267 : vector<8x128xf32>
    %cst_66 = arith.constant 1.000000e+00 : f32
    %269 = vector.broadcast %cst_66 : f32 to vector<8x128xf32>
    %270 = arith.addf %269, %268 : vector<8x128xf32>
    %271 = arith.divf %269, %270 : vector<8x128xf32>
    %272 = vector.extract_strided_slice %251 {offsets = [0, 256], sizes = [8, 128], strides = [1, 1]} : vector<8x384xf32> to vector<8x128xf32>
    %273 = vector.extract_strided_slice %255 {offsets = [0, 256], sizes = [8, 128], strides = [1, 1]} : vector<8x384xf32> to vector<8x128xf32>
    %274 = arith.mulf %263, %273 : vector<8x128xf32>
    %275 = arith.addf %272, %274 : vector<8x128xf32>
    %276 = math.tanh %275 : vector<8x128xf32>
    %cst_67 = arith.constant 1.000000e+00 : f32
    %277 = vector.broadcast %cst_67 : f32 to vector<8x128xf32>
    %278 = arith.subf %277, %271 : vector<8x128xf32>
    %279 = arith.mulf %278, %276 : vector<8x128xf32>
    %280 = arith.mulf %271, %247 : vector<8x128xf32>
    %281 = arith.addf %279, %280 : vector<8x128xf32>
    %cst_68 = arith.constant 5.000000e+00 : f32
    %282 = vector.broadcast %cst_68 : f32 to vector<8x1xf32>
    %283 = arith.cmpf ogt, %17, %282 : vector<8x1xf32>
    %cst_69 = arith.constant 1.000000e+00 : f32
    %cst_70 = arith.constant 0.000000e+00 : f32
    %284 = vector.broadcast %cst_69 : f32 to vector<8x1xf32>
    %285 = vector.broadcast %cst_70 : f32 to vector<8x1xf32>
    %286 = arith.select %283, %284, %285 : vector<8x1xi1>, vector<8x1xf32>
    %287 = vector.broadcast %286 : vector<8x1xf32> to vector<8x128xf32>
    %288 = arith.mulf %287, %281 : vector<8x128xf32>
    %cst_71 = arith.constant 1.000000e+00 : f32
    %289 = vector.broadcast %cst_71 : f32 to vector<8x1xf32>
    %290 = arith.subf %289, %286 : vector<8x1xf32>
    %291 = vector.broadcast %290 : vector<8x1xf32> to vector<8x128xf32>
    %292 = arith.mulf %291, %247 : vector<8x128xf32>
    %293 = arith.addf %288, %292 : vector<8x128xf32>
    %294 = arith.addf %248, %288 : vector<8x128xf32>
    %295 = arith.extui %18 : i1 to i32
    %c0_i32_72 = arith.constant 0 : i32
    %296 = arith.cmpi ne, %295, %c0_i32_72 : i32
    scf.if %296 {
      %c5 = arith.constant 5 : index
      %c0_92 = arith.constant 0 : index
      %c0_93 = arith.constant 0 : index
      %387 = vector.load %arg14[%c5, %c0_92, %c0_93] : memref<8x8x128xf32, #tpu.memory_space<vmem>>, vector<1x8x128xf32>
      %388 = vector.shape_cast %387 : vector<1x8x128xf32> to vector<8x128xf32>
      %389 = vector.shape_cast %288 : vector<8x128xf32> to vector<1x8x128xf32>
      tpu.vector_store %arg14[%c5, %c0_92, %c0_93], %389 {strides = array<i32>} : memref<8x8x128xf32, #tpu.memory_space<vmem>>, vector<1x8x128xf32>,
    } else {
    }
    %297 = vector.extract_strided_slice %12 {offsets = [48, 0], sizes = [8, 384], strides = [1, 1]} : vector<64x384xf32> to vector<8x384xf32>
    %298 = arith.truncf %293 : vector<8x128xf32> to vector<8x128xbf16>
    %cst_73 = arith.constant dense<0.000000e+00> : vector<8x384xf32>
    %299 = tpu.matmul %298, %14, %cst_73 {dimension_numbers = #tpu.dot_dimension_numbers<[1], [0], [0], [1], [0, 0, 1, 1], [], []>} : vector<8x128xbf16>, vector<128x384xbf16>, vector<8x384xf32> -> vector<8x384xf32>
    %300 = vector.broadcast %16 : vector<1x384xf32> to vector<8x384xf32>
    %301 = arith.addf %299, %300 : vector<8x384xf32>
    %302 = vector.extract_strided_slice %297 {offsets = [0, 0], sizes = [8, 128], strides = [1, 1]} : vector<8x384xf32> to vector<8x128xf32>
    %303 = vector.extract_strided_slice %301 {offsets = [0, 0], sizes = [8, 128], strides = [1, 1]} : vector<8x384xf32> to vector<8x128xf32>
    %304 = arith.addf %302, %303 : vector<8x128xf32>
    %305 = arith.negf %304 : vector<8x128xf32>
    %306 = math.exp %305 : vector<8x128xf32>
    %cst_74 = arith.constant 1.000000e+00 : f32
    %307 = vector.broadcast %cst_74 : f32 to vector<8x128xf32>
    %308 = arith.addf %307, %306 : vector<8x128xf32>
    %309 = arith.divf %307, %308 : vector<8x128xf32>
    %310 = vector.extract_strided_slice %297 {offsets = [0, 128], sizes = [8, 128], strides = [1, 1]} : vector<8x384xf32> to vector<8x128xf32>
    %311 = vector.extract_strided_slice %301 {offsets = [0, 128], sizes = [8, 128], strides = [1, 1]} : vector<8x384xf32> to vector<8x128xf32>
    %312 = arith.addf %310, %311 : vector<8x128xf32>
    %313 = arith.negf %312 : vector<8x128xf32>
    %314 = math.exp %313 : vector<8x128xf32>
    %cst_75 = arith.constant 1.000000e+00 : f32
    %315 = vector.broadcast %cst_75 : f32 to vector<8x128xf32>
    %316 = arith.addf %315, %314 : vector<8x128xf32>
    %317 = arith.divf %315, %316 : vector<8x128xf32>
    %318 = vector.extract_strided_slice %297 {offsets = [0, 256], sizes = [8, 128], strides = [1, 1]} : vector<8x384xf32> to vector<8x128xf32>
    %319 = vector.extract_strided_slice %301 {offsets = [0, 256], sizes = [8, 128], strides = [1, 1]} : vector<8x384xf32> to vector<8x128xf32>
    %320 = arith.mulf %309, %319 : vector<8x128xf32>
    %321 = arith.addf %318, %320 : vector<8x128xf32>
    %322 = math.tanh %321 : vector<8x128xf32>
    %cst_76 = arith.constant 1.000000e+00 : f32
    %323 = vector.broadcast %cst_76 : f32 to vector<8x128xf32>
    %324 = arith.subf %323, %317 : vector<8x128xf32>
    %325 = arith.mulf %324, %322 : vector<8x128xf32>
    %326 = arith.mulf %317, %293 : vector<8x128xf32>
    %327 = arith.addf %325, %326 : vector<8x128xf32>
    %cst_77 = arith.constant 6.000000e+00 : f32
    %328 = vector.broadcast %cst_77 : f32 to vector<8x1xf32>
    %329 = arith.cmpf ogt, %17, %328 : vector<8x1xf32>
    %cst_78 = arith.constant 1.000000e+00 : f32
    %cst_79 = arith.constant 0.000000e+00 : f32
    %330 = vector.broadcast %cst_78 : f32 to vector<8x1xf32>
    %331 = vector.broadcast %cst_79 : f32 to vector<8x1xf32>
    %332 = arith.select %329, %330, %331 : vector<8x1xi1>, vector<8x1xf32>
    %333 = vector.broadcast %332 : vector<8x1xf32> to vector<8x128xf32>
    %334 = arith.mulf %333, %327 : vector<8x128xf32>
    %cst_80 = arith.constant 1.000000e+00 : f32
    %335 = vector.broadcast %cst_80 : f32 to vector<8x1xf32>
    %336 = arith.subf %335, %332 : vector<8x1xf32>
    %337 = vector.broadcast %336 : vector<8x1xf32> to vector<8x128xf32>
    %338 = arith.mulf %337, %293 : vector<8x128xf32>
    %339 = arith.addf %334, %338 : vector<8x128xf32>
    %340 = arith.addf %294, %334 : vector<8x128xf32>
    %341 = arith.extui %18 : i1 to i32
    %c0_i32_81 = arith.constant 0 : i32
    %342 = arith.cmpi ne, %341, %c0_i32_81 : i32
    scf.if %342 {
      %c6 = arith.constant 6 : index
      %c0_92 = arith.constant 0 : index
      %c0_93 = arith.constant 0 : index
      %387 = vector.load %arg14[%c6, %c0_92, %c0_93] : memref<8x8x128xf32, #tpu.memory_space<vmem>>, vector<1x8x128xf32>
      %388 = vector.shape_cast %387 : vector<1x8x128xf32> to vector<8x128xf32>
      %389 = vector.shape_cast %334 : vector<8x128xf32> to vector<1x8x128xf32>
      tpu.vector_store %arg14[%c6, %c0_92, %c0_93], %389 {strides = array<i32>} : memref<8x8x128xf32, #tpu.memory_space<vmem>>, vector<1x8x128xf32>,
    } else {
    }
    %343 = vector.extract_strided_slice %12 {offsets = [56, 0], sizes = [8, 384], strides = [1, 1]} : vector<64x384xf32> to vector<8x384xf32>
    %344 = arith.truncf %339 : vector<8x128xf32> to vector<8x128xbf16>
    %cst_82 = arith.constant dense<0.000000e+00> : vector<8x384xf32>
    %345 = tpu.matmul %344, %14, %cst_82 {dimension_numbers = #tpu.dot_dimension_numbers<[1], [0], [0], [1], [0, 0, 1, 1], [], []>} : vector<8x128xbf16>, vector<128x384xbf16>, vector<8x384xf32> -> vector<8x384xf32>
    %346 = vector.broadcast %16 : vector<1x384xf32> to vector<8x384xf32>
    %347 = arith.addf %345, %346 : vector<8x384xf32>
    %348 = vector.extract_strided_slice %343 {offsets = [0, 0], sizes = [8, 128], strides = [1, 1]} : vector<8x384xf32> to vector<8x128xf32>
    %349 = vector.extract_strided_slice %347 {offsets = [0, 0], sizes = [8, 128], strides = [1, 1]} : vector<8x384xf32> to vector<8x128xf32>
    %350 = arith.addf %348, %349 : vector<8x128xf32>
    %351 = arith.negf %350 : vector<8x128xf32>
    %352 = math.exp %351 : vector<8x128xf32>
    %cst_83 = arith.constant 1.000000e+00 : f32
    %353 = vector.broadcast %cst_83 : f32 to vector<8x128xf32>
    %354 = arith.addf %353, %352 : vector<8x128xf32>
    %355 = arith.divf %353, %354 : vector<8x128xf32>
    %356 = vector.extract_strided_slice %343 {offsets = [0, 128], sizes = [8, 128], strides = [1, 1]} : vector<8x384xf32> to vector<8x128xf32>
    %357 = vector.extract_strided_slice %347 {offsets = [0, 128], sizes = [8, 128], strides = [1, 1]} : vector<8x384xf32> to vector<8x128xf32>
    %358 = arith.addf %356, %357 : vector<8x128xf32>
    %359 = arith.negf %358 : vector<8x128xf32>
    %360 = math.exp %359 : vector<8x128xf32>
    %cst_84 = arith.constant 1.000000e+00 : f32
    %361 = vector.broadcast %cst_84 : f32 to vector<8x128xf32>
    %362 = arith.addf %361, %360 : vector<8x128xf32>
    %363 = arith.divf %361, %362 : vector<8x128xf32>
    %364 = vector.extract_strided_slice %343 {offsets = [0, 256], sizes = [8, 128], strides = [1, 1]} : vector<8x384xf32> to vector<8x128xf32>
    %365 = vector.extract_strided_slice %347 {offsets = [0, 256], sizes = [8, 128], strides = [1, 1]} : vector<8x384xf32> to vector<8x128xf32>
    %366 = arith.mulf %355, %365 : vector<8x128xf32>
    %367 = arith.addf %364, %366 : vector<8x128xf32>
    %368 = math.tanh %367 : vector<8x128xf32>
    %cst_85 = arith.constant 1.000000e+00 : f32
    %369 = vector.broadcast %cst_85 : f32 to vector<8x128xf32>
    %370 = arith.subf %369, %363 : vector<8x128xf32>
    %371 = arith.mulf %370, %368 : vector<8x128xf32>
    %372 = arith.mulf %363, %339 : vector<8x128xf32>
    %373 = arith.addf %371, %372 : vector<8x128xf32>
    %cst_86 = arith.constant 7.000000e+00 : f32
    %374 = vector.broadcast %cst_86 : f32 to vector<8x1xf32>
    %375 = arith.cmpf ogt, %17, %374 : vector<8x1xf32>
    %cst_87 = arith.constant 1.000000e+00 : f32
    %cst_88 = arith.constant 0.000000e+00 : f32
    %376 = vector.broadcast %cst_87 : f32 to vector<8x1xf32>
    %377 = vector.broadcast %cst_88 : f32 to vector<8x1xf32>
    %378 = arith.select %375, %376, %377 : vector<8x1xi1>, vector<8x1xf32>
    %379 = vector.broadcast %378 : vector<8x1xf32> to vector<8x128xf32>
    %380 = arith.mulf %379, %373 : vector<8x128xf32>
    %381 = arith.addf %340, %380 : vector<8x128xf32>
    %382 = arith.extui %18 : i1 to i32
    %c0_i32_89 = arith.constant 0 : i32
    %383 = arith.cmpi ne, %382, %c0_i32_89 : i32
    scf.if %383 {
      %c7 = arith.constant 7 : index
      %c0_92 = arith.constant 0 : index
      %c0_93 = arith.constant 0 : index
      %387 = vector.load %arg14[%c7, %c0_92, %c0_93] : memref<8x8x128xf32, #tpu.memory_space<vmem>>, vector<1x8x128xf32>
      %388 = vector.shape_cast %387 : vector<1x8x128xf32> to vector<8x128xf32>
      %389 = vector.shape_cast %380 : vector<8x128xf32> to vector<1x8x128xf32>
      tpu.vector_store %arg14[%c7, %c0_92, %c0_93], %389 {strides = array<i32>} : memref<8x8x128xf32, #tpu.memory_space<vmem>>, vector<1x8x128xf32>,
    } else {
    }
    %c1_i32_90 = arith.constant 1 : i32
    %384 = arith.cmpi eq, %arg0, %c1_i32_90 : i32
    %385 = arith.extui %384 : i1 to i32
    %c0_i32_91 = arith.constant 0 : i32
    %386 = arith.cmpi ne, %385, %c0_i32_91 : i32
    scf.if %386 {
      %cst_92 = arith.constant 1.250000e-01 : f32
      %387 = vector.broadcast %cst_92 : f32 to vector<8x128xf32>
      %388 = arith.mulf %381, %387 : vector<8x128xf32>
      %389 = tpu.iota {dimensions = array<i32: 1>} : vector<8x128xi32>
      %c0_93 = arith.constant 0 : index
      %c0_94 = arith.constant 0 : index
      %c0_95 = arith.constant 0 : index
      %390 = vector.load %arg8[%c0_93, %c0_94, %c0_95] : memref<9x8x256xf32, #tpu.memory_space<vmem>>, vector<1x8x256xf32>
      %391 = vector.shape_cast %390 : vector<1x8x256xf32> to vector<8x256xf32>
      %c1 = arith.constant 1 : index
      %c0_96 = arith.constant 0 : index
      %c0_97 = arith.constant 0 : index
      %392 = vector.load %arg8[%c1, %c0_96, %c0_97] : memref<9x8x256xf32, #tpu.memory_space<vmem>>, vector<1x8x256xf32>
      %393 = vector.shape_cast %392 : vector<1x8x256xf32> to vector<8x256xf32>
      %c2 = arith.constant 2 : index
      %c0_98 = arith.constant 0 : index
      %c0_99 = arith.constant 0 : index
      %394 = vector.load %arg8[%c2, %c0_98, %c0_99] : memref<9x8x256xf32, #tpu.memory_space<vmem>>, vector<1x8x256xf32>
      %395 = vector.shape_cast %394 : vector<1x8x256xf32> to vector<8x256xf32>
      %c3 = arith.constant 3 : index
      %c0_100 = arith.constant 0 : index
      %c0_101 = arith.constant 0 : index
      %396 = vector.load %arg8[%c3, %c0_100, %c0_101] : memref<9x8x256xf32, #tpu.memory_space<vmem>>, vector<1x8x256xf32>
      %397 = vector.shape_cast %396 : vector<1x8x256xf32> to vector<8x256xf32>
      %c4 = arith.constant 4 : index
      %c0_102 = arith.constant 0 : index
      %c0_103 = arith.constant 0 : index
      %398 = vector.load %arg8[%c4, %c0_102, %c0_103] : memref<9x8x256xf32, #tpu.memory_space<vmem>>, vector<1x8x256xf32>
      %399 = vector.shape_cast %398 : vector<1x8x256xf32> to vector<8x256xf32>
      %c5 = arith.constant 5 : index
      %c0_104 = arith.constant 0 : index
      %c0_105 = arith.constant 0 : index
      %400 = vector.load %arg8[%c5, %c0_104, %c0_105] : memref<9x8x256xf32, #tpu.memory_space<vmem>>, vector<1x8x256xf32>
      %401 = vector.shape_cast %400 : vector<1x8x256xf32> to vector<8x256xf32>
      %c6 = arith.constant 6 : index
      %c0_106 = arith.constant 0 : index
      %c0_107 = arith.constant 0 : index
      %402 = vector.load %arg8[%c6, %c0_106, %c0_107] : memref<9x8x256xf32, #tpu.memory_space<vmem>>, vector<1x8x256xf32>
      %403 = vector.shape_cast %402 : vector<1x8x256xf32> to vector<8x256xf32>
      %c7 = arith.constant 7 : index
      %c0_108 = arith.constant 0 : index
      %c0_109 = arith.constant 0 : index
      %404 = vector.load %arg8[%c7, %c0_108, %c0_109] : memref<9x8x256xf32, #tpu.memory_space<vmem>>, vector<1x8x256xf32>
      %405 = vector.shape_cast %404 : vector<1x8x256xf32> to vector<8x256xf32>
      %c8 = arith.constant 8 : index
      %c0_110 = arith.constant 0 : index
      %c0_111 = arith.constant 0 : index
      %406 = vector.load %arg8[%c8, %c0_110, %c0_111] : memref<9x8x256xf32, #tpu.memory_space<vmem>>, vector<1x8x256xf32>
      %407 = vector.shape_cast %406 : vector<1x8x256xf32> to vector<8x256xf32>
      %cst_112 = arith.constant 0.000000e+00 : f32
      %408 = vector.broadcast %cst_112 : f32 to vector<8x128xf32>
      %c0_113 = arith.constant 0 : index
      %c0_114 = arith.constant 0 : index
      %409 = memref.load %arg9[%c0_113, %c0_114] : memref<9x16xf32, #tpu.memory_space<smem>>
      %410 = vector.broadcast %409 : f32 to vector<8x256xf32>
      %411 = arith.mulf %391, %410 : vector<8x256xf32>
      %c1_115 = arith.constant 1 : index
      %c0_116 = arith.constant 0 : index
      %412 = memref.load %arg9[%c1_115, %c0_116] : memref<9x16xf32, #tpu.memory_space<smem>>
      %413 = vector.broadcast %412 : f32 to vector<8x256xf32>
      %414 = arith.mulf %413, %393 : vector<8x256xf32>
      %415 = arith.addf %411, %414 : vector<8x256xf32>
      %c2_117 = arith.constant 2 : index
      %c0_118 = arith.constant 0 : index
      %416 = memref.load %arg9[%c2_117, %c0_118] : memref<9x16xf32, #tpu.memory_space<smem>>
      %417 = vector.broadcast %416 : f32 to vector<8x256xf32>
      %418 = arith.mulf %417, %395 : vector<8x256xf32>
      %419 = arith.addf %415, %418 : vector<8x256xf32>
      %c3_119 = arith.constant 3 : index
      %c0_120 = arith.constant 0 : index
      %420 = memref.load %arg9[%c3_119, %c0_120] : memref<9x16xf32, #tpu.memory_space<smem>>
      %421 = vector.broadcast %420 : f32 to vector<8x256xf32>
      %422 = arith.mulf %421, %397 : vector<8x256xf32>
      %423 = arith.addf %419, %422 : vector<8x256xf32>
      %c4_121 = arith.constant 4 : index
      %c0_122 = arith.constant 0 : index
      %424 = memref.load %arg9[%c4_121, %c0_122] : memref<9x16xf32, #tpu.memory_space<smem>>
      %425 = vector.broadcast %424 : f32 to vector<8x256xf32>
      %426 = arith.mulf %425, %399 : vector<8x256xf32>
      %427 = arith.addf %423, %426 : vector<8x256xf32>
      %c5_123 = arith.constant 5 : index
      %c0_124 = arith.constant 0 : index
      %428 = memref.load %arg9[%c5_123, %c0_124] : memref<9x16xf32, #tpu.memory_space<smem>>
      %429 = vector.broadcast %428 : f32 to vector<8x256xf32>
      %430 = arith.mulf %429, %401 : vector<8x256xf32>
      %431 = arith.addf %427, %430 : vector<8x256xf32>
      %c6_125 = arith.constant 6 : index
      %c0_126 = arith.constant 0 : index
      %432 = memref.load %arg9[%c6_125, %c0_126] : memref<9x16xf32, #tpu.memory_space<smem>>
      %433 = vector.broadcast %432 : f32 to vector<8x256xf32>
      %434 = arith.mulf %433, %403 : vector<8x256xf32>
      %435 = arith.addf %431, %434 : vector<8x256xf32>
      %c7_127 = arith.constant 7 : index
      %c0_128 = arith.constant 0 : index
      %436 = memref.load %arg9[%c7_127, %c0_128] : memref<9x16xf32, #tpu.memory_space<smem>>
      %437 = vector.broadcast %436 : f32 to vector<8x256xf32>
      %438 = arith.mulf %437, %405 : vector<8x256xf32>
      %439 = arith.addf %435, %438 : vector<8x256xf32>
      %c8_129 = arith.constant 8 : index
      %c0_130 = arith.constant 0 : index
      %440 = memref.load %arg9[%c8_129, %c0_130] : memref<9x16xf32, #tpu.memory_space<smem>>
      %441 = vector.broadcast %440 : f32 to vector<8x256xf32>
      %442 = arith.mulf %441, %407 : vector<8x256xf32>
      %443 = arith.addf %439, %442 : vector<8x256xf32>
      %c0_131 = arith.constant 0 : index
      %c0_132 = arith.constant 0 : index
      %444 = memref.load %arg10[%c0_131, %c0_132] : memref<1x16xf32, #tpu.memory_space<smem>>
      %445 = vector.broadcast %444 : f32 to vector<8x256xf32>
      %446 = arith.addf %443, %445 : vector<8x256xf32>
      %cst_133 = arith.constant 0.000000e+00 : f32
      %447 = vector.broadcast %cst_133 : f32 to vector<8x256xf32>
      %448 = arith.maximumf %446, %447 : vector<8x256xf32>
      %cst_134 = arith.constant dense<0.000000e+00> : vector<8xf32>
      %449 = vector.multi_reduction <add>, %448, %cst_134 [1] : vector<8x256xf32> to vector<8xf32>
      %450 = vector.shape_cast %449 : vector<8xf32> to vector<8x1xf32>
      %cst_135 = arith.constant 3.906250e-03 : f32
      %451 = vector.broadcast %cst_135 : f32 to vector<8x1xf32>
      %452 = arith.mulf %450, %451 : vector<8x1xf32>
      %c0_i32_136 = arith.constant 0 : i32
      %453 = vector.broadcast %c0_i32_136 : i32 to vector<8x128xi32>
      %454 = arith.cmpi eq, %389, %453 : vector<8x128xi32>
      %cst_137 = arith.constant 0.000000e+00 : f32
      %455 = vector.shape_cast %452 : vector<8x1xf32> to vector<8x1xf32>
      %456 = vector.broadcast %455 : vector<8x1xf32> to vector<8x128xf32>
      %457 = vector.broadcast %cst_137 : f32 to vector<8x128xf32>
      %458 = arith.select %454, %456, %457 : vector<8x128xi1>, vector<8x128xf32>
      %459 = arith.addf %408, %458 : vector<8x128xf32>
      %c0_138 = arith.constant 0 : index
      %c1_139 = arith.constant 1 : index
      %460 = memref.load %arg9[%c0_138, %c1_139] : memref<9x16xf32, #tpu.memory_space<smem>>
      %461 = vector.broadcast %460 : f32 to vector<8x256xf32>
      %462 = arith.mulf %391, %461 : vector<8x256xf32>
      %c1_140 = arith.constant 1 : index
      %c1_141 = arith.constant 1 : index
      %463 = memref.load %arg9[%c1_140, %c1_141] : memref<9x16xf32, #tpu.memory_space<smem>>
      %464 = vector.broadcast %463 : f32 to vector<8x256xf32>
      %465 = arith.mulf %464, %393 : vector<8x256xf32>
      %466 = arith.addf %462, %465 : vector<8x256xf32>
      %c2_142 = arith.constant 2 : index
      %c1_143 = arith.constant 1 : index
      %467 = memref.load %arg9[%c2_142, %c1_143] : memref<9x16xf32, #tpu.memory_space<smem>>
      %468 = vector.broadcast %467 : f32 to vector<8x256xf32>
      %469 = arith.mulf %468, %395 : vector<8x256xf32>
      %470 = arith.addf %466, %469 : vector<8x256xf32>
      %c3_144 = arith.constant 3 : index
      %c1_145 = arith.constant 1 : index
      %471 = memref.load %arg9[%c3_144, %c1_145] : memref<9x16xf32, #tpu.memory_space<smem>>
      %472 = vector.broadcast %471 : f32 to vector<8x256xf32>
      %473 = arith.mulf %472, %397 : vector<8x256xf32>
      %474 = arith.addf %470, %473 : vector<8x256xf32>
      %c4_146 = arith.constant 4 : index
      %c1_147 = arith.constant 1 : index
      %475 = memref.load %arg9[%c4_146, %c1_147] : memref<9x16xf32, #tpu.memory_space<smem>>
      %476 = vector.broadcast %475 : f32 to vector<8x256xf32>
      %477 = arith.mulf %476, %399 : vector<8x256xf32>
      %478 = arith.addf %474, %477 : vector<8x256xf32>
      %c5_148 = arith.constant 5 : index
      %c1_149 = arith.constant 1 : index
      %479 = memref.load %arg9[%c5_148, %c1_149] : memref<9x16xf32, #tpu.memory_space<smem>>
      %480 = vector.broadcast %479 : f32 to vector<8x256xf32>
      %481 = arith.mulf %480, %401 : vector<8x256xf32>
      %482 = arith.addf %478, %481 : vector<8x256xf32>
      %c6_150 = arith.constant 6 : index
      %c1_151 = arith.constant 1 : index
      %483 = memref.load %arg9[%c6_150, %c1_151] : memref<9x16xf32, #tpu.memory_space<smem>>
      %484 = vector.broadcast %483 : f32 to vector<8x256xf32>
      %485 = arith.mulf %484, %403 : vector<8x256xf32>
      %486 = arith.addf %482, %485 : vector<8x256xf32>
      %c7_152 = arith.constant 7 : index
      %c1_153 = arith.constant 1 : index
      %487 = memref.load %arg9[%c7_152, %c1_153] : memref<9x16xf32, #tpu.memory_space<smem>>
      %488 = vector.broadcast %487 : f32 to vector<8x256xf32>
      %489 = arith.mulf %488, %405 : vector<8x256xf32>
      %490 = arith.addf %486, %489 : vector<8x256xf32>
      %c8_154 = arith.constant 8 : index
      %c1_155 = arith.constant 1 : index
      %491 = memref.load %arg9[%c8_154, %c1_155] : memref<9x16xf32, #tpu.memory_space<smem>>
      %492 = vector.broadcast %491 : f32 to vector<8x256xf32>
      %493 = arith.mulf %492, %407 : vector<8x256xf32>
      %494 = arith.addf %490, %493 : vector<8x256xf32>
      %c0_156 = arith.constant 0 : index
      %c1_157 = arith.constant 1 : index
      %495 = memref.load %arg10[%c0_156, %c1_157] : memref<1x16xf32, #tpu.memory_space<smem>>
      %496 = vector.broadcast %495 : f32 to vector<8x256xf32>
      %497 = arith.addf %494, %496 : vector<8x256xf32>
      %cst_158 = arith.constant 0.000000e+00 : f32
      %498 = vector.broadcast %cst_158 : f32 to vector<8x256xf32>
      %499 = arith.maximumf %497, %498 : vector<8x256xf32>
      %cst_159 = arith.constant dense<0.000000e+00> : vector<8xf32>
      %500 = vector.multi_reduction <add>, %499, %cst_159 [1] : vector<8x256xf32> to vector<8xf32>
      %501 = vector.shape_cast %500 : vector<8xf32> to vector<8x1xf32>
      %cst_160 = arith.constant 3.906250e-03 : f32
      %502 = vector.broadcast %cst_160 : f32 to vector<8x1xf32>
      %503 = arith.mulf %501, %502 : vector<8x1xf32>
      %c1_i32_161 = arith.constant 1 : i32
      %504 = vector.broadcast %c1_i32_161 : i32 to vector<8x128xi32>
      %505 = arith.cmpi eq, %389, %504 : vector<8x128xi32>
      %cst_162 = arith.constant 0.000000e+00 : f32
      %506 = vector.shape_cast %503 : vector<8x1xf32> to vector<8x1xf32>
      %507 = vector.broadcast %506 : vector<8x1xf32> to vector<8x128xf32>
      %508 = vector.broadcast %cst_162 : f32 to vector<8x128xf32>
      %509 = arith.select %505, %507, %508 : vector<8x128xi1>, vector<8x128xf32>
      %510 = arith.addf %459, %509 : vector<8x128xf32>
      %c0_163 = arith.constant 0 : index
      %c2_164 = arith.constant 2 : index
      %511 = memref.load %arg9[%c0_163, %c2_164] : memref<9x16xf32, #tpu.memory_space<smem>>
      %512 = vector.broadcast %511 : f32 to vector<8x256xf32>
      %513 = arith.mulf %391, %512 : vector<8x256xf32>
      %c1_165 = arith.constant 1 : index
      %c2_166 = arith.constant 2 : index
      %514 = memref.load %arg9[%c1_165, %c2_166] : memref<9x16xf32, #tpu.memory_space<smem>>
      %515 = vector.broadcast %514 : f32 to vector<8x256xf32>
      %516 = arith.mulf %515, %393 : vector<8x256xf32>
      %517 = arith.addf %513, %516 : vector<8x256xf32>
      %c2_167 = arith.constant 2 : index
      %c2_168 = arith.constant 2 : index
      %518 = memref.load %arg9[%c2_167, %c2_168] : memref<9x16xf32, #tpu.memory_space<smem>>
      %519 = vector.broadcast %518 : f32 to vector<8x256xf32>
      %520 = arith.mulf %519, %395 : vector<8x256xf32>
      %521 = arith.addf %517, %520 : vector<8x256xf32>
      %c3_169 = arith.constant 3 : index
      %c2_170 = arith.constant 2 : index
      %522 = memref.load %arg9[%c3_169, %c2_170] : memref<9x16xf32, #tpu.memory_space<smem>>
      %523 = vector.broadcast %522 : f32 to vector<8x256xf32>
      %524 = arith.mulf %523, %397 : vector<8x256xf32>
      %525 = arith.addf %521, %524 : vector<8x256xf32>
      %c4_171 = arith.constant 4 : index
      %c2_172 = arith.constant 2 : index
      %526 = memref.load %arg9[%c4_171, %c2_172] : memref<9x16xf32, #tpu.memory_space<smem>>
      %527 = vector.broadcast %526 : f32 to vector<8x256xf32>
      %528 = arith.mulf %527, %399 : vector<8x256xf32>
      %529 = arith.addf %525, %528 : vector<8x256xf32>
      %c5_173 = arith.constant 5 : index
      %c2_174 = arith.constant 2 : index
      %530 = memref.load %arg9[%c5_173, %c2_174] : memref<9x16xf32, #tpu.memory_space<smem>>
      %531 = vector.broadcast %530 : f32 to vector<8x256xf32>
      %532 = arith.mulf %531, %401 : vector<8x256xf32>
      %533 = arith.addf %529, %532 : vector<8x256xf32>
      %c6_175 = arith.constant 6 : index
      %c2_176 = arith.constant 2 : index
      %534 = memref.load %arg9[%c6_175, %c2_176] : memref<9x16xf32, #tpu.memory_space<smem>>
      %535 = vector.broadcast %534 : f32 to vector<8x256xf32>
      %536 = arith.mulf %535, %403 : vector<8x256xf32>
      %537 = arith.addf %533, %536 : vector<8x256xf32>
      %c7_177 = arith.constant 7 : index
      %c2_178 = arith.constant 2 : index
      %538 = memref.load %arg9[%c7_177, %c2_178] : memref<9x16xf32, #tpu.memory_space<smem>>
      %539 = vector.broadcast %538 : f32 to vector<8x256xf32>
      %540 = arith.mulf %539, %405 : vector<8x256xf32>
      %541 = arith.addf %537, %540 : vector<8x256xf32>
      %c8_179 = arith.constant 8 : index
      %c2_180 = arith.constant 2 : index
      %542 = memref.load %arg9[%c8_179, %c2_180] : memref<9x16xf32, #tpu.memory_space<smem>>
      %543 = vector.broadcast %542 : f32 to vector<8x256xf32>
      %544 = arith.mulf %543, %407 : vector<8x256xf32>
      %545 = arith.addf %541, %544 : vector<8x256xf32>
      %c0_181 = arith.constant 0 : index
      %c2_182 = arith.constant 2 : index
      %546 = memref.load %arg10[%c0_181, %c2_182] : memref<1x16xf32, #tpu.memory_space<smem>>
      %547 = vector.broadcast %546 : f32 to vector<8x256xf32>
      %548 = arith.addf %545, %547 : vector<8x256xf32>
      %cst_183 = arith.constant 0.000000e+00 : f32
      %549 = vector.broadcast %cst_183 : f32 to vector<8x256xf32>
      %550 = arith.maximumf %548, %549 : vector<8x256xf32>
      %cst_184 = arith.constant dense<0.000000e+00> : vector<8xf32>
      %551 = vector.multi_reduction <add>, %550, %cst_184 [1] : vector<8x256xf32> to vector<8xf32>
      %552 = vector.shape_cast %551 : vector<8xf32> to vector<8x1xf32>
      %cst_185 = arith.constant 3.906250e-03 : f32
      %553 = vector.broadcast %cst_185 : f32 to vector<8x1xf32>
      %554 = arith.mulf %552, %553 : vector<8x1xf32>
      %c2_i32 = arith.constant 2 : i32
      %555 = vector.broadcast %c2_i32 : i32 to vector<8x128xi32>
      %556 = arith.cmpi eq, %389, %555 : vector<8x128xi32>
      %cst_186 = arith.constant 0.000000e+00 : f32
      %557 = vector.shape_cast %554 : vector<8x1xf32> to vector<8x1xf32>
      %558 = vector.broadcast %557 : vector<8x1xf32> to vector<8x128xf32>
      %559 = vector.broadcast %cst_186 : f32 to vector<8x128xf32>
      %560 = arith.select %556, %558, %559 : vector<8x128xi1>, vector<8x128xf32>
      %561 = arith.addf %510, %560 : vector<8x128xf32>
      %c0_187 = arith.constant 0 : index
      %c3_188 = arith.constant 3 : index
      %562 = memref.load %arg9[%c0_187, %c3_188] : memref<9x16xf32, #tpu.memory_space<smem>>
      %563 = vector.broadcast %562 : f32 to vector<8x256xf32>
      %564 = arith.mulf %391, %563 : vector<8x256xf32>
      %c1_189 = arith.constant 1 : index
      %c3_190 = arith.constant 3 : index
      %565 = memref.load %arg9[%c1_189, %c3_190] : memref<9x16xf32, #tpu.memory_space<smem>>
      %566 = vector.broadcast %565 : f32 to vector<8x256xf32>
      %567 = arith.mulf %566, %393 : vector<8x256xf32>
      %568 = arith.addf %564, %567 : vector<8x256xf32>
      %c2_191 = arith.constant 2 : index
      %c3_192 = arith.constant 3 : index
      %569 = memref.load %arg9[%c2_191, %c3_192] : memref<9x16xf32, #tpu.memory_space<smem>>
      %570 = vector.broadcast %569 : f32 to vector<8x256xf32>
      %571 = arith.mulf %570, %395 : vector<8x256xf32>
      %572 = arith.addf %568, %571 : vector<8x256xf32>
      %c3_193 = arith.constant 3 : index
      %c3_194 = arith.constant 3 : index
      %573 = memref.load %arg9[%c3_193, %c3_194] : memref<9x16xf32, #tpu.memory_space<smem>>
      %574 = vector.broadcast %573 : f32 to vector<8x256xf32>
      %575 = arith.mulf %574, %397 : vector<8x256xf32>
      %576 = arith.addf %572, %575 : vector<8x256xf32>
      %c4_195 = arith.constant 4 : index
      %c3_196 = arith.constant 3 : index
      %577 = memref.load %arg9[%c4_195, %c3_196] : memref<9x16xf32, #tpu.memory_space<smem>>
      %578 = vector.broadcast %577 : f32 to vector<8x256xf32>
      %579 = arith.mulf %578, %399 : vector<8x256xf32>
      %580 = arith.addf %576, %579 : vector<8x256xf32>
      %c5_197 = arith.constant 5 : index
      %c3_198 = arith.constant 3 : index
      %581 = memref.load %arg9[%c5_197, %c3_198] : memref<9x16xf32, #tpu.memory_space<smem>>
      %582 = vector.broadcast %581 : f32 to vector<8x256xf32>
      %583 = arith.mulf %582, %401 : vector<8x256xf32>
      %584 = arith.addf %580, %583 : vector<8x256xf32>
      %c6_199 = arith.constant 6 : index
      %c3_200 = arith.constant 3 : index
      %585 = memref.load %arg9[%c6_199, %c3_200] : memref<9x16xf32, #tpu.memory_space<smem>>
      %586 = vector.broadcast %585 : f32 to vector<8x256xf32>
      %587 = arith.mulf %586, %403 : vector<8x256xf32>
      %588 = arith.addf %584, %587 : vector<8x256xf32>
      %c7_201 = arith.constant 7 : index
      %c3_202 = arith.constant 3 : index
      %589 = memref.load %arg9[%c7_201, %c3_202] : memref<9x16xf32, #tpu.memory_space<smem>>
      %590 = vector.broadcast %589 : f32 to vector<8x256xf32>
      %591 = arith.mulf %590, %405 : vector<8x256xf32>
      %592 = arith.addf %588, %591 : vector<8x256xf32>
      %c8_203 = arith.constant 8 : index
      %c3_204 = arith.constant 3 : index
      %593 = memref.load %arg9[%c8_203, %c3_204] : memref<9x16xf32, #tpu.memory_space<smem>>
      %594 = vector.broadcast %593 : f32 to vector<8x256xf32>
      %595 = arith.mulf %594, %407 : vector<8x256xf32>
      %596 = arith.addf %592, %595 : vector<8x256xf32>
      %c0_205 = arith.constant 0 : index
      %c3_206 = arith.constant 3 : index
      %597 = memref.load %arg10[%c0_205, %c3_206] : memref<1x16xf32, #tpu.memory_space<smem>>
      %598 = vector.broadcast %597 : f32 to vector<8x256xf32>
      %599 = arith.addf %596, %598 : vector<8x256xf32>
      %cst_207 = arith.constant 0.000000e+00 : f32
      %600 = vector.broadcast %cst_207 : f32 to vector<8x256xf32>
      %601 = arith.maximumf %599, %600 : vector<8x256xf32>
      %cst_208 = arith.constant dense<0.000000e+00> : vector<8xf32>
      %602 = vector.multi_reduction <add>, %601, %cst_208 [1] : vector<8x256xf32> to vector<8xf32>
      %603 = vector.shape_cast %602 : vector<8xf32> to vector<8x1xf32>
      %cst_209 = arith.constant 3.906250e-03 : f32
      %604 = vector.broadcast %cst_209 : f32 to vector<8x1xf32>
      %605 = arith.mulf %603, %604 : vector<8x1xf32>
      %c3_i32 = arith.constant 3 : i32
      %606 = vector.broadcast %c3_i32 : i32 to vector<8x128xi32>
      %607 = arith.cmpi eq, %389, %606 : vector<8x128xi32>
      %cst_210 = arith.constant 0.000000e+00 : f32
      %608 = vector.shape_cast %605 : vector<8x1xf32> to vector<8x1xf32>
      %609 = vector.broadcast %608 : vector<8x1xf32> to vector<8x128xf32>
      %610 = vector.broadcast %cst_210 : f32 to vector<8x128xf32>
      %611 = arith.select %607, %609, %610 : vector<8x128xi1>, vector<8x128xf32>
      %612 = arith.addf %561, %611 : vector<8x128xf32>
      %c0_211 = arith.constant 0 : index
      %c4_212 = arith.constant 4 : index
      %613 = memref.load %arg9[%c0_211, %c4_212] : memref<9x16xf32, #tpu.memory_space<smem>>
      %614 = vector.broadcast %613 : f32 to vector<8x256xf32>
      %615 = arith.mulf %391, %614 : vector<8x256xf32>
      %c1_213 = arith.constant 1 : index
      %c4_214 = arith.constant 4 : index
      %616 = memref.load %arg9[%c1_213, %c4_214] : memref<9x16xf32, #tpu.memory_space<smem>>
      %617 = vector.broadcast %616 : f32 to vector<8x256xf32>
      %618 = arith.mulf %617, %393 : vector<8x256xf32>
      %619 = arith.addf %615, %618 : vector<8x256xf32>
      %c2_215 = arith.constant 2 : index
      %c4_216 = arith.constant 4 : index
      %620 = memref.load %arg9[%c2_215, %c4_216] : memref<9x16xf32, #tpu.memory_space<smem>>
      %621 = vector.broadcast %620 : f32 to vector<8x256xf32>
      %622 = arith.mulf %621, %395 : vector<8x256xf32>
      %623 = arith.addf %619, %622 : vector<8x256xf32>
      %c3_217 = arith.constant 3 : index
      %c4_218 = arith.constant 4 : index
      %624 = memref.load %arg9[%c3_217, %c4_218] : memref<9x16xf32, #tpu.memory_space<smem>>
      %625 = vector.broadcast %624 : f32 to vector<8x256xf32>
      %626 = arith.mulf %625, %397 : vector<8x256xf32>
      %627 = arith.addf %623, %626 : vector<8x256xf32>
      %c4_219 = arith.constant 4 : index
      %c4_220 = arith.constant 4 : index
      %628 = memref.load %arg9[%c4_219, %c4_220] : memref<9x16xf32, #tpu.memory_space<smem>>
      %629 = vector.broadcast %628 : f32 to vector<8x256xf32>
      %630 = arith.mulf %629, %399 : vector<8x256xf32>
      %631 = arith.addf %627, %630 : vector<8x256xf32>
      %c5_221 = arith.constant 5 : index
      %c4_222 = arith.constant 4 : index
      %632 = memref.load %arg9[%c5_221, %c4_222] : memref<9x16xf32, #tpu.memory_space<smem>>
      %633 = vector.broadcast %632 : f32 to vector<8x256xf32>
      %634 = arith.mulf %633, %401 : vector<8x256xf32>
      %635 = arith.addf %631, %634 : vector<8x256xf32>
      %c6_223 = arith.constant 6 : index
      %c4_224 = arith.constant 4 : index
      %636 = memref.load %arg9[%c6_223, %c4_224] : memref<9x16xf32, #tpu.memory_space<smem>>
      %637 = vector.broadcast %636 : f32 to vector<8x256xf32>
      %638 = arith.mulf %637, %403 : vector<8x256xf32>
      %639 = arith.addf %635, %638 : vector<8x256xf32>
      %c7_225 = arith.constant 7 : index
      %c4_226 = arith.constant 4 : index
      %640 = memref.load %arg9[%c7_225, %c4_226] : memref<9x16xf32, #tpu.memory_space<smem>>
      %641 = vector.broadcast %640 : f32 to vector<8x256xf32>
      %642 = arith.mulf %641, %405 : vector<8x256xf32>
      %643 = arith.addf %639, %642 : vector<8x256xf32>
      %c8_227 = arith.constant 8 : index
      %c4_228 = arith.constant 4 : index
      %644 = memref.load %arg9[%c8_227, %c4_228] : memref<9x16xf32, #tpu.memory_space<smem>>
      %645 = vector.broadcast %644 : f32 to vector<8x256xf32>
      %646 = arith.mulf %645, %407 : vector<8x256xf32>
      %647 = arith.addf %643, %646 : vector<8x256xf32>
      %c0_229 = arith.constant 0 : index
      %c4_230 = arith.constant 4 : index
      %648 = memref.load %arg10[%c0_229, %c4_230] : memref<1x16xf32, #tpu.memory_space<smem>>
      %649 = vector.broadcast %648 : f32 to vector<8x256xf32>
      %650 = arith.addf %647, %649 : vector<8x256xf32>
      %cst_231 = arith.constant 0.000000e+00 : f32
      %651 = vector.broadcast %cst_231 : f32 to vector<8x256xf32>
      %652 = arith.maximumf %650, %651 : vector<8x256xf32>
      %cst_232 = arith.constant dense<0.000000e+00> : vector<8xf32>
      %653 = vector.multi_reduction <add>, %652, %cst_232 [1] : vector<8x256xf32> to vector<8xf32>
      %654 = vector.shape_cast %653 : vector<8xf32> to vector<8x1xf32>
      %cst_233 = arith.constant 3.906250e-03 : f32
      %655 = vector.broadcast %cst_233 : f32 to vector<8x1xf32>
      %656 = arith.mulf %654, %655 : vector<8x1xf32>
      %c4_i32 = arith.constant 4 : i32
      %657 = vector.broadcast %c4_i32 : i32 to vector<8x128xi32>
      %658 = arith.cmpi eq, %389, %657 : vector<8x128xi32>
      %cst_234 = arith.constant 0.000000e+00 : f32
      %659 = vector.shape_cast %656 : vector<8x1xf32> to vector<8x1xf32>
      %660 = vector.broadcast %659 : vector<8x1xf32> to vector<8x128xf32>
      %661 = vector.broadcast %cst_234 : f32 to vector<8x128xf32>
      %662 = arith.select %658, %660, %661 : vector<8x128xi1>, vector<8x128xf32>
      %663 = arith.addf %612, %662 : vector<8x128xf32>
      %c0_235 = arith.constant 0 : index
      %c5_236 = arith.constant 5 : index
      %664 = memref.load %arg9[%c0_235, %c5_236] : memref<9x16xf32, #tpu.memory_space<smem>>
      %665 = vector.broadcast %664 : f32 to vector<8x256xf32>
      %666 = arith.mulf %391, %665 : vector<8x256xf32>
      %c1_237 = arith.constant 1 : index
      %c5_238 = arith.constant 5 : index
      %667 = memref.load %arg9[%c1_237, %c5_238] : memref<9x16xf32, #tpu.memory_space<smem>>
      %668 = vector.broadcast %667 : f32 to vector<8x256xf32>
      %669 = arith.mulf %668, %393 : vector<8x256xf32>
      %670 = arith.addf %666, %669 : vector<8x256xf32>
      %c2_239 = arith.constant 2 : index
      %c5_240 = arith.constant 5 : index
      %671 = memref.load %arg9[%c2_239, %c5_240] : memref<9x16xf32, #tpu.memory_space<smem>>
      %672 = vector.broadcast %671 : f32 to vector<8x256xf32>
      %673 = arith.mulf %672, %395 : vector<8x256xf32>
      %674 = arith.addf %670, %673 : vector<8x256xf32>
      %c3_241 = arith.constant 3 : index
      %c5_242 = arith.constant 5 : index
      %675 = memref.load %arg9[%c3_241, %c5_242] : memref<9x16xf32, #tpu.memory_space<smem>>
      %676 = vector.broadcast %675 : f32 to vector<8x256xf32>
      %677 = arith.mulf %676, %397 : vector<8x256xf32>
      %678 = arith.addf %674, %677 : vector<8x256xf32>
      %c4_243 = arith.constant 4 : index
      %c5_244 = arith.constant 5 : index
      %679 = memref.load %arg9[%c4_243, %c5_244] : memref<9x16xf32, #tpu.memory_space<smem>>
      %680 = vector.broadcast %679 : f32 to vector<8x256xf32>
      %681 = arith.mulf %680, %399 : vector<8x256xf32>
      %682 = arith.addf %678, %681 : vector<8x256xf32>
      %c5_245 = arith.constant 5 : index
      %c5_246 = arith.constant 5 : index
      %683 = memref.load %arg9[%c5_245, %c5_246] : memref<9x16xf32, #tpu.memory_space<smem>>
      %684 = vector.broadcast %683 : f32 to vector<8x256xf32>
      %685 = arith.mulf %684, %401 : vector<8x256xf32>
      %686 = arith.addf %682, %685 : vector<8x256xf32>
      %c6_247 = arith.constant 6 : index
      %c5_248 = arith.constant 5 : index
      %687 = memref.load %arg9[%c6_247, %c5_248] : memref<9x16xf32, #tpu.memory_space<smem>>
      %688 = vector.broadcast %687 : f32 to vector<8x256xf32>
      %689 = arith.mulf %688, %403 : vector<8x256xf32>
      %690 = arith.addf %686, %689 : vector<8x256xf32>
      %c7_249 = arith.constant 7 : index
      %c5_250 = arith.constant 5 : index
      %691 = memref.load %arg9[%c7_249, %c5_250] : memref<9x16xf32, #tpu.memory_space<smem>>
      %692 = vector.broadcast %691 : f32 to vector<8x256xf32>
      %693 = arith.mulf %692, %405 : vector<8x256xf32>
      %694 = arith.addf %690, %693 : vector<8x256xf32>
      %c8_251 = arith.constant 8 : index
      %c5_252 = arith.constant 5 : index
      %695 = memref.load %arg9[%c8_251, %c5_252] : memref<9x16xf32, #tpu.memory_space<smem>>
      %696 = vector.broadcast %695 : f32 to vector<8x256xf32>
      %697 = arith.mulf %696, %407 : vector<8x256xf32>
      %698 = arith.addf %694, %697 : vector<8x256xf32>
      %c0_253 = arith.constant 0 : index
      %c5_254 = arith.constant 5 : index
      %699 = memref.load %arg10[%c0_253, %c5_254] : memref<1x16xf32, #tpu.memory_space<smem>>
      %700 = vector.broadcast %699 : f32 to vector<8x256xf32>
      %701 = arith.addf %698, %700 : vector<8x256xf32>
      %cst_255 = arith.constant 0.000000e+00 : f32
      %702 = vector.broadcast %cst_255 : f32 to vector<8x256xf32>
      %703 = arith.maximumf %701, %702 : vector<8x256xf32>
      %cst_256 = arith.constant dense<0.000000e+00> : vector<8xf32>
      %704 = vector.multi_reduction <add>, %703, %cst_256 [1] : vector<8x256xf32> to vector<8xf32>
      %705 = vector.shape_cast %704 : vector<8xf32> to vector<8x1xf32>
      %cst_257 = arith.constant 3.906250e-03 : f32
      %706 = vector.broadcast %cst_257 : f32 to vector<8x1xf32>
      %707 = arith.mulf %705, %706 : vector<8x1xf32>
      %c5_i32 = arith.constant 5 : i32
      %708 = vector.broadcast %c5_i32 : i32 to vector<8x128xi32>
      %709 = arith.cmpi eq, %389, %708 : vector<8x128xi32>
      %cst_258 = arith.constant 0.000000e+00 : f32
      %710 = vector.shape_cast %707 : vector<8x1xf32> to vector<8x1xf32>
      %711 = vector.broadcast %710 : vector<8x1xf32> to vector<8x128xf32>
      %712 = vector.broadcast %cst_258 : f32 to vector<8x128xf32>
      %713 = arith.select %709, %711, %712 : vector<8x128xi1>, vector<8x128xf32>
      %714 = arith.addf %663, %713 : vector<8x128xf32>
      %c0_259 = arith.constant 0 : index
      %c6_260 = arith.constant 6 : index
      %715 = memref.load %arg9[%c0_259, %c6_260] : memref<9x16xf32, #tpu.memory_space<smem>>
      %716 = vector.broadcast %715 : f32 to vector<8x256xf32>
      %717 = arith.mulf %391, %716 : vector<8x256xf32>
      %c1_261 = arith.constant 1 : index
      %c6_262 = arith.constant 6 : index
      %718 = memref.load %arg9[%c1_261, %c6_262] : memref<9x16xf32, #tpu.memory_space<smem>>
      %719 = vector.broadcast %718 : f32 to vector<8x256xf32>
      %720 = arith.mulf %719, %393 : vector<8x256xf32>
      %721 = arith.addf %717, %720 : vector<8x256xf32>
      %c2_263 = arith.constant 2 : index
      %c6_264 = arith.constant 6 : index
      %722 = memref.load %arg9[%c2_263, %c6_264] : memref<9x16xf32, #tpu.memory_space<smem>>
      %723 = vector.broadcast %722 : f32 to vector<8x256xf32>
      %724 = arith.mulf %723, %395 : vector<8x256xf32>
      %725 = arith.addf %721, %724 : vector<8x256xf32>
      %c3_265 = arith.constant 3 : index
      %c6_266 = arith.constant 6 : index
      %726 = memref.load %arg9[%c3_265, %c6_266] : memref<9x16xf32, #tpu.memory_space<smem>>
      %727 = vector.broadcast %726 : f32 to vector<8x256xf32>
      %728 = arith.mulf %727, %397 : vector<8x256xf32>
      %729 = arith.addf %725, %728 : vector<8x256xf32>
      %c4_267 = arith.constant 4 : index
      %c6_268 = arith.constant 6 : index
      %730 = memref.load %arg9[%c4_267, %c6_268] : memref<9x16xf32, #tpu.memory_space<smem>>
      %731 = vector.broadcast %730 : f32 to vector<8x256xf32>
      %732 = arith.mulf %731, %399 : vector<8x256xf32>
      %733 = arith.addf %729, %732 : vector<8x256xf32>
      %c5_269 = arith.constant 5 : index
      %c6_270 = arith.constant 6 : index
      %734 = memref.load %arg9[%c5_269, %c6_270] : memref<9x16xf32, #tpu.memory_space<smem>>
      %735 = vector.broadcast %734 : f32 to vector<8x256xf32>
      %736 = arith.mulf %735, %401 : vector<8x256xf32>
      %737 = arith.addf %733, %736 : vector<8x256xf32>
      %c6_271 = arith.constant 6 : index
      %c6_272 = arith.constant 6 : index
      %738 = memref.load %arg9[%c6_271, %c6_272] : memref<9x16xf32, #tpu.memory_space<smem>>
      %739 = vector.broadcast %738 : f32 to vector<8x256xf32>
      %740 = arith.mulf %739, %403 : vector<8x256xf32>
      %741 = arith.addf %737, %740 : vector<8x256xf32>
      %c7_273 = arith.constant 7 : index
      %c6_274 = arith.constant 6 : index
      %742 = memref.load %arg9[%c7_273, %c6_274] : memref<9x16xf32, #tpu.memory_space<smem>>
      %743 = vector.broadcast %742 : f32 to vector<8x256xf32>
      %744 = arith.mulf %743, %405 : vector<8x256xf32>
      %745 = arith.addf %741, %744 : vector<8x256xf32>
      %c8_275 = arith.constant 8 : index
      %c6_276 = arith.constant 6 : index
      %746 = memref.load %arg9[%c8_275, %c6_276] : memref<9x16xf32, #tpu.memory_space<smem>>
      %747 = vector.broadcast %746 : f32 to vector<8x256xf32>
      %748 = arith.mulf %747, %407 : vector<8x256xf32>
      %749 = arith.addf %745, %748 : vector<8x256xf32>
      %c0_277 = arith.constant 0 : index
      %c6_278 = arith.constant 6 : index
      %750 = memref.load %arg10[%c0_277, %c6_278] : memref<1x16xf32, #tpu.memory_space<smem>>
      %751 = vector.broadcast %750 : f32 to vector<8x256xf32>
      %752 = arith.addf %749, %751 : vector<8x256xf32>
      %cst_279 = arith.constant 0.000000e+00 : f32
      %753 = vector.broadcast %cst_279 : f32 to vector<8x256xf32>
      %754 = arith.maximumf %752, %753 : vector<8x256xf32>
      %cst_280 = arith.constant dense<0.000000e+00> : vector<8xf32>
      %755 = vector.multi_reduction <add>, %754, %cst_280 [1] : vector<8x256xf32> to vector<8xf32>
      %756 = vector.shape_cast %755 : vector<8xf32> to vector<8x1xf32>
      %cst_281 = arith.constant 3.906250e-03 : f32
      %757 = vector.broadcast %cst_281 : f32 to vector<8x1xf32>
      %758 = arith.mulf %756, %757 : vector<8x1xf32>
      %c6_i32 = arith.constant 6 : i32
      %759 = vector.broadcast %c6_i32 : i32 to vector<8x128xi32>
      %760 = arith.cmpi eq, %389, %759 : vector<8x128xi32>
      %cst_282 = arith.constant 0.000000e+00 : f32
      %761 = vector.shape_cast %758 : vector<8x1xf32> to vector<8x1xf32>
      %762 = vector.broadcast %761 : vector<8x1xf32> to vector<8x128xf32>
      %763 = vector.broadcast %cst_282 : f32 to vector<8x128xf32>
      %764 = arith.select %760, %762, %763 : vector<8x128xi1>, vector<8x128xf32>
      %765 = arith.addf %714, %764 : vector<8x128xf32>
      %c0_283 = arith.constant 0 : index
      %c7_284 = arith.constant 7 : index
      %766 = memref.load %arg9[%c0_283, %c7_284] : memref<9x16xf32, #tpu.memory_space<smem>>
      %767 = vector.broadcast %766 : f32 to vector<8x256xf32>
      %768 = arith.mulf %391, %767 : vector<8x256xf32>
      %c1_285 = arith.constant 1 : index
      %c7_286 = arith.constant 7 : index
      %769 = memref.load %arg9[%c1_285, %c7_286] : memref<9x16xf32, #tpu.memory_space<smem>>
      %770 = vector.broadcast %769 : f32 to vector<8x256xf32>
      %771 = arith.mulf %770, %393 : vector<8x256xf32>
      %772 = arith.addf %768, %771 : vector<8x256xf32>
      %c2_287 = arith.constant 2 : index
      %c7_288 = arith.constant 7 : index
      %773 = memref.load %arg9[%c2_287, %c7_288] : memref<9x16xf32, #tpu.memory_space<smem>>
      %774 = vector.broadcast %773 : f32 to vector<8x256xf32>
      %775 = arith.mulf %774, %395 : vector<8x256xf32>
      %776 = arith.addf %772, %775 : vector<8x256xf32>
      %c3_289 = arith.constant 3 : index
      %c7_290 = arith.constant 7 : index
      %777 = memref.load %arg9[%c3_289, %c7_290] : memref<9x16xf32, #tpu.memory_space<smem>>
      %778 = vector.broadcast %777 : f32 to vector<8x256xf32>
      %779 = arith.mulf %778, %397 : vector<8x256xf32>
      %780 = arith.addf %776, %779 : vector<8x256xf32>
      %c4_291 = arith.constant 4 : index
      %c7_292 = arith.constant 7 : index
      %781 = memref.load %arg9[%c4_291, %c7_292] : memref<9x16xf32, #tpu.memory_space<smem>>
      %782 = vector.broadcast %781 : f32 to vector<8x256xf32>
      %783 = arith.mulf %782, %399 : vector<8x256xf32>
      %784 = arith.addf %780, %783 : vector<8x256xf32>
      %c5_293 = arith.constant 5 : index
      %c7_294 = arith.constant 7 : index
      %785 = memref.load %arg9[%c5_293, %c7_294] : memref<9x16xf32, #tpu.memory_space<smem>>
      %786 = vector.broadcast %785 : f32 to vector<8x256xf32>
      %787 = arith.mulf %786, %401 : vector<8x256xf32>
      %788 = arith.addf %784, %787 : vector<8x256xf32>
      %c6_295 = arith.constant 6 : index
      %c7_296 = arith.constant 7 : index
      %789 = memref.load %arg9[%c6_295, %c7_296] : memref<9x16xf32, #tpu.memory_space<smem>>
      %790 = vector.broadcast %789 : f32 to vector<8x256xf32>
      %791 = arith.mulf %790, %403 : vector<8x256xf32>
      %792 = arith.addf %788, %791 : vector<8x256xf32>
      %c7_297 = arith.constant 7 : index
      %c7_298 = arith.constant 7 : index
      %793 = memref.load %arg9[%c7_297, %c7_298] : memref<9x16xf32, #tpu.memory_space<smem>>
      %794 = vector.broadcast %793 : f32 to vector<8x256xf32>
      %795 = arith.mulf %794, %405 : vector<8x256xf32>
      %796 = arith.addf %792, %795 : vector<8x256xf32>
      %c8_299 = arith.constant 8 : index
      %c7_300 = arith.constant 7 : index
      %797 = memref.load %arg9[%c8_299, %c7_300] : memref<9x16xf32, #tpu.memory_space<smem>>
      %798 = vector.broadcast %797 : f32 to vector<8x256xf32>
      %799 = arith.mulf %798, %407 : vector<8x256xf32>
      %800 = arith.addf %796, %799 : vector<8x256xf32>
      %c0_301 = arith.constant 0 : index
      %c7_302 = arith.constant 7 : index
      %801 = memref.load %arg10[%c0_301, %c7_302] : memref<1x16xf32, #tpu.memory_space<smem>>
      %802 = vector.broadcast %801 : f32 to vector<8x256xf32>
      %803 = arith.addf %800, %802 : vector<8x256xf32>
      %cst_303 = arith.constant 0.000000e+00 : f32
      %804 = vector.broadcast %cst_303 : f32 to vector<8x256xf32>
      %805 = arith.maximumf %803, %804 : vector<8x256xf32>
      %cst_304 = arith.constant dense<0.000000e+00> : vector<8xf32>
      %806 = vector.multi_reduction <add>, %805, %cst_304 [1] : vector<8x256xf32> to vector<8xf32>
      %807 = vector.shape_cast %806 : vector<8xf32> to vector<8x1xf32>
      %cst_305 = arith.constant 3.906250e-03 : f32
      %808 = vector.broadcast %cst_305 : f32 to vector<8x1xf32>
      %809 = arith.mulf %807, %808 : vector<8x1xf32>
      %c7_i32 = arith.constant 7 : i32
      %810 = vector.broadcast %c7_i32 : i32 to vector<8x128xi32>
      %811 = arith.cmpi eq, %389, %810 : vector<8x128xi32>
      %cst_306 = arith.constant 0.000000e+00 : f32
      %812 = vector.shape_cast %809 : vector<8x1xf32> to vector<8x1xf32>
      %813 = vector.broadcast %812 : vector<8x1xf32> to vector<8x128xf32>
      %814 = vector.broadcast %cst_306 : f32 to vector<8x128xf32>
      %815 = arith.select %811, %813, %814 : vector<8x128xi1>, vector<8x128xf32>
      %816 = arith.addf %765, %815 : vector<8x128xf32>
      %c0_307 = arith.constant 0 : index
      %c8_308 = arith.constant 8 : index
      %817 = memref.load %arg9[%c0_307, %c8_308] : memref<9x16xf32, #tpu.memory_space<smem>>
      %818 = vector.broadcast %817 : f32 to vector<8x256xf32>
      %819 = arith.mulf %391, %818 : vector<8x256xf32>
      %c1_309 = arith.constant 1 : index
      %c8_310 = arith.constant 8 : index
      %820 = memref.load %arg9[%c1_309, %c8_310] : memref<9x16xf32, #tpu.memory_space<smem>>
      %821 = vector.broadcast %820 : f32 to vector<8x256xf32>
      %822 = arith.mulf %821, %393 : vector<8x256xf32>
      %823 = arith.addf %819, %822 : vector<8x256xf32>
      %c2_311 = arith.constant 2 : index
      %c8_312 = arith.constant 8 : index
      %824 = memref.load %arg9[%c2_311, %c8_312] : memref<9x16xf32, #tpu.memory_space<smem>>
      %825 = vector.broadcast %824 : f32 to vector<8x256xf32>
      %826 = arith.mulf %825, %395 : vector<8x256xf32>
      %827 = arith.addf %823, %826 : vector<8x256xf32>
      %c3_313 = arith.constant 3 : index
      %c8_314 = arith.constant 8 : index
      %828 = memref.load %arg9[%c3_313, %c8_314] : memref<9x16xf32, #tpu.memory_space<smem>>
      %829 = vector.broadcast %828 : f32 to vector<8x256xf32>
      %830 = arith.mulf %829, %397 : vector<8x256xf32>
      %831 = arith.addf %827, %830 : vector<8x256xf32>
      %c4_315 = arith.constant 4 : index
      %c8_316 = arith.constant 8 : index
      %832 = memref.load %arg9[%c4_315, %c8_316] : memref<9x16xf32, #tpu.memory_space<smem>>
      %833 = vector.broadcast %832 : f32 to vector<8x256xf32>
      %834 = arith.mulf %833, %399 : vector<8x256xf32>
      %835 = arith.addf %831, %834 : vector<8x256xf32>
      %c5_317 = arith.constant 5 : index
      %c8_318 = arith.constant 8 : index
      %836 = memref.load %arg9[%c5_317, %c8_318] : memref<9x16xf32, #tpu.memory_space<smem>>
      %837 = vector.broadcast %836 : f32 to vector<8x256xf32>
      %838 = arith.mulf %837, %401 : vector<8x256xf32>
      %839 = arith.addf %835, %838 : vector<8x256xf32>
      %c6_319 = arith.constant 6 : index
      %c8_320 = arith.constant 8 : index
      %840 = memref.load %arg9[%c6_319, %c8_320] : memref<9x16xf32, #tpu.memory_space<smem>>
      %841 = vector.broadcast %840 : f32 to vector<8x256xf32>
      %842 = arith.mulf %841, %403 : vector<8x256xf32>
      %843 = arith.addf %839, %842 : vector<8x256xf32>
      %c7_321 = arith.constant 7 : index
      %c8_322 = arith.constant 8 : index
      %844 = memref.load %arg9[%c7_321, %c8_322] : memref<9x16xf32, #tpu.memory_space<smem>>
      %845 = vector.broadcast %844 : f32 to vector<8x256xf32>
      %846 = arith.mulf %845, %405 : vector<8x256xf32>
      %847 = arith.addf %843, %846 : vector<8x256xf32>
      %c8_323 = arith.constant 8 : index
      %c8_324 = arith.constant 8 : index
      %848 = memref.load %arg9[%c8_323, %c8_324] : memref<9x16xf32, #tpu.memory_space<smem>>
      %849 = vector.broadcast %848 : f32 to vector<8x256xf32>
      %850 = arith.mulf %849, %407 : vector<8x256xf32>
      %851 = arith.addf %847, %850 : vector<8x256xf32>
      %c0_325 = arith.constant 0 : index
      %c8_326 = arith.constant 8 : index
      %852 = memref.load %arg10[%c0_325, %c8_326] : memref<1x16xf32, #tpu.memory_space<smem>>
      %853 = vector.broadcast %852 : f32 to vector<8x256xf32>
      %854 = arith.addf %851, %853 : vector<8x256xf32>
      %cst_327 = arith.constant 0.000000e+00 : f32
      %855 = vector.broadcast %cst_327 : f32 to vector<8x256xf32>
      %856 = arith.maximumf %854, %855 : vector<8x256xf32>
      %cst_328 = arith.constant dense<0.000000e+00> : vector<8xf32>
      %857 = vector.multi_reduction <add>, %856, %cst_328 [1] : vector<8x256xf32> to vector<8xf32>
      %858 = vector.shape_cast %857 : vector<8xf32> to vector<8x1xf32>
      %cst_329 = arith.constant 3.906250e-03 : f32
      %859 = vector.broadcast %cst_329 : f32 to vector<8x1xf32>
      %860 = arith.mulf %858, %859 : vector<8x1xf32>
      %c8_i32 = arith.constant 8 : i32
      %861 = vector.broadcast %c8_i32 : i32 to vector<8x128xi32>
      %862 = arith.cmpi eq, %389, %861 : vector<8x128xi32>
      %cst_330 = arith.constant 0.000000e+00 : f32
      %863 = vector.shape_cast %860 : vector<8x1xf32> to vector<8x1xf32>
      %864 = vector.broadcast %863 : vector<8x1xf32> to vector<8x128xf32>
      %865 = vector.broadcast %cst_330 : f32 to vector<8x128xf32>
      %866 = arith.select %862, %864, %865 : vector<8x128xi1>, vector<8x128xf32>
      %867 = arith.addf %816, %866 : vector<8x128xf32>
      %c0_331 = arith.constant 0 : index
      %c9 = arith.constant 9 : index
      %868 = memref.load %arg9[%c0_331, %c9] : memref<9x16xf32, #tpu.memory_space<smem>>
      %869 = vector.broadcast %868 : f32 to vector<8x256xf32>
      %870 = arith.mulf %391, %869 : vector<8x256xf32>
      %c1_332 = arith.constant 1 : index
      %c9_333 = arith.constant 9 : index
      %871 = memref.load %arg9[%c1_332, %c9_333] : memref<9x16xf32, #tpu.memory_space<smem>>
      %872 = vector.broadcast %871 : f32 to vector<8x256xf32>
      %873 = arith.mulf %872, %393 : vector<8x256xf32>
      %874 = arith.addf %870, %873 : vector<8x256xf32>
      %c2_334 = arith.constant 2 : index
      %c9_335 = arith.constant 9 : index
      %875 = memref.load %arg9[%c2_334, %c9_335] : memref<9x16xf32, #tpu.memory_space<smem>>
      %876 = vector.broadcast %875 : f32 to vector<8x256xf32>
      %877 = arith.mulf %876, %395 : vector<8x256xf32>
      %878 = arith.addf %874, %877 : vector<8x256xf32>
      %c3_336 = arith.constant 3 : index
      %c9_337 = arith.constant 9 : index
      %879 = memref.load %arg9[%c3_336, %c9_337] : memref<9x16xf32, #tpu.memory_space<smem>>
      %880 = vector.broadcast %879 : f32 to vector<8x256xf32>
      %881 = arith.mulf %880, %397 : vector<8x256xf32>
      %882 = arith.addf %878, %881 : vector<8x256xf32>
      %c4_338 = arith.constant 4 : index
      %c9_339 = arith.constant 9 : index
      %883 = memref.load %arg9[%c4_338, %c9_339] : memref<9x16xf32, #tpu.memory_space<smem>>
      %884 = vector.broadcast %883 : f32 to vector<8x256xf32>
      %885 = arith.mulf %884, %399 : vector<8x256xf32>
      %886 = arith.addf %882, %885 : vector<8x256xf32>
      %c5_340 = arith.constant 5 : index
      %c9_341 = arith.constant 9 : index
      %887 = memref.load %arg9[%c5_340, %c9_341] : memref<9x16xf32, #tpu.memory_space<smem>>
      %888 = vector.broadcast %887 : f32 to vector<8x256xf32>
      %889 = arith.mulf %888, %401 : vector<8x256xf32>
      %890 = arith.addf %886, %889 : vector<8x256xf32>
      %c6_342 = arith.constant 6 : index
      %c9_343 = arith.constant 9 : index
      %891 = memref.load %arg9[%c6_342, %c9_343] : memref<9x16xf32, #tpu.memory_space<smem>>
      %892 = vector.broadcast %891 : f32 to vector<8x256xf32>
      %893 = arith.mulf %892, %403 : vector<8x256xf32>
      %894 = arith.addf %890, %893 : vector<8x256xf32>
      %c7_344 = arith.constant 7 : index
      %c9_345 = arith.constant 9 : index
      %895 = memref.load %arg9[%c7_344, %c9_345] : memref<9x16xf32, #tpu.memory_space<smem>>
      %896 = vector.broadcast %895 : f32 to vector<8x256xf32>
      %897 = arith.mulf %896, %405 : vector<8x256xf32>
      %898 = arith.addf %894, %897 : vector<8x256xf32>
      %c8_346 = arith.constant 8 : index
      %c9_347 = arith.constant 9 : index
      %899 = memref.load %arg9[%c8_346, %c9_347] : memref<9x16xf32, #tpu.memory_space<smem>>
      %900 = vector.broadcast %899 : f32 to vector<8x256xf32>
      %901 = arith.mulf %900, %407 : vector<8x256xf32>
      %902 = arith.addf %898, %901 : vector<8x256xf32>
      %c0_348 = arith.constant 0 : index
      %c9_349 = arith.constant 9 : index
      %903 = memref.load %arg10[%c0_348, %c9_349] : memref<1x16xf32, #tpu.memory_space<smem>>
      %904 = vector.broadcast %903 : f32 to vector<8x256xf32>
      %905 = arith.addf %902, %904 : vector<8x256xf32>
      %cst_350 = arith.constant 0.000000e+00 : f32
      %906 = vector.broadcast %cst_350 : f32 to vector<8x256xf32>
      %907 = arith.maximumf %905, %906 : vector<8x256xf32>
      %cst_351 = arith.constant dense<0.000000e+00> : vector<8xf32>
      %908 = vector.multi_reduction <add>, %907, %cst_351 [1] : vector<8x256xf32> to vector<8xf32>
      %909 = vector.shape_cast %908 : vector<8xf32> to vector<8x1xf32>
      %cst_352 = arith.constant 3.906250e-03 : f32
      %910 = vector.broadcast %cst_352 : f32 to vector<8x1xf32>
      %911 = arith.mulf %909, %910 : vector<8x1xf32>
      %c9_i32 = arith.constant 9 : i32
      %912 = vector.broadcast %c9_i32 : i32 to vector<8x128xi32>
      %913 = arith.cmpi eq, %389, %912 : vector<8x128xi32>
      %cst_353 = arith.constant 0.000000e+00 : f32
      %914 = vector.shape_cast %911 : vector<8x1xf32> to vector<8x1xf32>
      %915 = vector.broadcast %914 : vector<8x1xf32> to vector<8x128xf32>
      %916 = vector.broadcast %cst_353 : f32 to vector<8x128xf32>
      %917 = arith.select %913, %915, %916 : vector<8x128xi1>, vector<8x128xf32>
      %918 = arith.addf %867, %917 : vector<8x128xf32>
      %c0_354 = arith.constant 0 : index
      %c10 = arith.constant 10 : index
      %919 = memref.load %arg9[%c0_354, %c10] : memref<9x16xf32, #tpu.memory_space<smem>>
      %920 = vector.broadcast %919 : f32 to vector<8x256xf32>
      %921 = arith.mulf %391, %920 : vector<8x256xf32>
      %c1_355 = arith.constant 1 : index
      %c10_356 = arith.constant 10 : index
      %922 = memref.load %arg9[%c1_355, %c10_356] : memref<9x16xf32, #tpu.memory_space<smem>>
      %923 = vector.broadcast %922 : f32 to vector<8x256xf32>
      %924 = arith.mulf %923, %393 : vector<8x256xf32>
      %925 = arith.addf %921, %924 : vector<8x256xf32>
      %c2_357 = arith.constant 2 : index
      %c10_358 = arith.constant 10 : index
      %926 = memref.load %arg9[%c2_357, %c10_358] : memref<9x16xf32, #tpu.memory_space<smem>>
      %927 = vector.broadcast %926 : f32 to vector<8x256xf32>
      %928 = arith.mulf %927, %395 : vector<8x256xf32>
      %929 = arith.addf %925, %928 : vector<8x256xf32>
      %c3_359 = arith.constant 3 : index
      %c10_360 = arith.constant 10 : index
      %930 = memref.load %arg9[%c3_359, %c10_360] : memref<9x16xf32, #tpu.memory_space<smem>>
      %931 = vector.broadcast %930 : f32 to vector<8x256xf32>
      %932 = arith.mulf %931, %397 : vector<8x256xf32>
      %933 = arith.addf %929, %932 : vector<8x256xf32>
      %c4_361 = arith.constant 4 : index
      %c10_362 = arith.constant 10 : index
      %934 = memref.load %arg9[%c4_361, %c10_362] : memref<9x16xf32, #tpu.memory_space<smem>>
      %935 = vector.broadcast %934 : f32 to vector<8x256xf32>
      %936 = arith.mulf %935, %399 : vector<8x256xf32>
      %937 = arith.addf %933, %936 : vector<8x256xf32>
      %c5_363 = arith.constant 5 : index
      %c10_364 = arith.constant 10 : index
      %938 = memref.load %arg9[%c5_363, %c10_364] : memref<9x16xf32, #tpu.memory_space<smem>>
      %939 = vector.broadcast %938 : f32 to vector<8x256xf32>
      %940 = arith.mulf %939, %401 : vector<8x256xf32>
      %941 = arith.addf %937, %940 : vector<8x256xf32>
      %c6_365 = arith.constant 6 : index
      %c10_366 = arith.constant 10 : index
      %942 = memref.load %arg9[%c6_365, %c10_366] : memref<9x16xf32, #tpu.memory_space<smem>>
      %943 = vector.broadcast %942 : f32 to vector<8x256xf32>
      %944 = arith.mulf %943, %403 : vector<8x256xf32>
      %945 = arith.addf %941, %944 : vector<8x256xf32>
      %c7_367 = arith.constant 7 : index
      %c10_368 = arith.constant 10 : index
      %946 = memref.load %arg9[%c7_367, %c10_368] : memref<9x16xf32, #tpu.memory_space<smem>>
      %947 = vector.broadcast %946 : f32 to vector<8x256xf32>
      %948 = arith.mulf %947, %405 : vector<8x256xf32>
      %949 = arith.addf %945, %948 : vector<8x256xf32>
      %c8_369 = arith.constant 8 : index
      %c10_370 = arith.constant 10 : index
      %950 = memref.load %arg9[%c8_369, %c10_370] : memref<9x16xf32, #tpu.memory_space<smem>>
      %951 = vector.broadcast %950 : f32 to vector<8x256xf32>
      %952 = arith.mulf %951, %407 : vector<8x256xf32>
      %953 = arith.addf %949, %952 : vector<8x256xf32>
      %c0_371 = arith.constant 0 : index
      %c10_372 = arith.constant 10 : index
      %954 = memref.load %arg10[%c0_371, %c10_372] : memref<1x16xf32, #tpu.memory_space<smem>>
      %955 = vector.broadcast %954 : f32 to vector<8x256xf32>
      %956 = arith.addf %953, %955 : vector<8x256xf32>
      %cst_373 = arith.constant 0.000000e+00 : f32
      %957 = vector.broadcast %cst_373 : f32 to vector<8x256xf32>
      %958 = arith.maximumf %956, %957 : vector<8x256xf32>
      %cst_374 = arith.constant dense<0.000000e+00> : vector<8xf32>
      %959 = vector.multi_reduction <add>, %958, %cst_374 [1] : vector<8x256xf32> to vector<8xf32>
      %960 = vector.shape_cast %959 : vector<8xf32> to vector<8x1xf32>
      %cst_375 = arith.constant 3.906250e-03 : f32
      %961 = vector.broadcast %cst_375 : f32 to vector<8x1xf32>
      %962 = arith.mulf %960, %961 : vector<8x1xf32>
      %c10_i32 = arith.constant 10 : i32
      %963 = vector.broadcast %c10_i32 : i32 to vector<8x128xi32>
      %964 = arith.cmpi eq, %389, %963 : vector<8x128xi32>
      %cst_376 = arith.constant 0.000000e+00 : f32
      %965 = vector.shape_cast %962 : vector<8x1xf32> to vector<8x1xf32>
      %966 = vector.broadcast %965 : vector<8x1xf32> to vector<8x128xf32>
      %967 = vector.broadcast %cst_376 : f32 to vector<8x128xf32>
      %968 = arith.select %964, %966, %967 : vector<8x128xi1>, vector<8x128xf32>
      %969 = arith.addf %918, %968 : vector<8x128xf32>
      %c0_377 = arith.constant 0 : index
      %c11 = arith.constant 11 : index
      %970 = memref.load %arg9[%c0_377, %c11] : memref<9x16xf32, #tpu.memory_space<smem>>
      %971 = vector.broadcast %970 : f32 to vector<8x256xf32>
      %972 = arith.mulf %391, %971 : vector<8x256xf32>
      %c1_378 = arith.constant 1 : index
      %c11_379 = arith.constant 11 : index
      %973 = memref.load %arg9[%c1_378, %c11_379] : memref<9x16xf32, #tpu.memory_space<smem>>
      %974 = vector.broadcast %973 : f32 to vector<8x256xf32>
      %975 = arith.mulf %974, %393 : vector<8x256xf32>
      %976 = arith.addf %972, %975 : vector<8x256xf32>
      %c2_380 = arith.constant 2 : index
      %c11_381 = arith.constant 11 : index
      %977 = memref.load %arg9[%c2_380, %c11_381] : memref<9x16xf32, #tpu.memory_space<smem>>
      %978 = vector.broadcast %977 : f32 to vector<8x256xf32>
      %979 = arith.mulf %978, %395 : vector<8x256xf32>
      %980 = arith.addf %976, %979 : vector<8x256xf32>
      %c3_382 = arith.constant 3 : index
      %c11_383 = arith.constant 11 : index
      %981 = memref.load %arg9[%c3_382, %c11_383] : memref<9x16xf32, #tpu.memory_space<smem>>
      %982 = vector.broadcast %981 : f32 to vector<8x256xf32>
      %983 = arith.mulf %982, %397 : vector<8x256xf32>
      %984 = arith.addf %980, %983 : vector<8x256xf32>
      %c4_384 = arith.constant 4 : index
      %c11_385 = arith.constant 11 : index
      %985 = memref.load %arg9[%c4_384, %c11_385] : memref<9x16xf32, #tpu.memory_space<smem>>
      %986 = vector.broadcast %985 : f32 to vector<8x256xf32>
      %987 = arith.mulf %986, %399 : vector<8x256xf32>
      %988 = arith.addf %984, %987 : vector<8x256xf32>
      %c5_386 = arith.constant 5 : index
      %c11_387 = arith.constant 11 : index
      %989 = memref.load %arg9[%c5_386, %c11_387] : memref<9x16xf32, #tpu.memory_space<smem>>
      %990 = vector.broadcast %989 : f32 to vector<8x256xf32>
      %991 = arith.mulf %990, %401 : vector<8x256xf32>
      %992 = arith.addf %988, %991 : vector<8x256xf32>
      %c6_388 = arith.constant 6 : index
      %c11_389 = arith.constant 11 : index
      %993 = memref.load %arg9[%c6_388, %c11_389] : memref<9x16xf32, #tpu.memory_space<smem>>
      %994 = vector.broadcast %993 : f32 to vector<8x256xf32>
      %995 = arith.mulf %994, %403 : vector<8x256xf32>
      %996 = arith.addf %992, %995 : vector<8x256xf32>
      %c7_390 = arith.constant 7 : index
      %c11_391 = arith.constant 11 : index
      %997 = memref.load %arg9[%c7_390, %c11_391] : memref<9x16xf32, #tpu.memory_space<smem>>
      %998 = vector.broadcast %997 : f32 to vector<8x256xf32>
      %999 = arith.mulf %998, %405 : vector<8x256xf32>
      %1000 = arith.addf %996, %999 : vector<8x256xf32>
      %c8_392 = arith.constant 8 : index
      %c11_393 = arith.constant 11 : index
      %1001 = memref.load %arg9[%c8_392, %c11_393] : memref<9x16xf32, #tpu.memory_space<smem>>
      %1002 = vector.broadcast %1001 : f32 to vector<8x256xf32>
      %1003 = arith.mulf %1002, %407 : vector<8x256xf32>
      %1004 = arith.addf %1000, %1003 : vector<8x256xf32>
      %c0_394 = arith.constant 0 : index
      %c11_395 = arith.constant 11 : index
      %1005 = memref.load %arg10[%c0_394, %c11_395] : memref<1x16xf32, #tpu.memory_space<smem>>
      %1006 = vector.broadcast %1005 : f32 to vector<8x256xf32>
      %1007 = arith.addf %1004, %1006 : vector<8x256xf32>
      %cst_396 = arith.constant 0.000000e+00 : f32
      %1008 = vector.broadcast %cst_396 : f32 to vector<8x256xf32>
      %1009 = arith.maximumf %1007, %1008 : vector<8x256xf32>
      %cst_397 = arith.constant dense<0.000000e+00> : vector<8xf32>
      %1010 = vector.multi_reduction <add>, %1009, %cst_397 [1] : vector<8x256xf32> to vector<8xf32>
      %1011 = vector.shape_cast %1010 : vector<8xf32> to vector<8x1xf32>
      %cst_398 = arith.constant 3.906250e-03 : f32
      %1012 = vector.broadcast %cst_398 : f32 to vector<8x1xf32>
      %1013 = arith.mulf %1011, %1012 : vector<8x1xf32>
      %c11_i32 = arith.constant 11 : i32
      %1014 = vector.broadcast %c11_i32 : i32 to vector<8x128xi32>
      %1015 = arith.cmpi eq, %389, %1014 : vector<8x128xi32>
      %cst_399 = arith.constant 0.000000e+00 : f32
      %1016 = vector.shape_cast %1013 : vector<8x1xf32> to vector<8x1xf32>
      %1017 = vector.broadcast %1016 : vector<8x1xf32> to vector<8x128xf32>
      %1018 = vector.broadcast %cst_399 : f32 to vector<8x128xf32>
      %1019 = arith.select %1015, %1017, %1018 : vector<8x128xi1>, vector<8x128xf32>
      %1020 = arith.addf %969, %1019 : vector<8x128xf32>
      %c0_400 = arith.constant 0 : index
      %c12 = arith.constant 12 : index
      %1021 = memref.load %arg9[%c0_400, %c12] : memref<9x16xf32, #tpu.memory_space<smem>>
      %1022 = vector.broadcast %1021 : f32 to vector<8x256xf32>
      %1023 = arith.mulf %391, %1022 : vector<8x256xf32>
      %c1_401 = arith.constant 1 : index
      %c12_402 = arith.constant 12 : index
      %1024 = memref.load %arg9[%c1_401, %c12_402] : memref<9x16xf32, #tpu.memory_space<smem>>
      %1025 = vector.broadcast %1024 : f32 to vector<8x256xf32>
      %1026 = arith.mulf %1025, %393 : vector<8x256xf32>
      %1027 = arith.addf %1023, %1026 : vector<8x256xf32>
      %c2_403 = arith.constant 2 : index
      %c12_404 = arith.constant 12 : index
      %1028 = memref.load %arg9[%c2_403, %c12_404] : memref<9x16xf32, #tpu.memory_space<smem>>
      %1029 = vector.broadcast %1028 : f32 to vector<8x256xf32>
      %1030 = arith.mulf %1029, %395 : vector<8x256xf32>
      %1031 = arith.addf %1027, %1030 : vector<8x256xf32>
      %c3_405 = arith.constant 3 : index
      %c12_406 = arith.constant 12 : index
      %1032 = memref.load %arg9[%c3_405, %c12_406] : memref<9x16xf32, #tpu.memory_space<smem>>
      %1033 = vector.broadcast %1032 : f32 to vector<8x256xf32>
      %1034 = arith.mulf %1033, %397 : vector<8x256xf32>
      %1035 = arith.addf %1031, %1034 : vector<8x256xf32>
      %c4_407 = arith.constant 4 : index
      %c12_408 = arith.constant 12 : index
      %1036 = memref.load %arg9[%c4_407, %c12_408] : memref<9x16xf32, #tpu.memory_space<smem>>
      %1037 = vector.broadcast %1036 : f32 to vector<8x256xf32>
      %1038 = arith.mulf %1037, %399 : vector<8x256xf32>
      %1039 = arith.addf %1035, %1038 : vector<8x256xf32>
      %c5_409 = arith.constant 5 : index
      %c12_410 = arith.constant 12 : index
      %1040 = memref.load %arg9[%c5_409, %c12_410] : memref<9x16xf32, #tpu.memory_space<smem>>
      %1041 = vector.broadcast %1040 : f32 to vector<8x256xf32>
      %1042 = arith.mulf %1041, %401 : vector<8x256xf32>
      %1043 = arith.addf %1039, %1042 : vector<8x256xf32>
      %c6_411 = arith.constant 6 : index
      %c12_412 = arith.constant 12 : index
      %1044 = memref.load %arg9[%c6_411, %c12_412] : memref<9x16xf32, #tpu.memory_space<smem>>
      %1045 = vector.broadcast %1044 : f32 to vector<8x256xf32>
      %1046 = arith.mulf %1045, %403 : vector<8x256xf32>
      %1047 = arith.addf %1043, %1046 : vector<8x256xf32>
      %c7_413 = arith.constant 7 : index
      %c12_414 = arith.constant 12 : index
      %1048 = memref.load %arg9[%c7_413, %c12_414] : memref<9x16xf32, #tpu.memory_space<smem>>
      %1049 = vector.broadcast %1048 : f32 to vector<8x256xf32>
      %1050 = arith.mulf %1049, %405 : vector<8x256xf32>
      %1051 = arith.addf %1047, %1050 : vector<8x256xf32>
      %c8_415 = arith.constant 8 : index
      %c12_416 = arith.constant 12 : index
      %1052 = memref.load %arg9[%c8_415, %c12_416] : memref<9x16xf32, #tpu.memory_space<smem>>
      %1053 = vector.broadcast %1052 : f32 to vector<8x256xf32>
      %1054 = arith.mulf %1053, %407 : vector<8x256xf32>
      %1055 = arith.addf %1051, %1054 : vector<8x256xf32>
      %c0_417 = arith.constant 0 : index
      %c12_418 = arith.constant 12 : index
      %1056 = memref.load %arg10[%c0_417, %c12_418] : memref<1x16xf32, #tpu.memory_space<smem>>
      %1057 = vector.broadcast %1056 : f32 to vector<8x256xf32>
      %1058 = arith.addf %1055, %1057 : vector<8x256xf32>
      %cst_419 = arith.constant 0.000000e+00 : f32
      %1059 = vector.broadcast %cst_419 : f32 to vector<8x256xf32>
      %1060 = arith.maximumf %1058, %1059 : vector<8x256xf32>
      %cst_420 = arith.constant dense<0.000000e+00> : vector<8xf32>
      %1061 = vector.multi_reduction <add>, %1060, %cst_420 [1] : vector<8x256xf32> to vector<8xf32>
      %1062 = vector.shape_cast %1061 : vector<8xf32> to vector<8x1xf32>
      %cst_421 = arith.constant 3.906250e-03 : f32
      %1063 = vector.broadcast %cst_421 : f32 to vector<8x1xf32>
      %1064 = arith.mulf %1062, %1063 : vector<8x1xf32>
      %c12_i32 = arith.constant 12 : i32
      %1065 = vector.broadcast %c12_i32 : i32 to vector<8x128xi32>
      %1066 = arith.cmpi eq, %389, %1065 : vector<8x128xi32>
      %cst_422 = arith.constant 0.000000e+00 : f32
      %1067 = vector.shape_cast %1064 : vector<8x1xf32> to vector<8x1xf32>
      %1068 = vector.broadcast %1067 : vector<8x1xf32> to vector<8x128xf32>
      %1069 = vector.broadcast %cst_422 : f32 to vector<8x128xf32>
      %1070 = arith.select %1066, %1068, %1069 : vector<8x128xi1>, vector<8x128xf32>
      %1071 = arith.addf %1020, %1070 : vector<8x128xf32>
      %c0_423 = arith.constant 0 : index
      %c13 = arith.constant 13 : index
      %1072 = memref.load %arg9[%c0_423, %c13] : memref<9x16xf32, #tpu.memory_space<smem>>
      %1073 = vector.broadcast %1072 : f32 to vector<8x256xf32>
      %1074 = arith.mulf %391, %1073 : vector<8x256xf32>
      %c1_424 = arith.constant 1 : index
      %c13_425 = arith.constant 13 : index
      %1075 = memref.load %arg9[%c1_424, %c13_425] : memref<9x16xf32, #tpu.memory_space<smem>>
      %1076 = vector.broadcast %1075 : f32 to vector<8x256xf32>
      %1077 = arith.mulf %1076, %393 : vector<8x256xf32>
      %1078 = arith.addf %1074, %1077 : vector<8x256xf32>
      %c2_426 = arith.constant 2 : index
      %c13_427 = arith.constant 13 : index
      %1079 = memref.load %arg9[%c2_426, %c13_427] : memref<9x16xf32, #tpu.memory_space<smem>>
      %1080 = vector.broadcast %1079 : f32 to vector<8x256xf32>
      %1081 = arith.mulf %1080, %395 : vector<8x256xf32>
      %1082 = arith.addf %1078, %1081 : vector<8x256xf32>
      %c3_428 = arith.constant 3 : index
      %c13_429 = arith.constant 13 : index
      %1083 = memref.load %arg9[%c3_428, %c13_429] : memref<9x16xf32, #tpu.memory_space<smem>>
      %1084 = vector.broadcast %1083 : f32 to vector<8x256xf32>
      %1085 = arith.mulf %1084, %397 : vector<8x256xf32>
      %1086 = arith.addf %1082, %1085 : vector<8x256xf32>
      %c4_430 = arith.constant 4 : index
      %c13_431 = arith.constant 13 : index
      %1087 = memref.load %arg9[%c4_430, %c13_431] : memref<9x16xf32, #tpu.memory_space<smem>>
      %1088 = vector.broadcast %1087 : f32 to vector<8x256xf32>
      %1089 = arith.mulf %1088, %399 : vector<8x256xf32>
      %1090 = arith.addf %1086, %1089 : vector<8x256xf32>
      %c5_432 = arith.constant 5 : index
      %c13_433 = arith.constant 13 : index
      %1091 = memref.load %arg9[%c5_432, %c13_433] : memref<9x16xf32, #tpu.memory_space<smem>>
      %1092 = vector.broadcast %1091 : f32 to vector<8x256xf32>
      %1093 = arith.mulf %1092, %401 : vector<8x256xf32>
      %1094 = arith.addf %1090, %1093 : vector<8x256xf32>
      %c6_434 = arith.constant 6 : index
      %c13_435 = arith.constant 13 : index
      %1095 = memref.load %arg9[%c6_434, %c13_435] : memref<9x16xf32, #tpu.memory_space<smem>>
      %1096 = vector.broadcast %1095 : f32 to vector<8x256xf32>
      %1097 = arith.mulf %1096, %403 : vector<8x256xf32>
      %1098 = arith.addf %1094, %1097 : vector<8x256xf32>
      %c7_436 = arith.constant 7 : index
      %c13_437 = arith.constant 13 : index
      %1099 = memref.load %arg9[%c7_436, %c13_437] : memref<9x16xf32, #tpu.memory_space<smem>>
      %1100 = vector.broadcast %1099 : f32 to vector<8x256xf32>
      %1101 = arith.mulf %1100, %405 : vector<8x256xf32>
      %1102 = arith.addf %1098, %1101 : vector<8x256xf32>
      %c8_438 = arith.constant 8 : index
      %c13_439 = arith.constant 13 : index
      %1103 = memref.load %arg9[%c8_438, %c13_439] : memref<9x16xf32, #tpu.memory_space<smem>>
      %1104 = vector.broadcast %1103 : f32 to vector<8x256xf32>
      %1105 = arith.mulf %1104, %407 : vector<8x256xf32>
      %1106 = arith.addf %1102, %1105 : vector<8x256xf32>
      %c0_440 = arith.constant 0 : index
      %c13_441 = arith.constant 13 : index
      %1107 = memref.load %arg10[%c0_440, %c13_441] : memref<1x16xf32, #tpu.memory_space<smem>>
      %1108 = vector.broadcast %1107 : f32 to vector<8x256xf32>
      %1109 = arith.addf %1106, %1108 : vector<8x256xf32>
      %cst_442 = arith.constant 0.000000e+00 : f32
      %1110 = vector.broadcast %cst_442 : f32 to vector<8x256xf32>
      %1111 = arith.maximumf %1109, %1110 : vector<8x256xf32>
      %cst_443 = arith.constant dense<0.000000e+00> : vector<8xf32>
      %1112 = vector.multi_reduction <add>, %1111, %cst_443 [1] : vector<8x256xf32> to vector<8xf32>
      %1113 = vector.shape_cast %1112 : vector<8xf32> to vector<8x1xf32>
      %cst_444 = arith.constant 3.906250e-03 : f32
      %1114 = vector.broadcast %cst_444 : f32 to vector<8x1xf32>
      %1115 = arith.mulf %1113, %1114 : vector<8x1xf32>
      %c13_i32 = arith.constant 13 : i32
      %1116 = vector.broadcast %c13_i32 : i32 to vector<8x128xi32>
      %1117 = arith.cmpi eq, %389, %1116 : vector<8x128xi32>
      %cst_445 = arith.constant 0.000000e+00 : f32
      %1118 = vector.shape_cast %1115 : vector<8x1xf32> to vector<8x1xf32>
      %1119 = vector.broadcast %1118 : vector<8x1xf32> to vector<8x128xf32>
      %1120 = vector.broadcast %cst_445 : f32 to vector<8x128xf32>
      %1121 = arith.select %1117, %1119, %1120 : vector<8x128xi1>, vector<8x128xf32>
      %1122 = arith.addf %1071, %1121 : vector<8x128xf32>
      %c0_446 = arith.constant 0 : index
      %c14 = arith.constant 14 : index
      %1123 = memref.load %arg9[%c0_446, %c14] : memref<9x16xf32, #tpu.memory_space<smem>>
      %1124 = vector.broadcast %1123 : f32 to vector<8x256xf32>
      %1125 = arith.mulf %391, %1124 : vector<8x256xf32>
      %c1_447 = arith.constant 1 : index
      %c14_448 = arith.constant 14 : index
      %1126 = memref.load %arg9[%c1_447, %c14_448] : memref<9x16xf32, #tpu.memory_space<smem>>
      %1127 = vector.broadcast %1126 : f32 to vector<8x256xf32>
      %1128 = arith.mulf %1127, %393 : vector<8x256xf32>
      %1129 = arith.addf %1125, %1128 : vector<8x256xf32>
      %c2_449 = arith.constant 2 : index
      %c14_450 = arith.constant 14 : index
      %1130 = memref.load %arg9[%c2_449, %c14_450] : memref<9x16xf32, #tpu.memory_space<smem>>
      %1131 = vector.broadcast %1130 : f32 to vector<8x256xf32>
      %1132 = arith.mulf %1131, %395 : vector<8x256xf32>
      %1133 = arith.addf %1129, %1132 : vector<8x256xf32>
      %c3_451 = arith.constant 3 : index
      %c14_452 = arith.constant 14 : index
      %1134 = memref.load %arg9[%c3_451, %c14_452] : memref<9x16xf32, #tpu.memory_space<smem>>
      %1135 = vector.broadcast %1134 : f32 to vector<8x256xf32>
      %1136 = arith.mulf %1135, %397 : vector<8x256xf32>
      %1137 = arith.addf %1133, %1136 : vector<8x256xf32>
      %c4_453 = arith.constant 4 : index
      %c14_454 = arith.constant 14 : index
      %1138 = memref.load %arg9[%c4_453, %c14_454] : memref<9x16xf32, #tpu.memory_space<smem>>
      %1139 = vector.broadcast %1138 : f32 to vector<8x256xf32>
      %1140 = arith.mulf %1139, %399 : vector<8x256xf32>
      %1141 = arith.addf %1137, %1140 : vector<8x256xf32>
      %c5_455 = arith.constant 5 : index
      %c14_456 = arith.constant 14 : index
      %1142 = memref.load %arg9[%c5_455, %c14_456] : memref<9x16xf32, #tpu.memory_space<smem>>
      %1143 = vector.broadcast %1142 : f32 to vector<8x256xf32>
      %1144 = arith.mulf %1143, %401 : vector<8x256xf32>
      %1145 = arith.addf %1141, %1144 : vector<8x256xf32>
      %c6_457 = arith.constant 6 : index
      %c14_458 = arith.constant 14 : index
      %1146 = memref.load %arg9[%c6_457, %c14_458] : memref<9x16xf32, #tpu.memory_space<smem>>
      %1147 = vector.broadcast %1146 : f32 to vector<8x256xf32>
      %1148 = arith.mulf %1147, %403 : vector<8x256xf32>
      %1149 = arith.addf %1145, %1148 : vector<8x256xf32>
      %c7_459 = arith.constant 7 : index
      %c14_460 = arith.constant 14 : index
      %1150 = memref.load %arg9[%c7_459, %c14_460] : memref<9x16xf32, #tpu.memory_space<smem>>
      %1151 = vector.broadcast %1150 : f32 to vector<8x256xf32>
      %1152 = arith.mulf %1151, %405 : vector<8x256xf32>
      %1153 = arith.addf %1149, %1152 : vector<8x256xf32>
      %c8_461 = arith.constant 8 : index
      %c14_462 = arith.constant 14 : index
      %1154 = memref.load %arg9[%c8_461, %c14_462] : memref<9x16xf32, #tpu.memory_space<smem>>
      %1155 = vector.broadcast %1154 : f32 to vector<8x256xf32>
      %1156 = arith.mulf %1155, %407 : vector<8x256xf32>
      %1157 = arith.addf %1153, %1156 : vector<8x256xf32>
      %c0_463 = arith.constant 0 : index
      %c14_464 = arith.constant 14 : index
      %1158 = memref.load %arg10[%c0_463, %c14_464] : memref<1x16xf32, #tpu.memory_space<smem>>
      %1159 = vector.broadcast %1158 : f32 to vector<8x256xf32>
      %1160 = arith.addf %1157, %1159 : vector<8x256xf32>
      %cst_465 = arith.constant 0.000000e+00 : f32
      %1161 = vector.broadcast %cst_465 : f32 to vector<8x256xf32>
      %1162 = arith.maximumf %1160, %1161 : vector<8x256xf32>
      %cst_466 = arith.constant dense<0.000000e+00> : vector<8xf32>
      %1163 = vector.multi_reduction <add>, %1162, %cst_466 [1] : vector<8x256xf32> to vector<8xf32>
      %1164 = vector.shape_cast %1163 : vector<8xf32> to vector<8x1xf32>
      %cst_467 = arith.constant 3.906250e-03 : f32
      %1165 = vector.broadcast %cst_467 : f32 to vector<8x1xf32>
      %1166 = arith.mulf %1164, %1165 : vector<8x1xf32>
      %c14_i32 = arith.constant 14 : i32
      %1167 = vector.broadcast %c14_i32 : i32 to vector<8x128xi32>
      %1168 = arith.cmpi eq, %389, %1167 : vector<8x128xi32>
      %cst_468 = arith.constant 0.000000e+00 : f32
      %1169 = vector.shape_cast %1166 : vector<8x1xf32> to vector<8x1xf32>
      %1170 = vector.broadcast %1169 : vector<8x1xf32> to vector<8x128xf32>
      %1171 = vector.broadcast %cst_468 : f32 to vector<8x128xf32>
      %1172 = arith.select %1168, %1170, %1171 : vector<8x128xi1>, vector<8x128xf32>
      %1173 = arith.addf %1122, %1172 : vector<8x128xf32>
      %c0_469 = arith.constant 0 : index
      %c15 = arith.constant 15 : index
      %1174 = memref.load %arg9[%c0_469, %c15] : memref<9x16xf32, #tpu.memory_space<smem>>
      %1175 = vector.broadcast %1174 : f32 to vector<8x256xf32>
      %1176 = arith.mulf %391, %1175 : vector<8x256xf32>
      %c1_470 = arith.constant 1 : index
      %c15_471 = arith.constant 15 : index
      %1177 = memref.load %arg9[%c1_470, %c15_471] : memref<9x16xf32, #tpu.memory_space<smem>>
      %1178 = vector.broadcast %1177 : f32 to vector<8x256xf32>
      %1179 = arith.mulf %1178, %393 : vector<8x256xf32>
      %1180 = arith.addf %1176, %1179 : vector<8x256xf32>
      %c2_472 = arith.constant 2 : index
      %c15_473 = arith.constant 15 : index
      %1181 = memref.load %arg9[%c2_472, %c15_473] : memref<9x16xf32, #tpu.memory_space<smem>>
      %1182 = vector.broadcast %1181 : f32 to vector<8x256xf32>
      %1183 = arith.mulf %1182, %395 : vector<8x256xf32>
      %1184 = arith.addf %1180, %1183 : vector<8x256xf32>
      %c3_474 = arith.constant 3 : index
      %c15_475 = arith.constant 15 : index
      %1185 = memref.load %arg9[%c3_474, %c15_475] : memref<9x16xf32, #tpu.memory_space<smem>>
      %1186 = vector.broadcast %1185 : f32 to vector<8x256xf32>
      %1187 = arith.mulf %1186, %397 : vector<8x256xf32>
      %1188 = arith.addf %1184, %1187 : vector<8x256xf32>
      %c4_476 = arith.constant 4 : index
      %c15_477 = arith.constant 15 : index
      %1189 = memref.load %arg9[%c4_476, %c15_477] : memref<9x16xf32, #tpu.memory_space<smem>>
      %1190 = vector.broadcast %1189 : f32 to vector<8x256xf32>
      %1191 = arith.mulf %1190, %399 : vector<8x256xf32>
      %1192 = arith.addf %1188, %1191 : vector<8x256xf32>
      %c5_478 = arith.constant 5 : index
      %c15_479 = arith.constant 15 : index
      %1193 = memref.load %arg9[%c5_478, %c15_479] : memref<9x16xf32, #tpu.memory_space<smem>>
      %1194 = vector.broadcast %1193 : f32 to vector<8x256xf32>
      %1195 = arith.mulf %1194, %401 : vector<8x256xf32>
      %1196 = arith.addf %1192, %1195 : vector<8x256xf32>
      %c6_480 = arith.constant 6 : index
      %c15_481 = arith.constant 15 : index
      %1197 = memref.load %arg9[%c6_480, %c15_481] : memref<9x16xf32, #tpu.memory_space<smem>>
      %1198 = vector.broadcast %1197 : f32 to vector<8x256xf32>
      %1199 = arith.mulf %1198, %403 : vector<8x256xf32>
      %1200 = arith.addf %1196, %1199 : vector<8x256xf32>
      %c7_482 = arith.constant 7 : index
      %c15_483 = arith.constant 15 : index
      %1201 = memref.load %arg9[%c7_482, %c15_483] : memref<9x16xf32, #tpu.memory_space<smem>>
      %1202 = vector.broadcast %1201 : f32 to vector<8x256xf32>
      %1203 = arith.mulf %1202, %405 : vector<8x256xf32>
      %1204 = arith.addf %1200, %1203 : vector<8x256xf32>
      %c8_484 = arith.constant 8 : index
      %c15_485 = arith.constant 15 : index
      %1205 = memref.load %arg9[%c8_484, %c15_485] : memref<9x16xf32, #tpu.memory_space<smem>>
      %1206 = vector.broadcast %1205 : f32 to vector<8x256xf32>
      %1207 = arith.mulf %1206, %407 : vector<8x256xf32>
      %1208 = arith.addf %1204, %1207 : vector<8x256xf32>
      %c0_486 = arith.constant 0 : index
      %c15_487 = arith.constant 15 : index
      %1209 = memref.load %arg10[%c0_486, %c15_487] : memref<1x16xf32, #tpu.memory_space<smem>>
      %1210 = vector.broadcast %1209 : f32 to vector<8x256xf32>
      %1211 = arith.addf %1208, %1210 : vector<8x256xf32>
      %cst_488 = arith.constant 0.000000e+00 : f32
      %1212 = vector.broadcast %cst_488 : f32 to vector<8x256xf32>
      %1213 = arith.maximumf %1211, %1212 : vector<8x256xf32>
      %cst_489 = arith.constant dense<0.000000e+00> : vector<8xf32>
      %1214 = vector.multi_reduction <add>, %1213, %cst_489 [1] : vector<8x256xf32> to vector<8xf32>
      %1215 = vector.shape_cast %1214 : vector<8xf32> to vector<8x1xf32>
      %cst_490 = arith.constant 3.906250e-03 : f32
      %1216 = vector.broadcast %cst_490 : f32 to vector<8x1xf32>
      %1217 = arith.mulf %1215, %1216 : vector<8x1xf32>
      %c15_i32 = arith.constant 15 : i32
      %1218 = vector.broadcast %c15_i32 : i32 to vector<8x128xi32>
      %1219 = arith.cmpi eq, %389, %1218 : vector<8x128xi32>
      %cst_491 = arith.constant 0.000000e+00 : f32
      %1220 = vector.shape_cast %1217 : vector<8x1xf32> to vector<8x1xf32>
      %1221 = vector.broadcast %1220 : vector<8x1xf32> to vector<8x128xf32>
      %1222 = vector.broadcast %cst_491 : f32 to vector<8x128xf32>
      %1223 = arith.select %1219, %1221, %1222 : vector<8x128xi1>, vector<8x128xf32>
      %1224 = arith.addf %1173, %1223 : vector<8x128xf32>
      %1225 = arith.truncf %1224 : vector<8x128xf32> to vector<8x128xbf16>
      %c0_492 = arith.constant 0 : index
      %c0_493 = arith.constant 0 : index
      %1226 = vector.load %arg11[%c0_492, %c0_493] : memref<128x128xbf16, #tpu.memory_space<vmem>>, vector<128x128xbf16>
      %cst_494 = arith.constant dense<0.000000e+00> : vector<8x128xf32>
      %1227 = tpu.matmul %1225, %1226, %cst_494 {dimension_numbers = #tpu.dot_dimension_numbers<[1], [0], [0], [1], [0, 0, 1, 1], [], []>} : vector<8x128xbf16>, vector<128x128xbf16>, vector<8x128xf32> -> vector<8x128xf32>
      %c0_495 = arith.constant 0 : index
      %c0_496 = arith.constant 0 : index
      %1228 = vector.load %arg12[%c0_495, %c0_496] : memref<1x128xf32, #tpu.memory_space<vmem>>, vector<1x128xf32>
      %1229 = vector.broadcast %1228 : vector<1x128xf32> to vector<8x128xf32>
      %1230 = arith.addf %1227, %1229 : vector<8x128xf32>
      %1231 = arith.mulf %388, %1230 : vector<8x128xf32>
      %cst_497 = arith.constant dense<0.000000e+00> : vector<8xf32>
      %1232 = vector.multi_reduction <add>, %1231, %cst_497 [1] : vector<8x128xf32> to vector<8xf32>
      %1233 = vector.shape_cast %1232 : vector<8xf32> to vector<8x1xf32>
      %1234 = vector.shape_cast %1233 : vector<8x1xf32> to vector<8x1xf32>
      %1235 = vector.broadcast %1234 : vector<8x1xf32> to vector<8x128xf32>
      %c0_498 = arith.constant 0 : index
      %c0_499 = arith.constant 0 : index
      %1236 = vector.load %arg13[%c0_498, %c0_499] : memref<8x128xf32, #tpu.memory_space<vmem>>, vector<8x128xf32>
      tpu.vector_store %arg13[%c0_498, %c0_499], %1235 {strides = array<i32>} : memref<8x128xf32, #tpu.memory_space<vmem>>, vector<8x128xf32>,
    } else {
    }
    return
  }
  func.func @transform_0(%arg0: i32) -> (i32, i32) {
    %c0_i32 = arith.constant 0 : i32
    %c0_i32_0 = arith.constant 0 : i32
    %c0_i32_1 = arith.constant 0 : i32
    return %c0_i32, %c0_i32_0 : i32, i32
  }
  func.func @transform_1(%arg0: i32) -> (i32, i32) {
    %c0_i32 = arith.constant 0 : i32
    %c0_i32_0 = arith.constant 0 : i32
    %c0_i32_1 = arith.constant 0 : i32
    return %c0_i32, %c0_i32_0 : i32, i32
  }
  func.func @transform_2(%arg0: i32) -> (i32, i32) {
    %c0_i32 = arith.constant 0 : i32
    %c0_i32_0 = arith.constant 0 : i32
    %c0_i32_1 = arith.constant 0 : i32
    return %c0_i32, %c0_i32_0 : i32, i32
  }
  func.func @transform_3(%arg0: i32) -> (i32, i32, i32) {
    %c0_i32 = arith.constant 0 : i32
    %c0_i32_0 = arith.constant 0 : i32
    %c0_i32_1 = arith.constant 0 : i32
    return %arg0, %c0_i32, %c0_i32_0 : i32, i32, i32
  }
  func.func @transform_4(%arg0: i32) -> (i32, i32, i32) {
    %c0_i32 = arith.constant 0 : i32
    %c0_i32_0 = arith.constant 0 : i32
    %c0_i32_1 = arith.constant 0 : i32
    return %arg0, %c0_i32, %c0_i32_0 : i32, i32, i32
  }
  func.func @transform_5(%arg0: i32) -> (i32, i32, i32) {
    %c0_i32 = arith.constant 0 : i32
    %c0_i32_0 = arith.constant 0 : i32
    %c0_i32_1 = arith.constant 0 : i32
    return %arg0, %c0_i32, %c0_i32_0 : i32, i32, i32
  }
  func.func @transform_6(%arg0: i32) -> (i32, i32, i32) {
    %c0_i32 = arith.constant 0 : i32
    %c0_i32_0 = arith.constant 0 : i32
    %c0_i32_1 = arith.constant 0 : i32
    return %arg0, %c0_i32, %c0_i32_0 : i32, i32, i32
  }
  func.func @transform_7(%arg0: i32) -> (i32, i32, i32) {
    %c0_i32 = arith.constant 0 : i32
    %c0_i32_0 = arith.constant 0 : i32
    %c0_i32_1 = arith.constant 0 : i32
    %c0_i32_2 = arith.constant 0 : i32
    return %c0_i32, %c0_i32_0, %c0_i32_1 : i32, i32, i32
  }
  func.func @transform_8(%arg0: i32) -> (i32, i32) {
    %c0_i32 = arith.constant 0 : i32
    %c0_i32_0 = arith.constant 0 : i32
    %c0_i32_1 = arith.constant 0 : i32
    return %c0_i32, %c0_i32_0 : i32, i32
  }
  func.func @transform_9(%arg0: i32) -> (i32, i32) {
    %c0_i32 = arith.constant 0 : i32
    %c0_i32_0 = arith.constant 0 : i32
    %c0_i32_1 = arith.constant 0 : i32
    return %c0_i32, %c0_i32_0 : i32, i32
  }
  func.func @transform_10(%arg0: i32) -> (i32, i32) {
    %c0_i32 = arith.constant 0 : i32
    %c0_i32_0 = arith.constant 0 : i32
    %c0_i32_1 = arith.constant 0 : i32
    return %c0_i32, %c0_i32_0 : i32, i32
  }
  func.func @transform_11(%arg0: i32) -> (i32, i32) {
    %c0_i32 = arith.constant 0 : i32
    %c0_i32_0 = arith.constant 0 : i32
    %c0_i32_1 = arith.constant 0 : i32
    return %c0_i32, %c0_i32_0 : i32, i32
  }
  func.func @transform_12(%arg0: i32) -> (i32, i32) {
    %c0_i32 = arith.constant 0 : i32
    %c0_i32_0 = arith.constant 0 : i32
    %c0_i32_1 = arith.constant 0 : i32
    return %c0_i32, %c0_i32_0 : i32, i32
  }
}

</mosaic_0001>

<llo_original>
// kernel: zero_shot_forward.1
$region0: #{zero_shot_forward.1}
  #allocation0 [shape = 'u32[]', space=smem, size = 0x4, offset = 0x4, fixed_abs, tag = 'smem constant byte address 0x4 - core index']
  #allocation1 [shape = 'u32[144,128]{1,0:T(1,128)}', space=vmem, size = 0x12000, scoped, tag = 'internal scratch']
  #allocation2 [shape = 'f32[8,8,128]{2,1,0:T(8,128)}', space=vmem, size = 0x8000, scoped, tag = 'scratch operand']
  %s0 = inlined_call_operand.vmem [shape: s32[64,1], index: 0, kind: input, shape index: {}]
  %s1 = inlined_call_operand.vmem [shape: f32[8,1], index: 1, kind: input, shape index: {}]
  %s2 = inlined_call_operand.vmem [shape: f32[128,128], index: 2, kind: input, shape index: {}]
  %s3 = inlined_call_operand.vmem [shape: bf16[2,128,384], index: 3, kind: input, shape index: {}]
  %s4 = inlined_call_operand.vmem [shape: bf16[2,128,384], index: 4, kind: input, shape index: {}]
  %s5 = inlined_call_operand.vmem [shape: f32[2,1,384], index: 5, kind: input, shape index: {}]
  %s6 = inlined_call_operand.vmem [shape: f32[2,1,384], index: 6, kind: input, shape index: {}]
  %s7 = inlined_call_operand.vmem [shape: f32[9,8,256], index: 7, kind: input, shape index: {}]
  %s8 = inlined_call_operand.vmem [shape: f32[9,16], index: 8, kind: input, shape index: {}]
  %s9 = inlined_call_operand.vmem [shape: f32[1,16], index: 9, kind: input, shape index: {}]
  %s10 = inlined_call_operand.vmem [shape: bf16[128,128], index: 10, kind: input, shape index: {}]
  %s11 = inlined_call_operand.vmem [shape: f32[1,128], index: 11, kind: input, shape index: {}]
  %s12 = inlined_call_operand.vmem [shape: f32[8,128], index: 12, kind: output, shape index: {}]
  %s13 = sld [smem:[#allocation0]]
  $region129: #{zero_shot_forward.1} parent=0
    _
  %s15 = ssub.s32 1, %s13
  %s16 = scalar_select 0, %s15, %s13
  $region1: #{zero_shot_forward.1} parent=0
    #allocation3 [shape = 'u8[8192]{0}', space=smem, size = 0x2000, scoped, tag = 'input window, operand 8, single buffered']
    #allocation4 [shape = 's32[2]{0}', space=sflag, size = 0x8, scoped, tag = 'scoped memory for zero_shot_forward.1']
    #allocation5 [shape = 'u8[512]{0}', space=smem, size = 0x200, scoped, tag = 'input window, operand 9, single buffered']
    #allocation6 [shape = 's32[1]{0}', space=sflag, size = 0x4, scoped, tag = 'scoped memory for zero_shot_forward.1']
    %17 = vsyncpa [#allocation4], 0
    %18 = vsyncpa [#allocation6], 0
    loop: start=0, step=1, limit=4
    $region2: #{zero_shot_forward.1} parent=1 // loop_pre_header
      _
    $region3: #{zero_shot_forward.1} parent=1 // loop_header
      %s20 = sphi 0, %s24
      %p21 = scmp.ge.s32.totalorder %s20, 4
      %s28 = sphi 0, %s28
      %s30 = sphi 0, %s28
      %s31 = sphi 0, %s30
      %s45 = sphi 0, %s31
      %s49 = sphi 0, %s49
      %s51 = sphi 0, %s49
      %s52 = sphi 0, %s51
      %s66 = sphi 0, %s52
      %s70 = sphi 0, %s70
      %s72 = sphi 0, %s70
      %s73 = sphi 0, %s72
      %s87 = sphi 0, %s73
      %s93 = sphi 0, %s95
      %s96 = sphi 0, %s93
      %s97 = sphi 0, %s96
      %s113 = sphi 0, %s97
      %s119 = sphi 0, %s121
      %s122 = sphi 0, %s119
      %s123 = sphi 0, %s122
      %s139 = sphi 0, %s123
      %s145 = sphi 0, %s147
      %s148 = sphi 0, %s145
      %s149 = sphi 0, %s148
      %s165 = sphi 0, %s149
      %s171 = sphi 0, %s173
      %s174 = sphi 0, %s171
      %s175 = sphi 0, %s174
      %s191 = sphi 0, %s175
      %s195 = sphi 0, %s195
      %s197 = sphi 0, %s195
      %s198 = sphi 0, %s197
      %s212 = sphi 0, %s198
      %s216 = sphi 0, %s216
      %s218 = sphi 0, %s216
      %s219 = sphi 0, %s218
      %s233 = sphi 0, %s219
      %s237 = sphi 0, %s237
      %s239 = sphi 0, %s237
      %s240 = sphi 0, %s239
      %s254 = sphi 0, %s240
      %s258 = sphi 0, %s258
      %s260 = sphi 0, %s258
      %s261 = sphi 0, %s260
      %s275 = sphi 0, %s261
      %s279 = sphi 0, %s279
      %s281 = sphi 0, %s279
      %s282 = sphi 0, %s281
      %s296 = sphi 0, %s282
      %s300 = sphi 0, %s300
      %s302 = sphi 0, %s300
      %s303 = sphi 0, %s302
      %s317 = sphi 0, %s303
    $region4: #{zero_shot_forward.1} parent=1 // loop_header_branch
      %23 = sbr.rel (%p21) target = $region8
    $region5: #{zero_shot_forward.1} parent=1 // loop_body
      %s25 = ssub.s32 %s20, 1
      %s26 = ssub.s32 %s20, 2
      %s27 = sadd.s32 %s20, 1
      %s29 = sadd.s32 %s28, 1
      %p32 = scmp.eq.s32.totalorder %s20, 1
      %p33 = scmp.ne.s32.totalorder %s28, %s30
      %p34 = scmp.eq.s32.totalorder %s20, 0
      %p35 = por %p33, %p34
      %p36 = scmp.ne.s32.totalorder %s28, %s30
      %p37 = scmp.eq.s32.totalorder %s25, 1
      %p38 = por %p36, %p37
      %p39 = scmp.ne.s32.totalorder %s30, %s31
      %p40 = scmp.eq.s32.totalorder %s25, 0
      %p41 = por %p39, %p40
      %p42 = scmp.ne.s32.totalorder %s30, %s31
      %p43 = scmp.eq.s32.totalorder %s26, 1
      %p44 = por %p42, %p43
      %p46 = scmp.ne.s32.totalorder %s31, %s45
      %p47 = scmp.eq.s32.totalorder %s26, 0
      %p48 = por %p46, %p47
      %s50 = sadd.s32 %s49, 1
      %p53 = scmp.eq.s32.totalorder %s20, 1
      %p54 = scmp.ne.s32.totalorder %s49, %s51
      %p55 = scmp.eq.s32.totalorder %s20, 0
      %p56 = por %p54, %p55
      %p57 = scmp.ne.s32.totalorder %s49, %s51
      %p58 = scmp.eq.s32.totalorder %s25, 1
      %p59 = por %p57, %p58
      %p60 = scmp.ne.s32.totalorder %s51, %s52
      %p61 = scmp.eq.s32.totalorder %s25, 0
      %p62 = por %p60, %p61
      %p63 = scmp.ne.s32.totalorder %s51, %s52
      %p64 = scmp.eq.s32.totalorder %s26, 1
      %p65 = por %p63, %p64
      %p67 = scmp.ne.s32.totalorder %s52, %s66
      %p68 = scmp.eq.s32.totalorder %s26, 0
      %p69 = por %p67, %p68
      %s71 = sadd.s32 %s70, 1
      %p74 = scmp.eq.s32.totalorder %s20, 1
      %p75 = scmp.ne.s32.totalorder %s70, %s72
      %p76 = scmp.eq.s32.totalorder %s20, 0
      %p77 = por %p75, %p76
      %p78 = scmp.ne.s32.totalorder %s70, %s72
      %p79 = scmp.eq.s32.totalorder %s25, 1
      %p80 = por %p78, %p79
      %p81 = scmp.ne.s32.totalorder %s72, %s73
      %p82 = scmp.eq.s32.totalorder %s25, 0
      %p83 = por %p81, %p82
      %p84 = scmp.ne.s32.totalorder %s72, %s73
      %p85 = scmp.eq.s32.totalorder %s26, 1
      %p86 = por %p84, %p85
      %p88 = scmp.ne.s32.totalorder %s73, %s87
      %p89 = scmp.eq.s32.totalorder %s26, 0
      %p90 = por %p88, %p89
      %s91 = ssub.s32 %s20, %s27
      %p92 = scmp.eq.s32.totalorder %s91, 0
      %s94 = sadd.s32 %s93, 1
      %s95 = scalar_select %p92, %s93, %s94
      %p98 = pneg %p92
      %p99 = scmp.eq.s32.totalorder %s20, 1
      %p100 = por %p98, %p99
      %p101 = scmp.ne.s32.totalorder %s93, %s96
      %p102 = scmp.eq.s32.totalorder %s20, 0
      %p103 = por %p101, %p102
      %p104 = scmp.ne.s32.totalorder %s93, %s96
      %p105 = scmp.eq.s32.totalorder %s25, 1
      %p106 = por %p104, %p105
      %p107 = scmp.ne.s32.totalorder %s96, %s97
      %p108 = scmp.eq.s32.totalorder %s25, 0
      %p109 = por %p107, %p108
      %p110 = scmp.ne.s32.totalorder %s96, %s97
      %p111 = scmp.eq.s32.totalorder %s26, 1
      %p112 = por %p110, %p111
      %p114 = scmp.ne.s32.totalorder %s97, %s113
      %p115 = scmp.eq.s32.totalorder %s26, 0
      %p116 = por %p114, %p115
      %s117 = ssub.s32 %s20, %s27
      %p118 = scmp.eq.s32.totalorder %s117, 0
      %s120 = sadd.s32 %s119, 1
      %s121 = scalar_select %p118, %s119, %s120
      %p124 = pneg %p118
      %p125 = scmp.eq.s32.totalorder %s20, 1
      %p126 = por %p124, %p125
      %p127 = scmp.ne.s32.totalorder %s119, %s122
      %p128 = scmp.eq.s32.totalorder %s20, 0
      %p129 = por %p127, %p128
      %p130 = scmp.ne.s32.totalorder %s119, %s122
      %p131 = scmp.eq.s32.totalorder %s25, 1
      %p132 = por %p130, %p131
      %p133 = scmp.ne.s32.totalorder %s122, %s123
      %p134 = scmp.eq.s32.totalorder %s25, 0
      %p135 = por %p133, %p134
      %p136 = scmp.ne.s32.totalorder %s122, %s123
      %p137 = scmp.eq.s32.totalorder %s26, 1
      %p138 = por %p136, %p137
      %p140 = scmp.ne.s32.totalorder %s123, %s139
      %p141 = scmp.eq.s32.totalorder %s26, 0
      %p142 = por %p140, %p141
      %s143 = ssub.s32 %s20, %s27
      %p144 = scmp.eq.s32.totalorder %s143, 0
      %s146 = sadd.s32 %s145, 1
      %s147 = scalar_select %p144, %s145, %s146
      %p150 = pneg %p144
      %p151 = scmp.eq.s32.totalorder %s20, 1
      %p152 = por %p150, %p151
      %p153 = scmp.ne.s32.totalorder %s145, %s148
      %p154 = scmp.eq.s32.totalorder %s20, 0
      %p155 = por %p153, %p154
      %p156 = scmp.ne.s32.totalorder %s145, %s148
      %p157 = scmp.eq.s32.totalorder %s25, 1
      %p158 = por %p156, %p157
      %p159 = scmp.ne.s32.totalorder %s148, %s149
      %p160 = scmp.eq.s32.totalorder %s25, 0
      %p161 = por %p159, %p160
      %p162 = scmp.ne.s32.totalorder %s148, %s149
      %p163 = scmp.eq.s32.totalorder %s26, 1
      %p164 = por %p162, %p163
      %p166 = scmp.ne.s32.totalorder %s149, %s165
      %p167 = scmp.eq.s32.totalorder %s26, 0
      %p168 = por %p166, %p167
      %s169 = ssub.s32 %s20, %s27
      %p170 = scmp.eq.s32.totalorder %s169, 0
      %s172 = sadd.s32 %s171, 1
      %s173 = scalar_select %p170, %s171, %s172
      %p176 = pneg %p170
      %p177 = scmp.eq.s32.totalorder %s20, 1
      %p178 = por %p176, %p177
      %p179 = scmp.ne.s32.totalorder %s171, %s174
      %p180 = scmp.eq.s32.totalorder %s20, 0
      %p181 = por %p179, %p180
      %p182 = scmp.ne.s32.totalorder %s171, %s174
      %p183 = scmp.eq.s32.totalorder %s25, 1
      %p184 = por %p182, %p183
      %p185 = scmp.ne.s32.totalorder %s174, %s175
      %p186 = scmp.eq.s32.totalorder %s25, 0
      %p187 = por %p185, %p186
      %p188 = scmp.ne.s32.totalorder %s174, %s175
      %p189 = scmp.eq.s32.totalorder %s26, 1
      %p190 = por %p188, %p189
      %p192 = scmp.ne.s32.totalorder %s175, %s191
      %p193 = scmp.eq.s32.totalorder %s26, 0
      %p194 = por %p192, %p193
      %s196 = sadd.s32 %s195, 1
      %p199 = scmp.eq.s32.totalorder %s20, 1
      %p200 = scmp.ne.s32.totalorder %s195, %s197
      %p201 = scmp.eq.s32.totalorder %s20, 0
      %p202 = por %p200, %p201
      %p203 = scmp.ne.s32.totalorder %s195, %s197
      %p204 = scmp.eq.s32.totalorder %s25, 1
      %p205 = por %p203, %p204
      %p206 = scmp.ne.s32.totalorder %s197, %s198
      %p207 = scmp.eq.s32.totalorder %s25, 0
      %p208 = por %p206, %p207
      %p209 = scmp.ne.s32.totalorder %s197, %s198
      %p210 = scmp.eq.s32.totalorder %s26, 1
      %p211 = por %p209, %p210
      %p213 = scmp.ne.s32.totalorder %s198, %s212
      %p214 = scmp.eq.s32.totalorder %s26, 0
      %p215 = por %p213, %p214
      %s217 = sadd.s32 %s216, 1
      %p220 = scmp.eq.s32.totalorder %s20, 1
      %p221 = scmp.ne.s32.totalorder %s216, %s218
      %p222 = scmp.eq.s32.totalorder %s20, 0
      %p223 = por %p221, %p222
      %p224 = scmp.ne.s32.totalorder %s216, %s218
      %p225 = scmp.eq.s32.totalorder %s25, 1
      %p226 = por %p224, %p225
      %p227 = scmp.ne.s32.totalorder %s218, %s219
      %p228 = scmp.eq.s32.totalorder %s25, 0
      %p229 = por %p227, %p228
      %p230 = scmp.ne.s32.totalorder %s218, %s219
      %p231 = scmp.eq.s32.totalorder %s26, 1
      %p232 = por %p230, %p231
      %p234 = scmp.ne.s32.totalorder %s219, %s233
      %p235 = scmp.eq.s32.totalorder %s26, 0
      %p236 = por %p234, %p235
      %s238 = sadd.s32 %s237, 1
      %p241 = scmp.eq.s32.totalorder %s20, 1
      %p242 = scmp.ne.s32.totalorder %s237, %s239
      %p243 = scmp.eq.s32.totalorder %s20, 0
      %p244 = por %p242, %p243
      %p245 = scmp.ne.s32.totalorder %s237, %s239
      %p246 = scmp.eq.s32.totalorder %s25, 1
      %p247 = por %p245, %p246
      %p248 = scmp.ne.s32.totalorder %s239, %s240
      %p249 = scmp.eq.s32.totalorder %s25, 0
      %p250 = por %p248, %p249
      %p251 = scmp.ne.s32.totalorder %s239, %s240
      %p252 = scmp.eq.s32.totalorder %s26, 1
      %p253 = por %p251, %p252
      %p255 = scmp.ne.s32.totalorder %s240, %s254
      %p256 = scmp.eq.s32.totalorder %s26, 0
      %p257 = por %p255, %p256
      %s259 = sadd.s32 %s258, 1
      %p262 = scmp.eq.s32.totalorder %s20, 1
      %p263 = scmp.ne.s32.totalorder %s258, %s260
      %p264 = scmp.eq.s32.totalorder %s20, 0
      %p265 = por %p263, %p264
      %p266 = scmp.ne.s32.totalorder %s258, %s260
      %p267 = scmp.eq.s32.totalorder %s25, 1
      %p268 = por %p266, %p267
      %p269 = scmp.ne.s32.totalorder %s260, %s261
      %p270 = scmp.eq.s32.totalorder %s25, 0
      %p271 = por %p269, %p270
      %p272 = scmp.ne.s32.totalorder %s260, %s261
      %p273 = scmp.eq.s32.totalorder %s26, 1
      %p274 = por %p272, %p273
      %p276 = scmp.ne.s32.totalorder %s261, %s275
      %p277 = scmp.eq.s32.totalorder %s26, 0
      %p278 = por %p276, %p277
      %s280 = sadd.s32 %s279, 1
      %p283 = scmp.eq.s32.totalorder %s20, 1
      %p284 = scmp.ne.s32.totalorder %s279, %s281
      %p285 = scmp.eq.s32.totalorder %s20, 0
      %p286 = por %p284, %p285
      %p287 = scmp.ne.s32.totalorder %s279, %s281
      %p288 = scmp.eq.s32.totalorder %s25, 1
      %p289 = por %p287, %p288
      %p290 = scmp.ne.s32.totalorder %s281, %s282
      %p291 = scmp.eq.s32.totalorder %s25, 0
      %p292 = por %p290, %p291
      %p293 = scmp.ne.s32.totalorder %s281, %s282
      %p294 = scmp.eq.s32.totalorder %s26, 1
      %p295 = por %p293, %p294
      %p297 = scmp.ne.s32.totalorder %s282, %s296
      %p298 = scmp.eq.s32.totalorder %s26, 0
      %p299 = por %p297, %p298
      %s301 = sadd.s32 %s300, 1
      %p304 = scmp.eq.s32.totalorder %s20, 1
      %p305 = scmp.ne.s32.totalorder %s300, %s302
      %p306 = scmp.eq.s32.totalorder %s20, 0
      %p307 = por %p305, %p306
      %p308 = scmp.ne.s32.totalorder %s300, %s302
      %p309 = scmp.eq.s32.totalorder %s25, 1
      %p310 = por %p308, %p309
      %p311 = scmp.ne.s32.totalorder %s302, %s303
      %p312 = scmp.eq.s32.totalorder %s25, 0
      %p313 = por %p311, %p312
      %p314 = scmp.ne.s32.totalorder %s302, %s303
      %p315 = scmp.eq.s32.totalorder %s26, 1
      %p316 = por %p314, %p315
      %p318 = scmp.ne.s32.totalorder %s303, %s317
      %p319 = scmp.eq.s32.totalorder %s26, 0
      %p320 = por %p318, %p319
      %p321 = scmp.le.s32.totalorder 1, %s20
      %p322 = scmp.lt.s32.totalorder %s20, 3
      %p323 = pnand %p321, %p322
      %p324 = pneg %p323
      // Predicated region
      $region9: #{zero_shot_forward.1} parent=5 // pred_check
        _
      $region10: #{zero_shot_forward.1} parent=5 // pred_check_branch
        %326 = sbr.rel (%p323) target = $region12
      $region11: #{zero_shot_forward.1} parent=5 // pred_region
        %s327 = ssub.s32 %s20, 1
        // Predicated region
        $region13: #{zero_shot_forward.1} parent=11 // pred_check
          %p328 = pneg %p41
        $region14: #{zero_shot_forward.1} parent=11 // pred_check_branch
          %330 = sbr.rel (%p328) target = $region16
        $region15: #{zero_shot_forward.1} parent=11 // pred_region
          _
        $region16: #{zero_shot_forward.1} parent=11 // pred_fallthru
          _
        // Predicated region
        $region17: #{zero_shot_forward.1} parent=11 // pred_check
          %p331 = pneg %p62
        $region18: #{zero_shot_forward.1} parent=11 // pred_check_branch
          %333 = sbr.rel (%p331) target = $region20
        $region19: #{zero_shot_forward.1} parent=11 // pred_region
          _
        $region20: #{zero_shot_forward.1} parent=11 // pred_fallthru
          _
        // Predicated region
        $region21: #{zero_shot_forward.1} parent=11 // pred_check
          %p334 = pneg %p83
        $region22: #{zero_shot_forward.1} parent=11 // pred_check_branch
          %336 = sbr.rel (%p334) target = $region24
        $region23: #{zero_shot_forward.1} parent=11 // pred_region
          _
        $region24: #{zero_shot_forward.1} parent=11 // pred_fallthru
          _
        // Predicated region
        $region25: #{zero_shot_forward.1} parent=11 // pred_check
          %p337 = pneg %p208
        $region26: #{zero_shot_forward.1} parent=11 // pred_check_branch
          %339 = sbr.rel (%p337) target = $region28
        $region27: #{zero_shot_forward.1} parent=11 // pred_region
          _
        $region28: #{zero_shot_forward.1} parent=11 // pred_fallthru
          _
        // Predicated region
        $region29: #{zero_shot_forward.1} parent=11 // pred_check
          %p340 = pneg %p229
        $region30: #{zero_shot_forward.1} parent=11 // pred_check_branch
          %342 = sbr.rel (%p340) target = $region32
        $region31: #{zero_shot_forward.1} parent=11 // pred_region
          %s344 = ssub.s32 256, 256
          %345 = vsyncadd [#allocation4], %s344
          %s346 = sshll.u32 %s8, 4
          %s347 = int_to_ptr.vmem [resolvable:$true] %s346
          %352 = dma.vmem_to_smem %s347, 256, [#allocation3], [#allocation4], 128, 128, 8
        $region32: #{zero_shot_forward.1} parent=11 // pred_fallthru
          _
        // Predicated region
        $region33: #{zero_shot_forward.1} parent=11 // pred_check
          %p353 = pneg %p250
        $region34: #{zero_shot_forward.1} parent=11 // pred_check_branch
          %355 = sbr.rel (%p353) target = $region36
        $region35: #{zero_shot_forward.1} parent=11 // pred_region
          %s357 = ssub.s32 16, 16
          %358 = vsyncadd [#allocation6], %s357
          %s360 = sshll.u32 %s9, 4
          %s361 = int_to_ptr.vmem [resolvable:$true] %s360
          %363 = dma.vmem_to_smem %s361, 16, [#allocation5], [#allocation6]
        $region36: #{zero_shot_forward.1} parent=11 // pred_fallthru
          _
        // Predicated region
        $region37: #{zero_shot_forward.1} parent=11 // pred_check
          %p364 = pneg %p271
        $region38: #{zero_shot_forward.1} parent=11 // pred_check_branch
          %366 = sbr.rel (%p364) target = $region40
        $region39: #{zero_shot_forward.1} parent=11 // pred_region
          _
        $region40: #{zero_shot_forward.1} parent=11 // pred_fallthru
          _
        // Predicated region
        $region41: #{zero_shot_forward.1} parent=11 // pred_check
          %p367 = pneg %p292
        $region42: #{zero_shot_forward.1} parent=11 // pred_check_branch
          %369 = sbr.rel (%p367) target = $region44
        $region43: #{zero_shot_forward.1} parent=11 // pred_region
          _
        $region44: #{zero_shot_forward.1} parent=11 // pred_fallthru
          _
      $region12: #{zero_shot_forward.1} parent=5 // pred_fallthru
        _
      %p370 = scmp.lt.s32.totalorder %s20, 2
      // Predicated region
      $region45: #{zero_shot_forward.1} parent=5 // pred_check
        %p371 = pneg %p370
      $region46: #{zero_shot_forward.1} parent=5 // pred_check_branch
        %373 = sbr.rel (%p371) target = $region48
      $region47: #{zero_shot_forward.1} parent=5 // pred_region
        // Predicated region
        $region49: #{zero_shot_forward.1} parent=47 // pred_check
          %p374 = pneg %p103
        $region50: #{zero_shot_forward.1} parent=47 // pred_check_branch
          %376 = sbr.rel (%p374) target = $region52
        $region51: #{zero_shot_forward.1} parent=47 // pred_region
          %p377 = scmp.lt.s32.totalorder %s20, 1
          %s378 = scalar_select %p377, %s20, 1
          %s379 = smul.addr %s378, 48
          %s380 = smul.addr %s379, 4
          %s381 = scalar_lea.vmem %s3, %s380
        $region52: #{zero_shot_forward.1} parent=47 // pred_fallthru
          _
        // Predicated region
        $region53: #{zero_shot_forward.1} parent=47 // pred_check
          %p382 = pneg %p129
        $region54: #{zero_shot_forward.1} parent=47 // pred_check_branch
          %384 = sbr.rel (%p382) target = $region56
        $region55: #{zero_shot_forward.1} parent=47 // pred_region
          %p385 = scmp.lt.s32.totalorder %s20, 1
          %s386 = scalar_select %p385, %s20, 1
          %s387 = smul.addr %s386, 48
          %s388 = smul.addr %s387, 4
          %s389 = scalar_lea.vmem %s4, %s388
        $region56: #{zero_shot_forward.1} parent=47 // pred_fallthru
          _
        // Predicated region
        $region57: #{zero_shot_forward.1} parent=47 // pred_check
          %p390 = pneg %p155
        $region58: #{zero_shot_forward.1} parent=47 // pred_check_branch
          %392 = sbr.rel (%p390) target = $region60
        $region59: #{zero_shot_forward.1} parent=47 // pred_region
          %p393 = scmp.lt.s32.totalorder %s20, 1
          %s394 = scalar_select %p393, %s20, 1
          %s395 = smul.addr %s394, 3
          %s396 = scalar_lea.vmem %s5, %s395
        $region60: #{zero_shot_forward.1} parent=47 // pred_fallthru
          _
        // Predicated region
        $region61: #{zero_shot_forward.1} parent=47 // pred_check
          %p397 = pneg %p181
        $region62: #{zero_shot_forward.1} parent=47 // pred_check_branch
          %399 = sbr.rel (%p397) target = $region64
        $region63: #{zero_shot_forward.1} parent=47 // pred_region
          %p400 = scmp.lt.s32.totalorder %s20, 1
          %s401 = scalar_select %p400, %s20, 1
          %s402 = smul.addr %s401, 3
          %s403 = scalar_lea.vmem %s6, %s402
        $region64: #{zero_shot_forward.1} parent=47 // pred_fallthru
          _
      $region48: #{zero_shot_forward.1} parent=5 // pred_fallthru
        _
      %p404 = scmp.le.s32.totalorder 1, %s20
      %p405 = scmp.lt.s32.totalorder %s20, 3
      %p406 = pnand %p404, %p405
      %p407 = pneg %p406
      // Predicated region
      $region65: #{zero_shot_forward.1} parent=5 // pred_check
        _
      $region66: #{zero_shot_forward.1} parent=5 // pred_check_branch
        %409 = sbr.rel (%p406) target = $region68
      $region67: #{zero_shot_forward.1} parent=5 // pred_region
        %s410 = ssub.s32 %s20, 1
        // Predicated region
        $region69: #{zero_shot_forward.1} parent=67 // pred_check
          %p411 = pneg %p229
        $region70: #{zero_shot_forward.1} parent=67 // pred_check_branch
          %413 = sbr.rel (%p411) target = $region72
        $region71: #{zero_shot_forward.1} parent=67 // pred_region
          %414 = dma.done [#allocation4], 256
        $region72: #{zero_shot_forward.1} parent=67 // pred_fallthru
          _
        // Predicated region
        $region73: #{zero_shot_forward.1} parent=67 // pred_check
          %p415 = pneg %p250
        $region74: #{zero_shot_forward.1} parent=67 // pred_check_branch
          %417 = sbr.rel (%p415) target = $region76
        $region75: #{zero_shot_forward.1} parent=67 // pred_region
          %418 = dma.done [#allocation6], 16
        $region76: #{zero_shot_forward.1} parent=67 // pred_fallthru
          _
        %419 = sfence
        %p420 = pneg %p41
        %p421 = pneg %p38
        %p422 = pneg %p62
        %p423 = pneg %p59
        %p424 = pneg %p83
        %p425 = pneg %p80
        %p426 = scmp.lt.s32.totalorder %s25, 1
        %s427 = scalar_select %p426, %s25, 1
        %s428 = smul.addr %s427, 48
        %s429 = smul.addr %s428, 4
        %s430 = scalar_lea.vmem %s3, %s429
        %p431 = pneg %p109
        %p432 = pneg %p106
        %p433 = scmp.lt.s32.totalorder %s25, 1
        %s434 = scalar_select %p433, %s25, 1
        %s435 = smul.addr %s434, 48
        %s436 = smul.addr %s435, 4
        %s437 = scalar_lea.vmem %s4, %s436
        %p438 = pneg %p135
        %p439 = pneg %p132
        %p440 = scmp.lt.s32.totalorder %s25, 1
        %s441 = scalar_select %p440, %s25, 1
        %s442 = smul.addr %s441, 3
        %s443 = scalar_lea.vmem %s5, %s442
        %p444 = pneg %p161
        %p445 = pneg %p158
        %p446 = scmp.lt.s32.totalorder %s25, 1
        %s447 = scalar_select %p446, %s25, 1
        %s448 = smul.addr %s447, 3
        %s449 = scalar_lea.vmem %s6, %s448
        %p450 = pneg %p187
        %p451 = pneg %p184
        %p452 = pneg %p208
        %p453 = pneg %p205
        %p454 = pneg %p229
        %p455 = pneg %p226
        %p456 = pneg %p250
        %p457 = pneg %p247
        %p458 = pneg %p271
        %p459 = pneg %p268
        %p460 = pneg %p292
        %p461 = pneg %p289
        %p462 = pneg %p313
        %p463 = pneg %p310
        %p464 = scmp.lt.s32.totalorder %s25, 1
        %s465 = scalar_select %p464, %s25, 1
        %s466 = smul.addr %s465, 48
        %s467 = smul.addr %s466, 4
        %s468 = scalar_lea.vmem %s3, %s467
        %p469 = scmp.lt.s32.totalorder %s25, 1
        %s470 = scalar_select %p469, %s25, 1
        %s471 = smul.addr %s470, 48
        %s472 = smul.addr %s471, 4
        %s473 = scalar_lea.vmem %s4, %s472
        %p474 = scmp.lt.s32.totalorder %s25, 1
        %s475 = scalar_select %p474, %s25, 1
        %s476 = smul.addr %s475, 3
        %s477 = scalar_lea.vmem %s5, %s476
        %p478 = scmp.lt.s32.totalorder %s25, 1
        %s479 = scalar_select %p478, %s25, 1
        %s480 = smul.addr %s479, 3
        %s481 = scalar_lea.vmem %s6, %s480
        %p483 = scmp.eq.s32.totalorder %s25, 0
        // Predicated region
        $region77: #{zero_shot_forward.1} parent=67 // pred_check
          %p484 = pneg %p483
        $region78: #{zero_shot_forward.1} parent=67 // pred_check_branch
          %486 = sbr.rel (%p484) target = $region80
        $region79: #{zero_shot_forward.1} parent=67 // pred_region
          %v487 = vld [vmem:[%s0] sm:$0xff]
          %v488 = vld [vmem:[%s0 + $0x8] sm:$0xff]
          %v489 = vld [vmem:[%s0 + $0x10] sm:$0xff]
          %v490 = vld [vmem:[%s0 + $0x18] sm:$0xff]
          %v491 = vld [vmem:[%s0 + $0x20] sm:$0xff]
          %v492 = vld [vmem:[%s0 + $0x28] sm:$0xff]
          %v493 = vld [vmem:[%s0 + $0x30] sm:$0xff]
          %v494 = vld [vmem:[%s0 + $0x38] sm:$0xff]
          %v495 = vlaneseq
          %v496 = vand.u32 %v495, 127
          %497 = vset.pattern.permute.xlu0 0
          %498 = vperm.xlu0 %497, %v487
          %v499 = vpop.permute.xlu0 %498
          %500 = vset.pattern.permute.xlu0 0
          %501 = vperm.xlu0 %500, %v488
          %v502 = vpop.permute.xlu0 %501
          %503 = vset.pattern.permute.xlu0 0
          %504 = vperm.xlu0 %503, %v489
          %v505 = vpop.permute.xlu0 %504
          %506 = vset.pattern.permute.xlu0 0
          %507 = vperm.xlu0 %506, %v490
          %v508 = vpop.permute.xlu0 %507
          %509 = vset.pattern.permute.xlu0 0
          %510 = vperm.xlu0 %509, %v491
          %v511 = vpop.permute.xlu0 %510
          %512 = vset.pattern.permute.xlu0 0
          %513 = vperm.xlu0 %512, %v492
          %v514 = vpop.permute.xlu0 %513
          %515 = vset.pattern.permute.xlu0 0
          %516 = vperm.xlu0 %515, %v493
          %v517 = vpop.permute.xlu0 %516
          %518 = vset.pattern.permute.xlu0 0
          %519 = vperm.xlu0 %518, %v494
          %v520 = vpop.permute.xlu0 %519
          %vm521 = vcmp.eq.s32.totalorder %v496, %v499
          %vm522 = vcmp.eq.s32.totalorder %v496, %v502
          %vm523 = vcmp.eq.s32.totalorder %v496, %v505
          %vm524 = vcmp.eq.s32.totalorder %v496, %v508
          %vm525 = vcmp.eq.s32.totalorder %v496, %v511
          %vm526 = vcmp.eq.s32.totalorder %v496, %v514
          %vm527 = vcmp.eq.s32.totalorder %v496, %v517
          %vm528 = vcmp.eq.s32.totalorder %v496, %v520
          %v529 = vsel %vm521, 1, 0
          %v530 = vsel %vm522, 1, 0
          %v531 = vsel %vm523, 1, 0
          %v532 = vsel %vm524, 1, 0
          %v533 = vsel %vm525, 1, 0
          %v534 = vsel %vm526, 1, 0
          %v535 = vsel %vm527, 1, 0
          %v536 = vsel %vm528, 1, 0
          %v537 = vcvt.s32.f32 %v529
          %v538 = vcvt.s32.f32 %v530
          %v539 = vcvt.s32.f32 %v531
          %v540 = vcvt.s32.f32 %v532
          %v541 = vcvt.s32.f32 %v533
          %v542 = vcvt.s32.f32 %v534
          %v543 = vcvt.s32.f32 %v535
          %v544 = vcvt.s32.f32 %v536
          %v545 = vld [vmem:[%s2] sm:$0xff]
          %v546 = vld [vmem:[%s2 + $0x8] sm:$0xff]
          %v547 = vld [vmem:[%s2 + $0x10] sm:$0xff]
          %v548 = vld [vmem:[%s2 + $0x18] sm:$0xff]
          %v549 = vld [vmem:[%s2 + $0x20] sm:$0xff]
          %v550 = vld [vmem:[%s2 + $0x28] sm:$0xff]
          %v551 = vld [vmem:[%s2 + $0x30] sm:$0xff]
          %v552 = vld [vmem:[%s2 + $0x38] sm:$0xff]
          %v553 = vld [vmem:[%s2 + $0x40] sm:$0xff]
          %v554 = vld [vmem:[%s2 + $0x48] sm:$0xff]
          %v555 = vld [vmem:[%s2 + $0x50] sm:$0xff]
          %v556 = vld [vmem:[%s2 + $0x58] sm:$0xff]
          %v557 = vld [vmem:[%s2 + $0x60] sm:$0xff]
          %v558 = vld [vmem:[%s2 + $0x68] sm:$0xff]
          %v559 = vld [vmem:[%s2 + $0x70] sm:$0xff]
          %v560 = vld [vmem:[%s2 + $0x78] sm:$0xff]
          %561 = vmatprep.subr.mxu0 0.0
          %562 = vmatpush1.msra.mxu0 %v560
          %563 = vmatprep.subr.mxu0 0.0
          %564 = vmatpush1.msra.mxu0 %v559
          %565 = vmatprep.subr.mxu0 0.0
          %566 = vmatpush1.msra.mxu0 %v558
          %567 = vmatprep.subr.mxu0 0.0
          %568 = vmatpush1.msra.mxu0 %v557
          %569 = vmatprep.subr.mxu0 0.0
          %570 = vmatpush1.msra.mxu0 %v556
          %571 = vmatprep.subr.mxu0 0.0
          %572 = vmatpush1.msra.mxu0 %v555
          %573 = vmatprep.subr.mxu0 0.0
          %574 = vmatpush1.msra.mxu0 %v554
          %575 = vmatprep.subr.mxu0 0.0
          %576 = vmatpush1.msra.mxu0 %v553
          %577 = vmatprep.subr.mxu0 0.0
          %578 = vmatpush1.msra.mxu0 %v552
          %579 = vmatprep.subr.mxu0 0.0
          %580 = vmatpush1.msra.mxu0 %v551
          %581 = vmatprep.subr.mxu0 0.0
          %582 = vmatpush1.msra.mxu0 %v550
          %583 = vmatprep.subr.mxu0 0.0
          %584 = vmatpush1.msra.mxu0 %v549
          %585 = vmatprep.subr.mxu0 0.0
          %586 = vmatpush1.msra.mxu0 %v548
          %587 = vmatprep.subr.mxu0 0.0
          %588 = vmatpush1.msra.mxu0 %v547
          %589 = vmatprep.subr.mxu0 0.0
          %590 = vmatpush1.msra.mxu0 %v546
          %591 = vmatprep.subr.mxu0 0.0
          %592 = vmatpush1.msra.mxu0 %v545
          %593 = vmatprep.subr.mxu0 0.0
          %594 = vmatpush2.msra.mxu0 0.0
          %595 = vmatprep.subr.mxu0 0.0
          %596 = vmatpush2.msra.mxu0 0.0
          %597 = vmatprep.subr.mxu0 0.0
          %598 = vmatpush2.msra.mxu0 0.0
          %599 = vmatprep.subr.mxu0 0.0
          %600 = vmatpush2.msra.mxu0 0.0
          %601 = vmatprep.subr.mxu0 0.0
          %602 = vmatpush2.msra.mxu0 0.0
          %603 = vmatprep.subr.mxu0 0.0
          %604 = vmatpush2.msra.mxu0 0.0
          %605 = vmatprep.subr.mxu0 0.0
          %606 = vmatpush2.msra.mxu0 0.0
          %607 = vmatprep.subr.mxu0 0.0
          %608 = vmatpush2.msra.mxu0 0.0
          %609 = vmatprep.subr.mxu0 0.0
          %610 = vmatpush2.msra.mxu0 0.0
          %611 = vmatprep.subr.mxu0 0.0
          %612 = vmatpush2.msra.mxu0 0.0
          %613 = vmatprep.subr.mxu0 0.0
          %614 = vmatpush2.msra.mxu0 0.0
          %615 = vmatprep.subr.mxu0 0.0
          %616 = vmatpush2.msra.mxu0 0.0
          %617 = vmatprep.subr.mxu0 0.0
          %618 = vmatpush2.msra.mxu0 0.0
          %619 = vmatprep.subr.mxu0 0.0
          %620 = vmatpush2.msra.mxu0 0.0
          %621 = vmatprep.subr.mxu0 0.0
          %622 = vmatpush2.msra.mxu0 0.0
          %623 = vmatprep.subr.mxu0 0.0
          %624 = vmatpush2.msra.mxu0 0.0
          %625 = vmatprep.mubr.f32.mxu0 0.0
          %626 = vmatmul.mubr.f32.gmra.mxu0 %v537
          %v627 = vpop.f32.mrf.mxu0
          %v628 = vadd.f32 0.0, %v627
          %v629 = vpop.f32.mrf.mxu0
          %630 = vmatprep.mubr.f32.mxu0 0.0
          %631 = vmatmul.mubr.f32.gmra.mxu0 %v538
          %v632 = vpop.f32.mrf.mxu0
          %v633 = vadd.f32 0.0, %v632
          %v634 = vpop.f32.mrf.mxu0
          %635 = vmatprep.mubr.f32.mxu0 0.0
          %636 = vmatmul.mubr.f32.gmra.mxu0 %v539
          %v637 = vpop.f32.mrf.mxu0
          %v638 = vadd.f32 0.0, %v637
          %v639 = vpop.f32.mrf.mxu0
          %640 = vmatprep.mubr.f32.mxu0 0.0
          %641 = vmatmul.mubr.f32.gmra.mxu0 %v540
          %v642 = vpop.f32.mrf.mxu0
          %v643 = vadd.f32 0.0, %v642
          %v644 = vpop.f32.mrf.mxu0
          %645 = vmatprep.mubr.f32.mxu0 0.0
          %646 = vmatmul.mubr.f32.gmra.mxu0 %v541
          %v647 = vpop.f32.mrf.mxu0
          %v648 = vadd.f32 0.0, %v647
          %v649 = vpop.f32.mrf.mxu0
          %650 = vmatprep.mubr.f32.mxu0 0.0
          %651 = vmatmul.mubr.f32.gmra.mxu0 %v542
          %v652 = vpop.f32.mrf.mxu0
          %v653 = vadd.f32 0.0, %v652
          %v654 = vpop.f32.mrf.mxu0
          %655 = vmatprep.mubr.f32.mxu0 0.0
          %656 = vmatmul.mubr.f32.gmra.mxu0 %v543
          %v657 = vpop.f32.mrf.mxu0
          %v658 = vadd.f32 0.0, %v657
          %v659 = vpop.f32.mrf.mxu0
          %660 = vmatprep.mubr.f32.mxu0 0.0
          %661 = vmatmul.mubr.f32.gmra.mxu0 %v544
          %v662 = vpop.f32.mrf.mxu0
          %v663 = vadd.f32 0.0, %v662
          %v664 = vpop.f32.mrf.mxu0
          %665 = vdwg.mxu0
          %666 = vst [vmem:[#allocation2] sm:$0xff] %v628
          %667 = vst [vmem:[#allocation2 + $0x8] sm:$0xff] %v633
          %668 = vst [vmem:[#allocation2 + $0x10] sm:$0xff] %v638
          %669 = vst [vmem:[#allocation2 + $0x18] sm:$0xff] %v643
          %670 = vst [vmem:[#allocation2 + $0x20] sm:$0xff] %v648
          %671 = vst [vmem:[#allocation2 + $0x28] sm:$0xff] %v653
          %672 = vst [vmem:[#allocation2 + $0x30] sm:$0xff] %v658
          %673 = vst [vmem:[#allocation2 + $0x38] sm:$0xff] %v663
        $region80: #{zero_shot_forward.1} parent=67 // pred_fallthru
          _
        %v674 = vld [vmem:[#allocation2] sm:$0xff]
        %v675 = vld [vmem:[#allocation2 + $0x8] sm:$0xff]
        %v676 = vld [vmem:[#allocation2 + $0x10] sm:$0xff]
        %v677 = vld [vmem:[#allocation2 + $0x18] sm:$0xff]
        %v678 = vld [vmem:[#allocation2 + $0x20] sm:$0xff]
        %v679 = vld [vmem:[#allocation2 + $0x28] sm:$0xff]
        %v680 = vld [vmem:[#allocation2 + $0x30] sm:$0xff]
        %v681 = vld [vmem:[#allocation2 + $0x38] sm:$0xff]
        %v682 = vpack.c.bf16 %v675, %v674
        %v683 = vpack.c.bf16 %v677, %v676
        %v684 = vpack.c.bf16 %v679, %v678
        %v685 = vpack.c.bf16 %v681, %v680
        %v686 = vld [vmem:[%s468] sm:$0xff]
        %v687 = vld [vmem:[%s468 + $0x8] sm:$0xf]
        %v688 = vld [vmem:[%s468 + $0xc] sm:$0xff]
        %v689 = vld [vmem:[%s468 + $0x14] sm:$0xf]
        %v690 = vld [vmem:[%s468 + $0x18] sm:$0xff]
        %v691 = vld [vmem:[%s468 + $0x20] sm:$0xf]
        %v692 = vld [vmem:[%s468 + $0x24] sm:$0xff]
        %v693 = vld [vmem:[%s468 + $0x2c] sm:$0xf]
        %v694 = vld [vmem:[%s468 + $0x30] sm:$0xff]
        %v695 = vld [vmem:[%s468 + $0x38] sm:$0xf]
        %v696 = vld [vmem:[%s468 + $0x3c] sm:$0xff]
        %v697 = vld [vmem:[%s468 + $0x44] sm:$0xf]
        %v698 = vld [vmem:[%s468 + $0x48] sm:$0xff]
        %v699 = vld [vmem:[%s468 + $0x50] sm:$0xf]
        %v700 = vld [vmem:[%s468 + $0x54] sm:$0xff]
        %v701 = vld [vmem:[%s468 + $0x5c] sm:$0xf]
        %v702 = vld [vmem:[%s468 + $0x60] sm:$0xff]
        %v703 = vld [vmem:[%s468 + $0x68] sm:$0xf]
        %v704 = vld [vmem:[%s468 + $0x6c] sm:$0xff]
        %v705 = vld [vmem:[%s468 + $0x74] sm:$0xf]
        %v706 = vld [vmem:[%s468 + $0x78] sm:$0xff]
        %v707 = vld [vmem:[%s468 + $0x80] sm:$0xf]
        %v708 = vld [vmem:[%s468 + $0x84] sm:$0xff]
        %v709 = vld [vmem:[%s468 + $0x8c] sm:$0xf]
        %v710 = vld [vmem:[%s468 + $0x90] sm:$0xff]
        %v711 = vld [vmem:[%s468 + $0x98] sm:$0xf]
        %v712 = vld [vmem:[%s468 + $0x9c] sm:$0xff]
        %v713 = vld [vmem:[%s468 + $0xa4] sm:$0xf]
        %v714 = vld [vmem:[%s468 + $0xa8] sm:$0xff]
        %v715 = vld [vmem:[%s468 + $0xb0] sm:$0xf]
        %v716 = vld [vmem:[%s468 + $0xb4] sm:$0xff]
        %v717 = vld [vmem:[%s468 + $0xbc] sm:$0xf]
        %v718 = vld [vmem:[%s477] sm:$0x7]
        %v720 = vlaneseq
        %v721 = vshrl.u32 %v720, 7
        %v722 = vsub.s32 0, %v721
        %v723 = vrot.slane %v718, %v722
        %v724 = vlaneseq
        %v725 = vshrl.u32 %v724, 7
        %v726 = vsub.s32 1, %v725
        %v727 = vrot.slane %v718, %v726
        %v728 = vlaneseq
        %v729 = vshrl.u32 %v728, 7
        %v730 = vsub.s32 2, %v729
        %v731 = vrot.slane %v718, %v730
        %v767 = vunpack.c.l.b16 %v686
        %v768 = vunpack.c.h.b16 %v686
        %v769 = vunpack.c.l.b16 %v687
        %v770 = vunpack.c.l.b16 %v688
        %v771 = vunpack.c.h.b16 %v688
        %v772 = vunpack.c.l.b16 %v689
        %v773 = vunpack.c.l.b16 %v690
        %v774 = vunpack.c.h.b16 %v690
        %v775 = vunpack.c.l.b16 %v691
        %v776 = vunpack.c.l.b16 %v692
        %v777 = vunpack.c.h.b16 %v692
        %v778 = vunpack.c.l.b16 %v693
        %v779 = vunpack.c.l.b16 %v694
        %v780 = vunpack.c.h.b16 %v694
        %v781 = vunpack.c.l.b16 %v695
        %v782 = vunpack.c.l.b16 %v696
        %v783 = vunpack.c.h.b16 %v696
        %v784 = vunpack.c.l.b16 %v697
        %v785 = vunpack.c.l.b16 %v698
        %v786 = vunpack.c.h.b16 %v698
        %v787 = vunpack.c.l.b16 %v699
        %v788 = vunpack.c.l.b16 %v700
        %v789 = vunpack.c.h.b16 %v700
        %v790 = vunpack.c.l.b16 %v701
        %v791 = vunpack.c.l.b16 %v702
        %v792 = vunpack.c.h.b16 %v702
        %v793 = vunpack.c.l.b16 %v703
        %v794 = vunpack.c.l.b16 %v704
        %v795 = vunpack.c.h.b16 %v704
        %v796 = vunpack.c.l.b16 %v705
        %v797 = vunpack.c.l.b16 %v706
        %v798 = vunpack.c.h.b16 %v706
        %v799 = vunpack.c.l.b16 %v707
        %v800 = vunpack.c.l.b16 %v708
        %v801 = vunpack.c.h.b16 %v708
        %v802 = vunpack.c.l.b16 %v709
        %v803 = vunpack.c.l.b16 %v710
        %v804 = vunpack.c.h.b16 %v710
        %v805 = vunpack.c.l.b16 %v711
        %v806 = vunpack.c.l.b16 %v712
        %v807 = vunpack.c.h.b16 %v712
        %v808 = vunpack.c.l.b16 %v713
        %v809 = vunpack.c.l.b16 %v714
        %v810 = vunpack.c.h.b16 %v714
        %v811 = vunpack.c.l.b16 %v715
        %v812 = vunpack.c.l.b16 %v716
        %v813 = vunpack.c.h.b16 %v716
        %v814 = vunpack.c.l.b16 %v717
        %v815 = vpack.c.b16 %v770, %v767
        %v816 = vpack.c.b16 %v771, %v768
        %v817 = vpack.c.b16 %v772, %v769
        %v818 = vpack.c.b16 %v776, %v773
        %v819 = vpack.c.b16 %v777, %v774
        %v820 = vpack.c.b16 %v778, %v775
        %v821 = vpack.c.b16 %v782, %v779
        %v822 = vpack.c.b16 %v783, %v780
        %v823 = vpack.c.b16 %v784, %v781
        %v824 = vpack.c.b16 %v788, %v785
        %v825 = vpack.c.b16 %v789, %v786
        %v826 = vpack.c.b16 %v790, %v787
        %v827 = vpack.c.b16 %v794, %v791
        %v828 = vpack.c.b16 %v795, %v792
        %v829 = vpack.c.b16 %v796, %v793
        %v830 = vpack.c.b16 %v800, %v797
        %v831 = vpack.c.b16 %v801, %v798
        %v832 = vpack.c.b16 %v802, %v799
        %v833 = vpack.c.b16 %v806, %v803
        %v834 = vpack.c.b16 %v807, %v804
        %v835 = vpack.c.b16 %v808, %v805
        %v836 = vpack.c.b16 %v812, %v809
        %v837 = vpack.c.b16 %v813, %v810
        %v838 = vpack.c.b16 %v814, %v811
        %863 = vmatprep.subr.bf16.mxu0 %v837
        %864 = vmatpush1.bf16.msra.mxu0 %v836
        %865 = vmatprep.subr.bf16.mxu0 %v834
        %866 = vmatpush1.bf16.msra.mxu0 %v833
        %867 = vmatprep.subr.bf16.mxu0 %v831
        %868 = vmatpush1.bf16.msra.mxu0 %v830
        %869 = vmatprep.subr.bf16.mxu0 %v828
        %870 = vmatpush1.bf16.msra.mxu0 %v827
        %871 = vmatprep.subr.bf16.mxu0 %v825
        %872 = vmatpush1.bf16.msra.mxu0 %v824
        %873 = vmatprep.subr.bf16.mxu0 %v822
        %874 = vmatpush1.bf16.msra.mxu0 %v821
        %875 = vmatprep.subr.bf16.mxu0 %v819
        %876 = vmatpush1.bf16.msra.mxu0 %v818
        %877 = vmatprep.subr.bf16.mxu0 %v816
        %878 = vmatpush1.bf16.msra.mxu0 %v815
        %879 = vmatprep.subr.bf16.mxu0 0
        %880 = vmatpush2.bf16.msra.mxu0 0
        %881 = vmatprep.subr.bf16.mxu0 0
        %882 = vmatpush2.bf16.msra.mxu0 0
        %883 = vmatprep.subr.bf16.mxu0 0
        %884 = vmatpush2.bf16.msra.mxu0 0
        %885 = vmatprep.subr.bf16.mxu0 0
        %886 = vmatpush2.bf16.msra.mxu0 0
        %887 = vmatprep.subr.bf16.mxu0 0
        %888 = vmatpush2.bf16.msra.mxu0 0
        %889 = vmatprep.subr.bf16.mxu0 0
        %890 = vmatpush2.bf16.msra.mxu0 0
        %891 = vmatprep.subr.bf16.mxu0 0
        %892 = vmatpush2.bf16.msra.mxu0 0
        %893 = vmatprep.subr.bf16.mxu0 0
        %894 = vmatpush2.bf16.msra.mxu0 0
        %895 = vmatprep.mubr.bf16.mxu0 0
        %896 = vmatmul.mubr.bf16.gmra.mxu0 %v682
        %v897 = vpop.f32.mrf.mxu0
        %v898 = vadd.f32 %v723, %v897
        %v899 = vpop.f32.mrf.mxu0
        %v900 = vadd.f32 %v727, %v899
        %v901 = vpop.f32.mrf.mxu0
        %v902 = vadd.f32 %v723, %v901
        %v903 = vpop.f32.mrf.mxu0
        %v904 = vadd.f32 %v727, %v903
        %905 = vmatprep.mubr.bf16.mxu0 0
        %906 = vmatmul.mubr.bf16.gmra.mxu0 %v683
        %v907 = vpop.f32.mrf.mxu0
        %v908 = vadd.f32 %v723, %v907
        %v909 = vpop.f32.mrf.mxu0
        %v910 = vadd.f32 %v727, %v909
        %v911 = vpop.f32.mrf.mxu0
        %v912 = vadd.f32 %v723, %v911
        %v913 = vpop.f32.mrf.mxu0
        %v914 = vadd.f32 %v727, %v913
        %915 = vmatprep.mubr.bf16.mxu0 0
        %916 = vmatmul.mubr.bf16.gmra.mxu0 %v684
        %v917 = vpop.f32.mrf.mxu0
        %v918 = vadd.f32 %v723, %v917
        %v919 = vpop.f32.mrf.mxu0
        %v920 = vadd.f32 %v727, %v919
        %v921 = vpop.f32.mrf.mxu0
        %v922 = vadd.f32 %v723, %v921
        %v923 = vpop.f32.mrf.mxu0
        %v924 = vadd.f32 %v727, %v923
        %925 = vmatprep.mubr.bf16.mxu0 0
        %926 = vmatmul.mubr.bf16.gmra.mxu0 %v685
        %v927 = vpop.f32.mrf.mxu0
        %v928 = vadd.f32 %v723, %v927
        %v929 = vpop.f32.mrf.mxu0
        %v930 = vadd.f32 %v727, %v929
        %v931 = vpop.f32.mrf.mxu0
        %v932 = vadd.f32 %v723, %v931
        %v933 = vpop.f32.mrf.mxu0
        %v934 = vadd.f32 %v727, %v933
        %935 = vdwg.mxu0
        %936 = vmatprep.subr.bf16.mxu0 0
        %937 = vmatpush1.bf16.msra.mxu0 %v838
        %938 = vmatprep.subr.bf16.mxu0 0
        %939 = vmatpush1.bf16.msra.mxu0 %v835
        %940 = vmatprep.subr.bf16.mxu0 0
        %941 = vmatpush1.bf16.msra.mxu0 %v832
        %942 = vmatprep.subr.bf16.mxu0 0
        %943 = vmatpush1.bf16.msra.mxu0 %v829
        %944 = vmatprep.subr.bf16.mxu0 0
        %945 = vmatpush1.bf16.msra.mxu0 %v826
        %946 = vmatprep.subr.bf16.mxu0 0
        %947 = vmatpush1.bf16.msra.mxu0 %v823
        %948 = vmatprep.subr.bf16.mxu0 0
        %949 = vmatpush1.bf16.msra.mxu0 %v820
        %950 = vmatprep.subr.bf16.mxu0 0
        %951 = vmatpush1.bf16.msra.mxu0 %v817
        %952 = vmatprep.subr.bf16.mxu0 0
        %953 = vmatpush2.bf16.msra.mxu0 0
        %954 = vmatprep.subr.bf16.mxu0 0
        %955 = vmatpush2.bf16.msra.mxu0 0
        %956 = vmatprep.subr.bf16.mxu0 0
        %957 = vmatpush2.bf16.msra.mxu0 0
        %958 = vmatprep.subr.bf16.mxu0 0
        %959 = vmatpush2.bf16.msra.mxu0 0
        %960 = vmatprep.subr.bf16.mxu0 0
        %961 = vmatpush2.bf16.msra.mxu0 0
        %962 = vmatprep.subr.bf16.mxu0 0
        %963 = vmatpush2.bf16.msra.mxu0 0
        %964 = vmatprep.subr.bf16.mxu0 0
        %965 = vmatpush2.bf16.msra.mxu0 0
        %966 = vmatprep.subr.bf16.mxu0 0
        %967 = vmatpush2.bf16.msra.mxu0 0
        %968 = vmatprep.mubr.bf16.mxu0 0
        %969 = vmatmul.mubr.bf16.gmra.mxu0 %v682
        %v970 = vpop.f32.mrf.mxu0
        %v971 = vadd.f32 %v731, %v970
        %v972 = vpop.f32.mrf.mxu0
        %v973 = vpop.f32.mrf.mxu0
        %v974 = vadd.f32 %v731, %v973
        %v975 = vpop.f32.mrf.mxu0
        %976 = vmatprep.mubr.bf16.mxu0 0
        %977 = vmatmul.mubr.bf16.gmra.mxu0 %v683
        %v978 = vpop.f32.mrf.mxu0
        %v979 = vadd.f32 %v731, %v978
        %v980 = vpop.f32.mrf.mxu0
        %v981 = vpop.f32.mrf.mxu0
        %v982 = vadd.f32 %v731, %v981
        %v983 = vpop.f32.mrf.mxu0
        %984 = vmatprep.mubr.bf16.mxu0 0
        %985 = vmatmul.mubr.bf16.gmra.mxu0 %v684
        %v986 = vpop.f32.mrf.mxu0
        %v987 = vadd.f32 %v731, %v986
        %v988 = vpop.f32.mrf.mxu0
        %v989 = vpop.f32.mrf.mxu0
        %v990 = vadd.f32 %v731, %v989
        %v991 = vpop.f32.mrf.mxu0
        %992 = vmatprep.mubr.bf16.mxu0 0
        %993 = vmatmul.mubr.bf16.gmra.mxu0 %v685
        %v994 = vpop.f32.mrf.mxu0
        %v995 = vadd.f32 %v731, %v994
        %v996 = vpop.f32.mrf.mxu0
        %v997 = vpop.f32.mrf.mxu0
        %v998 = vadd.f32 %v731, %v997
        %v999 = vpop.f32.mrf.mxu0
        %1000 = vdwg.mxu0
        %v1001 = vld [vmem:[%s473] sm:$0xff]
        %v1002 = vld [vmem:[%s473 + $0x8] sm:$0xf]
        %v1003 = vld [vmem:[%s473 + $0xc] sm:$0xff]
        %v1004 = vld [vmem:[%s473 + $0x14] sm:$0xf]
        %v1005 = vld [vmem:[%s473 + $0x18] sm:$0xff]
        %v1006 = vld [vmem:[%s473 + $0x20] sm:$0xf]
        %v1007 = vld [vmem:[%s473 + $0x24] sm:$0xff]
        %v1008 = vld [vmem:[%s473 + $0x2c] sm:$0xf]
        %v1009 = vld [vmem:[%s473 + $0x30] sm:$0xff]
        %v1010 = vld [vmem:[%s473 + $0x38] sm:$0xf]
        %v1011 = vld [vmem:[%s473 + $0x3c] sm:$0xff]
        %v1012 = vld [vmem:[%s473 + $0x44] sm:$0xf]
        %v1013 = vld [vmem:[%s473 + $0x48] sm:$0xff]
        %v1014 = vld [vmem:[%s473 + $0x50] sm:$0xf]
        %v1015 = vld [vmem:[%s473 + $0x54] sm:$0xff]
        %v1016 = vld [vmem:[%s473 + $0x5c] sm:$0xf]
        %v1017 = vld [vmem:[%s473 + $0x60] sm:$0xff]
        %v1018 = vld [vmem:[%s473 + $0x68] sm:$0xf]
        %v1019 = vld [vmem:[%s473 + $0x6c] sm:$0xff]
        %v1020 = vld [vmem:[%s473 + $0x74] sm:$0xf]
        %v1021 = vld [vmem:[%s473 + $0x78] sm:$0xff]
        %v1022 = vld [vmem:[%s473 + $0x80] sm:$0xf]
        %v1023 = vld [vmem:[%s473 + $0x84] sm:$0xff]
        %v1024 = vld [vmem:[%s473 + $0x8c] sm:$0xf]
        %v1025 = vld [vmem:[%s473 + $0x90] sm:$0xff]
        %v1026 = vld [vmem:[%s473 + $0x98] sm:$0xf]
        %v1027 = vld [vmem:[%s473 + $0x9c] sm:$0xff]
        %v1028 = vld [vmem:[%s473 + $0xa4] sm:$0xf]
        %v1029 = vld [vmem:[%s473 + $0xa8] sm:$0xff]
        %v1030 = vld [vmem:[%s473 + $0xb0] sm:$0xf]
        %v1031 = vld [vmem:[%s473 + $0xb4] sm:$0xff]
        %v1032 = vld [vmem:[%s473 + $0xbc] sm:$0xf]
        %v1033 = vld [vmem:[%s481] sm:$0x7]
        %v1034 = vld [vmem:[%s1] sm:$0xff]
        %p1035 = scmp.lt.s32.totalorder %s25, 1
        %v1037 = vlaneseq
        %v1038 = vshrl.u32 %v1037, 7
        %v1039 = vsub.s32 0, %v1038
        %v1040 = vrot.slane %v1033, %v1039
        %v1041 = vlaneseq
        %v1042 = vshrl.u32 %v1041, 7
        %v1043 = vsub.s32 1, %v1042
        %v1044 = vrot.slane %v1033, %v1043
        %v1045 = vlaneseq
        %v1046 = vshrl.u32 %v1045, 7
        %v1047 = vsub.s32 2, %v1046
        %v1048 = vrot.slane %v1033, %v1047
        %v1084 = vunpack.c.l.b16 %v1001
        %v1085 = vunpack.c.h.b16 %v1001
        %v1086 = vunpack.c.l.b16 %v1002
        %v1087 = vunpack.c.l.b16 %v1003
        %v1088 = vunpack.c.h.b16 %v1003
        %v1089 = vunpack.c.l.b16 %v1004
        %v1090 = vunpack.c.l.b16 %v1005
        %v1091 = vunpack.c.h.b16 %v1005
        %v1092 = vunpack.c.l.b16 %v1006
        %v1093 = vunpack.c.l.b16 %v1007
        %v1094 = vunpack.c.h.b16 %v1007
        %v1095 = vunpack.c.l.b16 %v1008
        %v1096 = vunpack.c.l.b16 %v1009
        %v1097 = vunpack.c.h.b16 %v1009
        %v1098 = vunpack.c.l.b16 %v1010
        %v1099 = vunpack.c.l.b16 %v1011
        %v1100 = vunpack.c.h.b16 %v1011
        %v1101 = vunpack.c.l.b16 %v1012
        %v1102 = vunpack.c.l.b16 %v1013
        %v1103 = vunpack.c.h.b16 %v1013
        %v1104 = vunpack.c.l.b16 %v1014
        %v1105 = vunpack.c.l.b16 %v1015
        %v1106 = vunpack.c.h.b16 %v1015
        %v1107 = vunpack.c.l.b16 %v1016
        %v1108 = vunpack.c.l.b16 %v1017
        %v1109 = vunpack.c.h.b16 %v1017
        %v1110 = vunpack.c.l.b16 %v1018
        %v1111 = vunpack.c.l.b16 %v1019
        %v1112 = vunpack.c.h.b16 %v1019
        %v1113 = vunpack.c.l.b16 %v1020
        %v1114 = vunpack.c.l.b16 %v1021
        %v1115 = vunpack.c.h.b16 %v1021
        %v1116 = vunpack.c.l.b16 %v1022
        %v1117 = vunpack.c.l.b16 %v1023
        %v1118 = vunpack.c.h.b16 %v1023
        %v1119 = vunpack.c.l.b16 %v1024
        %v1120 = vunpack.c.l.b16 %v1025
        %v1121 = vunpack.c.h.b16 %v1025
        %v1122 = vunpack.c.l.b16 %v1026
        %v1123 = vunpack.c.l.b16 %v1027
        %v1124 = vunpack.c.h.b16 %v1027
        %v1125 = vunpack.c.l.b16 %v1028
        %v1126 = vunpack.c.l.b16 %v1029
        %v1127 = vunpack.c.h.b16 %v1029
        %v1128 = vunpack.c.l.b16 %v1030
        %v1129 = vunpack.c.l.b16 %v1031
        %v1130 = vunpack.c.h.b16 %v1031
        %v1131 = vunpack.c.l.b16 %v1032
        %v1132 = vpack.c.b16 %v1087, %v1084
        %v1133 = vpack.c.b16 %v1088, %v1085
        %v1134 = vpack.c.b16 %v1089, %v1086
        %v1135 = vpack.c.b16 %v1093, %v1090
        %v1136 = vpack.c.b16 %v1094, %v1091
        %v1137 = vpack.c.b16 %v1095, %v1092
        %v1138 = vpack.c.b16 %v1099, %v1096
        %v1139 = vpack.c.b16 %v1100, %v1097
        %v1140 = vpack.c.b16 %v1101, %v1098
        %v1141 = vpack.c.b16 %v1105, %v1102
        %v1142 = vpack.c.b16 %v1106, %v1103
        %v1143 = vpack.c.b16 %v1107, %v1104
        %v1144 = vpack.c.b16 %v1111, %v1108
        %v1145 = vpack.c.b16 %v1112, %v1109
        %v1146 = vpack.c.b16 %v1113, %v1110
        %v1147 = vpack.c.b16 %v1117, %v1114
        %v1148 = vpack.c.b16 %v1118, %v1115
        %v1149 = vpack.c.b16 %v1119, %v1116
        %v1150 = vpack.c.b16 %v1123, %v1120
        %v1151 = vpack.c.b16 %v1124, %v1121
        %v1152 = vpack.c.b16 %v1125, %v1122
        %v1153 = vpack.c.b16 %v1129, %v1126
        %v1154 = vpack.c.b16 %v1130, %v1127
        %v1155 = vpack.c.b16 %v1131, %v1128
        %1180 = vmatprep.subr.bf16.mxu0 %v1154
        %1181 = vmatpush1.bf16.msra.mxu0 %v1153
        %1182 = vmatprep.subr.bf16.mxu0 %v1151
        %1183 = vmatpush1.bf16.msra.mxu0 %v1150
        %1184 = vmatprep.subr.bf16.mxu0 %v1148
        %1185 = vmatpush1.bf16.msra.mxu0 %v1147
        %1186 = vmatprep.subr.bf16.mxu0 %v1145
        %1187 = vmatpush1.bf16.msra.mxu0 %v1144
        %1188 = vmatprep.subr.bf16.mxu0 %v1142
        %1189 = vmatpush1.bf16.msra.mxu0 %v1141
        %1190 = vmatprep.subr.bf16.mxu0 %v1139
        %1191 = vmatpush1.bf16.msra.mxu0 %v1138
        %1192 = vmatprep.subr.bf16.mxu0 %v1136
        %1193 = vmatpush1.bf16.msra.mxu0 %v1135
        %1194 = vmatprep.subr.bf16.mxu0 %v1133
        %1195 = vmatpush1.bf16.msra.mxu0 %v1132
        %1196 = vmatprep.subr.bf16.mxu0 0
        %1197 = vmatpush2.bf16.msra.mxu0 0
        %1198 = vmatprep.subr.bf16.mxu0 0
        %1199 = vmatpush2.bf16.msra.mxu0 0
        %1200 = vmatprep.subr.bf16.mxu0 0
        %1201 = vmatpush2.bf16.msra.mxu0 0
        %1202 = vmatprep.subr.bf16.mxu0 0
        %1203 = vmatpush2.bf16.msra.mxu0 0
        %1204 = vmatprep.subr.bf16.mxu0 0
        %1205 = vmatpush2.bf16.msra.mxu0 0
        %1206 = vmatprep.subr.bf16.mxu0 0
        %1207 = vmatpush2.bf16.msra.mxu0 0
        %1208 = vmatprep.subr.bf16.mxu0 0
        %1209 = vmatpush2.bf16.msra.mxu0 0
        %1210 = vmatprep.subr.bf16.mxu0 0
        %1211 = vmatpush2.bf16.msra.mxu0 0
        %1212 = vmatprep.mubr.bf16.mxu0 0
        %1213 = vmatmul.mubr.bf16.gmra.mxu0 0
        %v1214 = vpop.f32.mrf.mxu0
        %v1215 = vadd.f32 %v1040, %v1214
        %v1216 = vpop.f32.mrf.mxu0
        %v1217 = vadd.f32 %v1044, %v1216
        %v1218 = vpop.f32.mrf.mxu0
        %v1219 = vpop.f32.mrf.mxu0
        %1220 = vdwg.mxu0
        %1221 = vmatprep.subr.bf16.mxu0 0
        %1222 = vmatpush1.bf16.msra.mxu0 %v1155
        %1223 = vmatprep.subr.bf16.mxu0 0
        %1224 = vmatpush1.bf16.msra.mxu0 %v1152
        %1225 = vmatprep.subr.bf16.mxu0 0
        %1226 = vmatpush1.bf16.msra.mxu0 %v1149
        %1227 = vmatprep.subr.bf16.mxu0 0
        %1228 = vmatpush1.bf16.msra.mxu0 %v1146
        %1229 = vmatprep.subr.bf16.mxu0 0
        %1230 = vmatpush1.bf16.msra.mxu0 %v1143
        %1231 = vmatprep.subr.bf16.mxu0 0
        %1232 = vmatpush1.bf16.msra.mxu0 %v1140
        %1233 = vmatprep.subr.bf16.mxu0 0
        %1234 = vmatpush1.bf16.msra.mxu0 %v1137
        %1235 = vmatprep.subr.bf16.mxu0 0
        %1236 = vmatpush1.bf16.msra.mxu0 %v1134
        %1237 = vmatprep.subr.bf16.mxu0 0
        %1238 = vmatpush2.bf16.msra.mxu0 0
        %1239 = vmatprep.subr.bf16.mxu0 0
        %1240 = vmatpush2.bf16.msra.mxu0 0
        %1241 = vmatprep.subr.bf16.mxu0 0
        %1242 = vmatpush2.bf16.msra.mxu0 0
        %1243 = vmatprep.subr.bf16.mxu0 0
        %1244 = vmatpush2.bf16.msra.mxu0 0
        %1245 = vmatprep.subr.bf16.mxu0 0
        %1246 = vmatpush2.bf16.msra.mxu0 0
        %1247 = vmatprep.subr.bf16.mxu0 0
        %1248 = vmatpush2.bf16.msra.mxu0 0
        %1249 = vmatprep.subr.bf16.mxu0 0
        %1250 = vmatpush2.bf16.msra.mxu0 0
        %1251 = vmatprep.subr.bf16.mxu0 0
        %1252 = vmatpush2.bf16.msra.mxu0 0
        %1253 = vmatprep.mubr.bf16.mxu0 0
        %1254 = vmatmul.mubr.bf16.gmra.mxu0 0
        %v1255 = vpop.f32.mrf.mxu0
        %v1256 = vadd.f32 %v1048, %v1255
        %v1257 = vpop.f32.mrf.mxu0
        %v1258 = vpop.f32.mrf.mxu0
        %v1259 = vpop.f32.mrf.mxu0
        %1260 = vdwg.mxu0
        %v1261 = vadd.f32 %v898, %v1215
        %v1262 = vxor.u32 %v1261, 2147483648
        %v1263 = vmul.f32 %v1262, 1.442695
        %v1264 = vpow.pop %v1263
        %v1265 = vadd.f32 %v1264, 1.0
        %v1266 = vrcp.pop %v1265
        %v1267 = vmul.f32 1.0, %v1266
        %v1268 = vadd.f32 %v900, %v1217
        %v1269 = vxor.u32 %v1268, 2147483648
        %v1270 = vmul.f32 %v1269, 1.442695
        %v1271 = vpow.pop %v1270
        %v1272 = vadd.f32 %v1271, 1.0
        %v1273 = vrcp.pop %v1272
        %v1274 = vmul.f32 1.0, %v1273
        %v1275 = vmul.f32 %v1267, %v1256
        %v1276 = vadd.f32 %v971, %v1275
        %v1277 = vtanh.pop %v1276
        %v1278 = vsub.f32 1.0, %v1274
        %v1279 = vmul.f32 %v1278, %v1277
        %v1280 = vmul.f32 %v1274, 0.0
        %v1281 = vadd.f32 %v1279, %v1280
        %vm1282 = vcmp.gt.f32.partialorder %v1034, 0.0
        %v1283 = vsel %vm1282, 1.0, 0.0
        %1285 = vset.pattern.permute.xlu0 0
        %1286 = vperm.xlu0 %1285, %v1283
        %v1287 = vpop.permute.xlu0 %1286
        %v1289 = vmul.f32 %v1287, %v1281
        %v1290 = vsub.f32 1.0, %v1283
        %1292 = vset.pattern.permute.xlu0 0
        %1293 = vperm.xlu0 %1292, %v1290
        %v1294 = vpop.permute.xlu0 %1293
        %v1296 = vmul.f32 %v1294, 0.0
        %v1297 = vadd.f32 %v1289, %v1296
        %v1298 = vadd.f32 %v1289, 0.0
        // Predicated region
        $region81: #{zero_shot_forward.1} parent=67 // pred_check
          %p1299 = pneg %p1035
        $region82: #{zero_shot_forward.1} parent=67 // pred_check_branch
          %1301 = sbr.rel (%p1299) target = $region84
        $region83: #{zero_shot_forward.1} parent=67 // pred_region
          %1302 = vst [vmem:[#allocation2] sm:$0xff] %v1289
        $region84: #{zero_shot_forward.1} parent=67 // pred_fallthru
          _
        %v1303 = vpack.c.bf16 %v1297, %v1297
        %1304 = vmatprep.subr.bf16.mxu0 %v1154
        %1305 = vmatpush1.bf16.msra.mxu0 %v1153
        %1306 = vmatprep.subr.bf16.mxu0 %v1151
        %1307 = vmatpush1.bf16.msra.mxu0 %v1150
        %1308 = vmatprep.subr.bf16.mxu0 %v1148
        %1309 = vmatpush1.bf16.msra.mxu0 %v1147
        %1310 = vmatprep.subr.bf16.mxu0 %v1145
        %1311 = vmatpush1.bf16.msra.mxu0 %v1144
        %1312 = vmatprep.subr.bf16.mxu0 %v1142
        %1313 = vmatpush1.bf16.msra.mxu0 %v1141
        %1314 = vmatprep.subr.bf16.mxu0 %v1139
        %1315 = vmatpush1.bf16.msra.mxu0 %v1138
        %1316 = vmatprep.subr.bf16.mxu0 %v1136
        %1317 = vmatpush1.bf16.msra.mxu0 %v1135
        %1318 = vmatprep.subr.bf16.mxu0 %v1133
        %1319 = vmatpush1.bf16.msra.mxu0 %v1132
        %1320 = vmatprep.subr.bf16.mxu0 0
        %1321 = vmatpush2.bf16.msra.mxu0 0
        %1322 = vmatprep.subr.bf16.mxu0 0
        %1323 = vmatpush2.bf16.msra.mxu0 0
        %1324 = vmatprep.subr.bf16.mxu0 0
        %1325 = vmatpush2.bf16.msra.mxu0 0
        %1326 = vmatprep.subr.bf16.mxu0 0
        %1327 = vmatpush2.bf16.msra.mxu0 0
        %1328 = vmatprep.subr.bf16.mxu0 0
        %1329 = vmatpush2.bf16.msra.mxu0 0
        %1330 = vmatprep.subr.bf16.mxu0 0
        %1331 = vmatpush2.bf16.msra.mxu0 0
        %1332 = vmatprep.subr.bf16.mxu0 0
        %1333 = vmatpush2.bf16.msra.mxu0 0
        %1334 = vmatprep.subr.bf16.mxu0 0
        %1335 = vmatpush2.bf16.msra.mxu0 0
        %1336 = vmatprep.mubr.bf16.mxu0 0
        %1337 = vmatmul.mubr.bf16.gmra.mxu0 %v1303
        %v1338 = vpop.f32.mrf.mxu0
        %v1339 = vadd.f32 %v1040, %v1338
        %v1340 = vpop.f32.mrf.mxu0
        %v1341 = vadd.f32 %v1044, %v1340
        %v1342 = vpop.f32.mrf.mxu0
        %v1343 = vpop.f32.mrf.mxu0
        %1344 = vdwg.mxu0
        %1345 = vmatprep.subr.bf16.mxu0 0
        %1346 = vmatpush1.bf16.msra.mxu0 %v1155
        %1347 = vmatprep.subr.bf16.mxu0 0
        %1348 = vmatpush1.bf16.msra.mxu0 %v1152
        %1349 = vmatprep.subr.bf16.mxu0 0
        %1350 = vmatpush1.bf16.msra.mxu0 %v1149
        %1351 = vmatprep.subr.bf16.mxu0 0
        %1352 = vmatpush1.bf16.msra.mxu0 %v1146
        %1353 = vmatprep.subr.bf16.mxu0 0
        %1354 = vmatpush1.bf16.msra.mxu0 %v1143
        %1355 = vmatprep.subr.bf16.mxu0 0
        %1356 = vmatpush1.bf16.msra.mxu0 %v1140
        %1357 = vmatprep.subr.bf16.mxu0 0
        %1358 = vmatpush1.bf16.msra.mxu0 %v1137
        %1359 = vmatprep.subr.bf16.mxu0 0
        %1360 = vmatpush1.bf16.msra.mxu0 %v1134
        %1361 = vmatprep.subr.bf16.mxu0 0
        %1362 = vmatpush2.bf16.msra.mxu0 0
        %1363 = vmatprep.subr.bf16.mxu0 0
        %1364 = vmatpush2.bf16.msra.mxu0 0
        %1365 = vmatprep.subr.bf16.mxu0 0
        %1366 = vmatpush2.bf16.msra.mxu0 0
        %1367 = vmatprep.subr.bf16.mxu0 0
        %1368 = vmatpush2.bf16.msra.mxu0 0
        %1369 = vmatprep.subr.bf16.mxu0 0
        %1370 = vmatpush2.bf16.msra.mxu0 0
        %1371 = vmatprep.subr.bf16.mxu0 0
        %1372 = vmatpush2.bf16.msra.mxu0 0
        %1373 = vmatprep.subr.bf16.mxu0 0
        %1374 = vmatpush2.bf16.msra.mxu0 0
        %1375 = vmatprep.subr.bf16.mxu0 0
        %1376 = vmatpush2.bf16.msra.mxu0 0
        %1377 = vmatprep.mubr.bf16.mxu0 0
        %1378 = vmatmul.mubr.bf16.gmra.mxu0 %v1303
        %v1379 = vpop.f32.mrf.mxu0
        %v1380 = vadd.f32 %v1048, %v1379
        %v1381 = vpop.f32.mrf.mxu0
        %v1382 = vpop.f32.mrf.mxu0
        %v1383 = vpop.f32.mrf.mxu0
        %1384 = vdwg.mxu0
        %v1385 = vadd.f32 %v902, %v1339
        %v1386 = vxor.u32 %v1385, 2147483648
        %v1387 = vmul.f32 %v1386, 1.442695
        %v1388 = vpow.pop %v1387
        %v1389 = vadd.f32 %v1388, 1.0
        %v1390 = vrcp.pop %v1389
        %v1391 = vmul.f32 1.0, %v1390
        %v1392 = vadd.f32 %v904, %v1341
        %v1393 = vxor.u32 %v1392, 2147483648
        %v1394 = vmul.f32 %v1393, 1.442695
        %v1395 = vpow.pop %v1394
        %v1396 = vadd.f32 %v1395, 1.0
        %v1397 = vrcp.pop %v1396
        %v1398 = vmul.f32 1.0, %v1397
        %v1399 = vmul.f32 %v1391, %v1380
        %v1400 = vadd.f32 %v974, %v1399
        %v1401 = vtanh.pop %v1400
        %v1402 = vsub.f32 1.0, %v1398
        %v1403 = vmul.f32 %v1402, %v1401
        %v1404 = vmul.f32 %v1398, %v1297
        %v1405 = vadd.f32 %v1403, %v1404
        %vm1406 = vcmp.gt.f32.partialorder %v1034, 1.0
        %v1407 = vsel %vm1406, 1.0, 0.0
        %1409 = vset.pattern.permute.xlu0 0
        %1410 = vperm.xlu0 %1409, %v1407
        %v1411 = vpop.permute.xlu0 %1410
        %v1413 = vmul.f32 %v1411, %v1405
        %v1414 = vsub.f32 1.0, %v1407
        %1416 = vset.pattern.permute.xlu0 0
        %1417 = vperm.xlu0 %1416, %v1414
        %v1418 = vpop.permute.xlu0 %1417
        %v1420 = vmul.f32 %v1418, %v1297
        %v1421 = vadd.f32 %v1413, %v1420
        %v1422 = vadd.f32 %v1298, %v1413
        // Predicated region
        $region85: #{zero_shot_forward.1} parent=67 // pred_check
          %p1423 = pneg %p1035
        $region86: #{zero_shot_forward.1} parent=67 // pred_check_branch
          %1425 = sbr.rel (%p1423) target = $region88
        $region87: #{zero_shot_forward.1} parent=67 // pred_region
          %s1426 = scalar_lea.vmem [#allocation2], 8
          %1427 = vst [vmem:[%s1426] sm:$0xff] %v1413
        $region88: #{zero_shot_forward.1} parent=67 // pred_fallthru
          _
        %v1428 = vpack.c.bf16 %v1421, %v1421
        %1429 = vmatprep.subr.bf16.mxu0 %v1154
        %1430 = vmatpush1.bf16.msra.mxu0 %v1153
        %1431 = vmatprep.subr.bf16.mxu0 %v1151
        %1432 = vmatpush1.bf16.msra.mxu0 %v1150
        %1433 = vmatprep.subr.bf16.mxu0 %v1148
        %1434 = vmatpush1.bf16.msra.mxu0 %v1147
        %1435 = vmatprep.subr.bf16.mxu0 %v1145
        %1436 = vmatpush1.bf16.msra.mxu0 %v1144
        %1437 = vmatprep.subr.bf16.mxu0 %v1142
        %1438 = vmatpush1.bf16.msra.mxu0 %v1141
        %1439 = vmatprep.subr.bf16.mxu0 %v1139
        %1440 = vmatpush1.bf16.msra.mxu0 %v1138
        %1441 = vmatprep.subr.bf16.mxu0 %v1136
        %1442 = vmatpush1.bf16.msra.mxu0 %v1135
        %1443 = vmatprep.subr.bf16.mxu0 %v1133
        %1444 = vmatpush1.bf16.msra.mxu0 %v1132
        %1445 = vmatprep.subr.bf16.mxu0 0
        %1446 = vmatpush2.bf16.msra.mxu0 0
        %1447 = vmatprep.subr.bf16.mxu0 0
        %1448 = vmatpush2.bf16.msra.mxu0 0
        %1449 = vmatprep.subr.bf16.mxu0 0
        %1450 = vmatpush2.bf16.msra.mxu0 0
        %1451 = vmatprep.subr.bf16.mxu0 0
        %1452 = vmatpush2.bf16.msra.mxu0 0
        %1453 = vmatprep.subr.bf16.mxu0 0
        %1454 = vmatpush2.bf16.msra.mxu0 0
        %1455 = vmatprep.subr.bf16.mxu0 0
        %1456 = vmatpush2.bf16.msra.mxu0 0
        %1457 = vmatprep.subr.bf16.mxu0 0
        %1458 = vmatpush2.bf16.msra.mxu0 0
        %1459 = vmatprep.subr.bf16.mxu0 0
        %1460 = vmatpush2.bf16.msra.mxu0 0
        %1461 = vmatprep.mubr.bf16.mxu0 0
        %1462 = vmatmul.mubr.bf16.gmra.mxu0 %v1428
        %v1463 = vpop.f32.mrf.mxu0
        %v1464 = vadd.f32 %v1040, %v1463
        %v1465 = vpop.f32.mrf.mxu0
        %v1466 = vadd.f32 %v1044, %v1465
        %v1467 = vpop.f32.mrf.mxu0
        %v1468 = vpop.f32.mrf.mxu0
        %1469 = vdwg.mxu0
        %1470 = vmatprep.subr.bf16.mxu0 0
        %1471 = vmatpush1.bf16.msra.mxu0 %v1155
        %1472 = vmatprep.subr.bf16.mxu0 0
        %1473 = vmatpush1.bf16.msra.mxu0 %v1152
        %1474 = vmatprep.subr.bf16.mxu0 0
        %1475 = vmatpush1.bf16.msra.mxu0 %v1149
        %1476 = vmatprep.subr.bf16.mxu0 0
        %1477 = vmatpush1.bf16.msra.mxu0 %v1146
        %1478 = vmatprep.subr.bf16.mxu0 0
        %1479 = vmatpush1.bf16.msra.mxu0 %v1143
        %1480 = vmatprep.subr.bf16.mxu0 0
        %1481 = vmatpush1.bf16.msra.mxu0 %v1140
        %1482 = vmatprep.subr.bf16.mxu0 0
        %1483 = vmatpush1.bf16.msra.mxu0 %v1137
        %1484 = vmatprep.subr.bf16.mxu0 0
        %1485 = vmatpush1.bf16.msra.mxu0 %v1134
        %1486 = vmatprep.subr.bf16.mxu0 0
        %1487 = vmatpush2.bf16.msra.mxu0 0
        %1488 = vmatprep.subr.bf16.mxu0 0
        %1489 = vmatpush2.bf16.msra.mxu0 0
        %1490 = vmatprep.subr.bf16.mxu0 0
        %1491 = vmatpush2.bf16.msra.mxu0 0
        %1492 = vmatprep.subr.bf16.mxu0 0
        %1493 = vmatpush2.bf16.msra.mxu0 0
        %1494 = vmatprep.subr.bf16.mxu0 0
        %1495 = vmatpush2.bf16.msra.mxu0 0
        %1496 = vmatprep.subr.bf16.mxu0 0
        %1497 = vmatpush2.bf16.msra.mxu0 0
        %1498 = vmatprep.subr.bf16.mxu0 0
        %1499 = vmatpush2.bf16.msra.mxu0 0
        %1500 = vmatprep.subr.bf16.mxu0 0
        %1501 = vmatpush2.bf16.msra.mxu0 0
        %1502 = vmatprep.mubr.bf16.mxu0 0
        %1503 = vmatmul.mubr.bf16.gmra.mxu0 %v1428
        %v1504 = vpop.f32.mrf.mxu0
        %v1505 = vadd.f32 %v1048, %v1504
        %v1506 = vpop.f32.mrf.mxu0
        %v1507 = vpop.f32.mrf.mxu0
        %v1508 = vpop.f32.mrf.mxu0
        %1509 = vdwg.mxu0
        %v1510 = vadd.f32 %v908, %v1464
        %v1511 = vxor.u32 %v1510, 2147483648
        %v1512 = vmul.f32 %v1511, 1.442695
        %v1513 = vpow.pop %v1512
        %v1514 = vadd.f32 %v1513, 1.0
        %v1515 = vrcp.pop %v1514
        %v1516 = vmul.f32 1.0, %v1515
        %v1517 = vadd.f32 %v910, %v1466
        %v1518 = vxor.u32 %v1517, 2147483648
        %v1519 = vmul.f32 %v1518, 1.442695
        %v1520 = vpow.pop %v1519
        %v1521 = vadd.f32 %v1520, 1.0
        %v1522 = vrcp.pop %v1521
        %v1523 = vmul.f32 1.0, %v1522
        %v1524 = vmul.f32 %v1516, %v1505
        %v1525 = vadd.f32 %v979, %v1524
        %v1526 = vtanh.pop %v1525
        %v1527 = vsub.f32 1.0, %v1523
        %v1528 = vmul.f32 %v1527, %v1526
        %v1529 = vmul.f32 %v1523, %v1421
        %v1530 = vadd.f32 %v1528, %v1529
        %vm1531 = vcmp.gt.f32.partialorder %v1034, 2.0
        %v1532 = vsel %vm1531, 1.0, 0.0
        %1534 = vset.pattern.permute.xlu0 0
        %1535 = vperm.xlu0 %1534, %v1532
        %v1536 = vpop.permute.xlu0 %1535
        %v1538 = vmul.f32 %v1536, %v1530
        %v1539 = vsub.f32 1.0, %v1532
        %1541 = vset.pattern.permute.xlu0 0
        %1542 = vperm.xlu0 %1541, %v1539
        %v1543 = vpop.permute.xlu0 %1542
        %v1545 = vmul.f32 %v1543, %v1421
        %v1546 = vadd.f32 %v1538, %v1545
        %v1547 = vadd.f32 %v1422, %v1538
        // Predicated region
        $region89: #{zero_shot_forward.1} parent=67 // pred_check
          %p1548 = pneg %p1035
        $region90: #{zero_shot_forward.1} parent=67 // pred_check_branch
          %1550 = sbr.rel (%p1548) target = $region92
        $region91: #{zero_shot_forward.1} parent=67 // pred_region
          %s1551 = scalar_lea.vmem [#allocation2], 16
          %1552 = vst [vmem:[%s1551] sm:$0xff] %v1538
        $region92: #{zero_shot_forward.1} parent=67 // pred_fallthru
          _
        %v1553 = vpack.c.bf16 %v1546, %v1546
        %1554 = vmatprep.subr.bf16.mxu0 %v1154
        %1555 = vmatpush1.bf16.msra.mxu0 %v1153
        %1556 = vmatprep.subr.bf16.mxu0 %v1151
        %1557 = vmatpush1.bf16.msra.mxu0 %v1150
        %1558 = vmatprep.subr.bf16.mxu0 %v1148
        %1559 = vmatpush1.bf16.msra.mxu0 %v1147
        %1560 = vmatprep.subr.bf16.mxu0 %v1145
        %1561 = vmatpush1.bf16.msra.mxu0 %v1144
        %1562 = vmatprep.subr.bf16.mxu0 %v1142
        %1563 = vmatpush1.bf16.msra.mxu0 %v1141
        %1564 = vmatprep.subr.bf16.mxu0 %v1139
        %1565 = vmatpush1.bf16.msra.mxu0 %v1138
        %1566 = vmatprep.subr.bf16.mxu0 %v1136
        %1567 = vmatpush1.bf16.msra.mxu0 %v1135
        %1568 = vmatprep.subr.bf16.mxu0 %v1133
        %1569 = vmatpush1.bf16.msra.mxu0 %v1132
        %1570 = vmatprep.subr.bf16.mxu0 0
        %1571 = vmatpush2.bf16.msra.mxu0 0
        %1572 = vmatprep.subr.bf16.mxu0 0
        %1573 = vmatpush2.bf16.msra.mxu0 0
        %1574 = vmatprep.subr.bf16.mxu0 0
        %1575 = vmatpush2.bf16.msra.mxu0 0
        %1576 = vmatprep.subr.bf16.mxu0 0
        %1577 = vmatpush2.bf16.msra.mxu0 0
        %1578 = vmatprep.subr.bf16.mxu0 0
        %1579 = vmatpush2.bf16.msra.mxu0 0
        %1580 = vmatprep.subr.bf16.mxu0 0
        %1581 = vmatpush2.bf16.msra.mxu0 0
        %1582 = vmatprep.subr.bf16.mxu0 0
        %1583 = vmatpush2.bf16.msra.mxu0 0
        %1584 = vmatprep.subr.bf16.mxu0 0
        %1585 = vmatpush2.bf16.msra.mxu0 0
        %1586 = vmatprep.mubr.bf16.mxu0 0
        %1587 = vmatmul.mubr.bf16.gmra.mxu0 %v1553
        %v1588 = vpop.f32.mrf.mxu0
        %v1589 = vadd.f32 %v1040, %v1588
        %v1590 = vpop.f32.mrf.mxu0
        %v1591 = vadd.f32 %v1044, %v1590
        %v1592 = vpop.f32.mrf.mxu0
        %v1593 = vpop.f32.mrf.mxu0
        %1594 = vdwg.mxu0
        %1595 = vmatprep.subr.bf16.mxu0 0
        %1596 = vmatpush1.bf16.msra.mxu0 %v1155
        %1597 = vmatprep.subr.bf16.mxu0 0
        %1598 = vmatpush1.bf16.msra.mxu0 %v1152
        %1599 = vmatprep.subr.bf16.mxu0 0
        %1600 = vmatpush1.bf16.msra.mxu0 %v1149
        %1601 = vmatprep.subr.bf16.mxu0 0
        %1602 = vmatpush1.bf16.msra.mxu0 %v1146
        %1603 = vmatprep.subr.bf16.mxu0 0
        %1604 = vmatpush1.bf16.msra.mxu0 %v1143
        %1605 = vmatprep.subr.bf16.mxu0 0
        %1606 = vmatpush1.bf16.msra.mxu0 %v1140
        %1607 = vmatprep.subr.bf16.mxu0 0
        %1608 = vmatpush1.bf16.msra.mxu0 %v1137
        %1609 = vmatprep.subr.bf16.mxu0 0
        %1610 = vmatpush1.bf16.msra.mxu0 %v1134
        %1611 = vmatprep.subr.bf16.mxu0 0
        %1612 = vmatpush2.bf16.msra.mxu0 0
        %1613 = vmatprep.subr.bf16.mxu0 0
        %1614 = vmatpush2.bf16.msra.mxu0 0
        %1615 = vmatprep.subr.bf16.mxu0 0
        %1616 = vmatpush2.bf16.msra.mxu0 0
        %1617 = vmatprep.subr.bf16.mxu0 0
        %1618 = vmatpush2.bf16.msra.mxu0 0
        %1619 = vmatprep.subr.bf16.mxu0 0
        %1620 = vmatpush2.bf16.msra.mxu0 0
        %1621 = vmatprep.subr.bf16.mxu0 0
        %1622 = vmatpush2.bf16.msra.mxu0 0
        %1623 = vmatprep.subr.bf16.mxu0 0
        %1624 = vmatpush2.bf16.msra.mxu0 0
        %1625 = vmatprep.subr.bf16.mxu0 0
        %1626 = vmatpush2.bf16.msra.mxu0 0
        %1627 = vmatprep.mubr.bf16.mxu0 0
        %1628 = vmatmul.mubr.bf16.gmra.mxu0 %v1553
        %v1629 = vpop.f32.mrf.mxu0
        %v1630 = vadd.f32 %v1048, %v1629
        %v1631 = vpop.f32.mrf.mxu0
        %v1632 = vpop.f32.mrf.mxu0
        %v1633 = vpop.f32.mrf.mxu0
        %1634 = vdwg.mxu0
        %v1635 = vadd.f32 %v912, %v1589
        %v1636 = vxor.u32 %v1635, 2147483648
        %v1637 = vmul.f32 %v1636, 1.442695
        %v1638 = vpow.pop %v1637
        %v1639 = vadd.f32 %v1638, 1.0
        %v1640 = vrcp.pop %v1639
        %v1641 = vmul.f32 1.0, %v1640
        %v1642 = vadd.f32 %v914, %v1591
        %v1643 = vxor.u32 %v1642, 2147483648
        %v1644 = vmul.f32 %v1643, 1.442695
        %v1645 = vpow.pop %v1644
        %v1646 = vadd.f32 %v1645, 1.0
        %v1647 = vrcp.pop %v1646
        %v1648 = vmul.f32 1.0, %v1647
        %v1649 = vmul.f32 %v1641, %v1630
        %v1650 = vadd.f32 %v982, %v1649
        %v1651 = vtanh.pop %v1650
        %v1652 = vsub.f32 1.0, %v1648
        %v1653 = vmul.f32 %v1652, %v1651
        %v1654 = vmul.f32 %v1648, %v1546
        %v1655 = vadd.f32 %v1653, %v1654
        %vm1656 = vcmp.gt.f32.partialorder %v1034, 3.0
        %v1657 = vsel %vm1656, 1.0, 0.0
        %1659 = vset.pattern.permute.xlu0 0
        %1660 = vperm.xlu0 %1659, %v1657
        %v1661 = vpop.permute.xlu0 %1660
        %v1663 = vmul.f32 %v1661, %v1655
        %v1664 = vsub.f32 1.0, %v1657
        %1666 = vset.pattern.permute.xlu0 0
        %1667 = vperm.xlu0 %1666, %v1664
        %v1668 = vpop.permute.xlu0 %1667
        %v1670 = vmul.f32 %v1668, %v1546
        %v1671 = vadd.f32 %v1663, %v1670
        %v1672 = vadd.f32 %v1547, %v1663
        // Predicated region
        $region93: #{zero_shot_forward.1} parent=67 // pred_check
          %p1673 = pneg %p1035
        $region94: #{zero_shot_forward.1} parent=67 // pred_check_branch
          %1675 = sbr.rel (%p1673) target = $region96
        $region95: #{zero_shot_forward.1} parent=67 // pred_region
          %s1676 = scalar_lea.vmem [#allocation2], 24
          %1677 = vst [vmem:[%s1676] sm:$0xff] %v1663
        $region96: #{zero_shot_forward.1} parent=67 // pred_fallthru
          _
        %v1678 = vpack.c.bf16 %v1671, %v1671
        %1679 = vmatprep.subr.bf16.mxu0 %v1154
        %1680 = vmatpush1.bf16.msra.mxu0 %v1153
        %1681 = vmatprep.subr.bf16.mxu0 %v1151
        %1682 = vmatpush1.bf16.msra.mxu0 %v1150
        %1683 = vmatprep.subr.bf16.mxu0 %v1148
        %1684 = vmatpush1.bf16.msra.mxu0 %v1147
        %1685 = vmatprep.subr.bf16.mxu0 %v1145
        %1686 = vmatpush1.bf16.msra.mxu0 %v1144
        %1687 = vmatprep.subr.bf16.mxu0 %v1142
        %1688 = vmatpush1.bf16.msra.mxu0 %v1141
        %1689 = vmatprep.subr.bf16.mxu0 %v1139
        %1690 = vmatpush1.bf16.msra.mxu0 %v1138
        %1691 = vmatprep.subr.bf16.mxu0 %v1136
        %1692 = vmatpush1.bf16.msra.mxu0 %v1135
        %1693 = vmatprep.subr.bf16.mxu0 %v1133
        %1694 = vmatpush1.bf16.msra.mxu0 %v1132
        %1695 = vmatprep.subr.bf16.mxu0 0
        %1696 = vmatpush2.bf16.msra.mxu0 0
        %1697 = vmatprep.subr.bf16.mxu0 0
        %1698 = vmatpush2.bf16.msra.mxu0 0
        %1699 = vmatprep.subr.bf16.mxu0 0
        %1700 = vmatpush2.bf16.msra.mxu0 0
        %1701 = vmatprep.subr.bf16.mxu0 0
        %1702 = vmatpush2.bf16.msra.mxu0 0
        %1703 = vmatprep.subr.bf16.mxu0 0
        %1704 = vmatpush2.bf16.msra.mxu0 0
        %1705 = vmatprep.subr.bf16.mxu0 0
        %1706 = vmatpush2.bf16.msra.mxu0 0
        %1707 = vmatprep.subr.bf16.mxu0 0
        %1708 = vmatpush2.bf16.msra.mxu0 0
        %1709 = vmatprep.subr.bf16.mxu0 0
        %1710 = vmatpush2.bf16.msra.mxu0 0
        %1711 = vmatprep.mubr.bf16.mxu0 0
        %1712 = vmatmul.mubr.bf16.gmra.mxu0 %v1678
        %v1713 = vpop.f32.mrf.mxu0
        %v1714 = vadd.f32 %v1040, %v1713
        %v1715 = vpop.f32.mrf.mxu0
        %v1716 = vadd.f32 %v1044, %v1715
        %v1717 = vpop.f32.mrf.mxu0
        %v1718 = vpop.f32.mrf.mxu0
        %1719 = vdwg.mxu0
        %1720 = vmatprep.subr.bf16.mxu0 0
        %1721 = vmatpush1.bf16.msra.mxu0 %v1155
        %1722 = vmatprep.subr.bf16.mxu0 0
        %1723 = vmatpush1.bf16.msra.mxu0 %v1152
        %1724 = vmatprep.subr.bf16.mxu0 0
        %1725 = vmatpush1.bf16.msra.mxu0 %v1149
        %1726 = vmatprep.subr.bf16.mxu0 0
        %1727 = vmatpush1.bf16.msra.mxu0 %v1146
        %1728 = vmatprep.subr.bf16.mxu0 0
        %1729 = vmatpush1.bf16.msra.mxu0 %v1143
        %1730 = vmatprep.subr.bf16.mxu0 0
        %1731 = vmatpush1.bf16.msra.mxu0 %v1140
        %1732 = vmatprep.subr.bf16.mxu0 0
        %1733 = vmatpush1.bf16.msra.mxu0 %v1137
        %1734 = vmatprep.subr.bf16.mxu0 0
        %1735 = vmatpush1.bf16.msra.mxu0 %v1134
        %1736 = vmatprep.subr.bf16.mxu0 0
        %1737 = vmatpush2.bf16.msra.mxu0 0
        %1738 = vmatprep.subr.bf16.mxu0 0
        %1739 = vmatpush2.bf16.msra.mxu0 0
        %1740 = vmatprep.subr.bf16.mxu0 0
        %1741 = vmatpush2.bf16.msra.mxu0 0
        %1742 = vmatprep.subr.bf16.mxu0 0
        %1743 = vmatpush2.bf16.msra.mxu0 0
        %1744 = vmatprep.subr.bf16.mxu0 0
        %1745 = vmatpush2.bf16.msra.mxu0 0
        %1746 = vmatprep.subr.bf16.mxu0 0
        %1747 = vmatpush2.bf16.msra.mxu0 0
        %1748 = vmatprep.subr.bf16.mxu0 0
        %1749 = vmatpush2.bf16.msra.mxu0 0
        %1750 = vmatprep.subr.bf16.mxu0 0
        %1751 = vmatpush2.bf16.msra.mxu0 0
        %1752 = vmatprep.mubr.bf16.mxu0 0
        %1753 = vmatmul.mubr.bf16.gmra.mxu0 %v1678
        %v1754 = vpop.f32.mrf.mxu0
        %v1755 = vadd.f32 %v1048, %v1754
        %v1756 = vpop.f32.mrf.mxu0
        %v1757 = vpop.f32.mrf.mxu0
        %v1758 = vpop.f32.mrf.mxu0
        %1759 = vdwg.mxu0
        %v1760 = vadd.f32 %v918, %v1714
        %v1761 = vxor.u32 %v1760, 2147483648
        %v1762 = vmul.f32 %v1761, 1.442695
        %v1763 = vpow.pop %v1762
        %v1764 = vadd.f32 %v1763, 1.0
        %v1765 = vrcp.pop %v1764
        %v1766 = vmul.f32 1.0, %v1765
        %v1767 = vadd.f32 %v920, %v1716
        %v1768 = vxor.u32 %v1767, 2147483648
        %v1769 = vmul.f32 %v1768, 1.442695
        %v1770 = vpow.pop %v1769
        %v1771 = vadd.f32 %v1770, 1.0
        %v1772 = vrcp.pop %v1771
        %v1773 = vmul.f32 1.0, %v1772
        %v1774 = vmul.f32 %v1766, %v1755
        %v1775 = vadd.f32 %v987, %v1774
        %v1776 = vtanh.pop %v1775
        %v1777 = vsub.f32 1.0, %v1773
        %v1778 = vmul.f32 %v1777, %v1776
        %v1779 = vmul.f32 %v1773, %v1671
        %v1780 = vadd.f32 %v1778, %v1779
        %vm1781 = vcmp.gt.f32.partialorder %v1034, 4.0
        %v1782 = vsel %vm1781, 1.0, 0.0
        %1784 = vset.pattern.permute.xlu0 0
        %1785 = vperm.xlu0 %1784, %v1782
        %v1786 = vpop.permute.xlu0 %1785
        %v1788 = vmul.f32 %v1786, %v1780
        %v1789 = vsub.f32 1.0, %v1782
        %1791 = vset.pattern.permute.xlu0 0
        %1792 = vperm.xlu0 %1791, %v1789
        %v1793 = vpop.permute.xlu0 %1792
        %v1795 = vmul.f32 %v1793, %v1671
        %v1796 = vadd.f32 %v1788, %v1795
        %v1797 = vadd.f32 %v1672, %v1788
        // Predicated region
        $region97: #{zero_shot_forward.1} parent=67 // pred_check
          %p1798 = pneg %p1035
        $region98: #{zero_shot_forward.1} parent=67 // pred_check_branch
          %1800 = sbr.rel (%p1798) target = $region100
        $region99: #{zero_shot_forward.1} parent=67 // pred_region
          %s1801 = scalar_lea.vmem [#allocation2], 32
          %1802 = vst [vmem:[%s1801] sm:$0xff] %v1788
        $region100: #{zero_shot_forward.1} parent=67 // pred_fallthru
          _
        %v1803 = vpack.c.bf16 %v1796, %v1796
        %1804 = vmatprep.subr.bf16.mxu0 %v1154
        %1805 = vmatpush1.bf16.msra.mxu0 %v1153
        %1806 = vmatprep.subr.bf16.mxu0 %v1151
        %1807 = vmatpush1.bf16.msra.mxu0 %v1150
        %1808 = vmatprep.subr.bf16.mxu0 %v1148
        %1809 = vmatpush1.bf16.msra.mxu0 %v1147
        %1810 = vmatprep.subr.bf16.mxu0 %v1145
        %1811 = vmatpush1.bf16.msra.mxu0 %v1144
        %1812 = vmatprep.subr.bf16.mxu0 %v1142
        %1813 = vmatpush1.bf16.msra.mxu0 %v1141
        %1814 = vmatprep.subr.bf16.mxu0 %v1139
        %1815 = vmatpush1.bf16.msra.mxu0 %v1138
        %1816 = vmatprep.subr.bf16.mxu0 %v1136
        %1817 = vmatpush1.bf16.msra.mxu0 %v1135
        %1818 = vmatprep.subr.bf16.mxu0 %v1133
        %1819 = vmatpush1.bf16.msra.mxu0 %v1132
        %1820 = vmatprep.subr.bf16.mxu0 0
        %1821 = vmatpush2.bf16.msra.mxu0 0
        %1822 = vmatprep.subr.bf16.mxu0 0
        %1823 = vmatpush2.bf16.msra.mxu0 0
        %1824 = vmatprep.subr.bf16.mxu0 0
        %1825 = vmatpush2.bf16.msra.mxu0 0
        %1826 = vmatprep.subr.bf16.mxu0 0
        %1827 = vmatpush2.bf16.msra.mxu0 0
        %1828 = vmatprep.subr.bf16.mxu0 0
        %1829 = vmatpush2.bf16.msra.mxu0 0
        %1830 = vmatprep.subr.bf16.mxu0 0
        %1831 = vmatpush2.bf16.msra.mxu0 0
        %1832 = vmatprep.subr.bf16.mxu0 0
        %1833 = vmatpush2.bf16.msra.mxu0 0
        %1834 = vmatprep.subr.bf16.mxu0 0
        %1835 = vmatpush2.bf16.msra.mxu0 0
        %1836 = vmatprep.mubr.bf16.mxu0 0
        %1837 = vmatmul.mubr.bf16.gmra.mxu0 %v1803
        %v1838 = vpop.f32.mrf.mxu0
        %v1839 = vadd.f32 %v1040, %v1838
        %v1840 = vpop.f32.mrf.mxu0
        %v1841 = vadd.f32 %v1044, %v1840
        %v1842 = vpop.f32.mrf.mxu0
        %v1843 = vpop.f32.mrf.mxu0
        %1844 = vdwg.mxu0
        %1845 = vmatprep.subr.bf16.mxu0 0
        %1846 = vmatpush1.bf16.msra.mxu0 %v1155
        %1847 = vmatprep.subr.bf16.mxu0 0
        %1848 = vmatpush1.bf16.msra.mxu0 %v1152
        %1849 = vmatprep.subr.bf16.mxu0 0
        %1850 = vmatpush1.bf16.msra.mxu0 %v1149
        %1851 = vmatprep.subr.bf16.mxu0 0
        %1852 = vmatpush1.bf16.msra.mxu0 %v1146
        %1853 = vmatprep.subr.bf16.mxu0 0
        %1854 = vmatpush1.bf16.msra.mxu0 %v1143
        %1855 = vmatprep.subr.bf16.mxu0 0
        %1856 = vmatpush1.bf16.msra.mxu0 %v1140
        %1857 = vmatprep.subr.bf16.mxu0 0
        %1858 = vmatpush1.bf16.msra.mxu0 %v1137
        %1859 = vmatprep.subr.bf16.mxu0 0
        %1860 = vmatpush1.bf16.msra.mxu0 %v1134
        %1861 = vmatprep.subr.bf16.mxu0 0
        %1862 = vmatpush2.bf16.msra.mxu0 0
        %1863 = vmatprep.subr.bf16.mxu0 0
        %1864 = vmatpush2.bf16.msra.mxu0 0
        %1865 = vmatprep.subr.bf16.mxu0 0
        %1866 = vmatpush2.bf16.msra.mxu0 0
        %1867 = vmatprep.subr.bf16.mxu0 0
        %1868 = vmatpush2.bf16.msra.mxu0 0
        %1869 = vmatprep.subr.bf16.mxu0 0
        %1870 = vmatpush2.bf16.msra.mxu0 0
        %1871 = vmatprep.subr.bf16.mxu0 0
        %1872 = vmatpush2.bf16.msra.mxu0 0
        %1873 = vmatprep.subr.bf16.mxu0 0
        %1874 = vmatpush2.bf16.msra.mxu0 0
        %1875 = vmatprep.subr.bf16.mxu0 0
        %1876 = vmatpush2.bf16.msra.mxu0 0
        %1877 = vmatprep.mubr.bf16.mxu0 0
        %1878 = vmatmul.mubr.bf16.gmra.mxu0 %v1803
        %v1879 = vpop.f32.mrf.mxu0
        %v1880 = vadd.f32 %v1048, %v1879
        %v1881 = vpop.f32.mrf.mxu0
        %v1882 = vpop.f32.mrf.mxu0
        %v1883 = vpop.f32.mrf.mxu0
        %1884 = vdwg.mxu0
        %v1885 = vadd.f32 %v922, %v1839
        %v1886 = vxor.u32 %v1885, 2147483648
        %v1887 = vmul.f32 %v1886, 1.442695
        %v1888 = vpow.pop %v1887
        %v1889 = vadd.f32 %v1888, 1.0
        %v1890 = vrcp.pop %v1889
        %v1891 = vmul.f32 1.0, %v1890
        %v1892 = vadd.f32 %v924, %v1841
        %v1893 = vxor.u32 %v1892, 2147483648
        %v1894 = vmul.f32 %v1893, 1.442695
        %v1895 = vpow.pop %v1894
        %v1896 = vadd.f32 %v1895, 1.0
        %v1897 = vrcp.pop %v1896
        %v1898 = vmul.f32 1.0, %v1897
        %v1899 = vmul.f32 %v1891, %v1880
        %v1900 = vadd.f32 %v990, %v1899
        %v1901 = vtanh.pop %v1900
        %v1902 = vsub.f32 1.0, %v1898
        %v1903 = vmul.f32 %v1902, %v1901
        %v1904 = vmul.f32 %v1898, %v1796
        %v1905 = vadd.f32 %v1903, %v1904
        %vm1906 = vcmp.gt.f32.partialorder %v1034, 5.0
        %v1907 = vsel %vm1906, 1.0, 0.0
        %1909 = vset.pattern.permute.xlu0 0
        %1910 = vperm.xlu0 %1909, %v1907
        %v1911 = vpop.permute.xlu0 %1910
        %v1913 = vmul.f32 %v1911, %v1905
        %v1914 = vsub.f32 1.0, %v1907
        %1916 = vset.pattern.permute.xlu0 0
        %1917 = vperm.xlu0 %1916, %v1914
        %v1918 = vpop.permute.xlu0 %1917
        %v1920 = vmul.f32 %v1918, %v1796
        %v1921 = vadd.f32 %v1913, %v1920
        %v1922 = vadd.f32 %v1797, %v1913
        // Predicated region
        $region101: #{zero_shot_forward.1} parent=67 // pred_check
          %p1923 = pneg %p1035
        $region102: #{zero_shot_forward.1} parent=67 // pred_check_branch
          %1925 = sbr.rel (%p1923) target = $region104
        $region103: #{zero_shot_forward.1} parent=67 // pred_region
          %s1926 = scalar_lea.vmem [#allocation2], 40
          %1927 = vst [vmem:[%s1926] sm:$0xff] %v1913
        $region104: #{zero_shot_forward.1} parent=67 // pred_fallthru
          _
        %v1928 = vpack.c.bf16 %v1921, %v1921
        %1929 = vmatprep.subr.bf16.mxu0 %v1154
        %1930 = vmatpush1.bf16.msra.mxu0 %v1153
        %1931 = vmatprep.subr.bf16.mxu0 %v1151
        %1932 = vmatpush1.bf16.msra.mxu0 %v1150
        %1933 = vmatprep.subr.bf16.mxu0 %v1148
        %1934 = vmatpush1.bf16.msra.mxu0 %v1147
        %1935 = vmatprep.subr.bf16.mxu0 %v1145
        %1936 = vmatpush1.bf16.msra.mxu0 %v1144
        %1937 = vmatprep.subr.bf16.mxu0 %v1142
        %1938 = vmatpush1.bf16.msra.mxu0 %v1141
        %1939 = vmatprep.subr.bf16.mxu0 %v1139
        %1940 = vmatpush1.bf16.msra.mxu0 %v1138
        %1941 = vmatprep.subr.bf16.mxu0 %v1136
        %1942 = vmatpush1.bf16.msra.mxu0 %v1135
        %1943 = vmatprep.subr.bf16.mxu0 %v1133
        %1944 = vmatpush1.bf16.msra.mxu0 %v1132
        %1945 = vmatprep.subr.bf16.mxu0 0
        %1946 = vmatpush2.bf16.msra.mxu0 0
        %1947 = vmatprep.subr.bf16.mxu0 0
        %1948 = vmatpush2.bf16.msra.mxu0 0
        %1949 = vmatprep.subr.bf16.mxu0 0
        %1950 = vmatpush2.bf16.msra.mxu0 0
        %1951 = vmatprep.subr.bf16.mxu0 0
        %1952 = vmatpush2.bf16.msra.mxu0 0
        %1953 = vmatprep.subr.bf16.mxu0 0
        %1954 = vmatpush2.bf16.msra.mxu0 0
        %1955 = vmatprep.subr.bf16.mxu0 0
        %1956 = vmatpush2.bf16.msra.mxu0 0
        %1957 = vmatprep.subr.bf16.mxu0 0
        %1958 = vmatpush2.bf16.msra.mxu0 0
        %1959 = vmatprep.subr.bf16.mxu0 0
        %1960 = vmatpush2.bf16.msra.mxu0 0
        %1961 = vmatprep.mubr.bf16.mxu0 0
        %1962 = vmatmul.mubr.bf16.gmra.mxu0 %v1928
        %v1963 = vpop.f32.mrf.mxu0
        %v1964 = vadd.f32 %v1040, %v1963
        %v1965 = vpop.f32.mrf.mxu0
        %v1966 = vadd.f32 %v1044, %v1965
        %v1967 = vpop.f32.mrf.mxu0
        %v1968 = vpop.f32.mrf.mxu0
        %1969 = vdwg.mxu0
        %1970 = vmatprep.subr.bf16.mxu0 0
        %1971 = vmatpush1.bf16.msra.mxu0 %v1155
        %1972 = vmatprep.subr.bf16.mxu0 0
        %1973 = vmatpush1.bf16.msra.mxu0 %v1152
        %1974 = vmatprep.subr.bf16.mxu0 0
        %1975 = vmatpush1.bf16.msra.mxu0 %v1149
        %1976 = vmatprep.subr.bf16.mxu0 0
        %1977 = vmatpush1.bf16.msra.mxu0 %v1146
        %1978 = vmatprep.subr.bf16.mxu0 0
        %1979 = vmatpush1.bf16.msra.mxu0 %v1143
        %1980 = vmatprep.subr.bf16.mxu0 0
        %1981 = vmatpush1.bf16.msra.mxu0 %v1140
        %1982 = vmatprep.subr.bf16.mxu0 0
        %1983 = vmatpush1.bf16.msra.mxu0 %v1137
        %1984 = vmatprep.subr.bf16.mxu0 0
        %1985 = vmatpush1.bf16.msra.mxu0 %v1134
        %1986 = vmatprep.subr.bf16.mxu0 0
        %1987 = vmatpush2.bf16.msra.mxu0 0
        %1988 = vmatprep.subr.bf16.mxu0 0
        %1989 = vmatpush2.bf16.msra.mxu0 0
        %1990 = vmatprep.subr.bf16.mxu0 0
        %1991 = vmatpush2.bf16.msra.mxu0 0
        %1992 = vmatprep.subr.bf16.mxu0 0
        %1993 = vmatpush2.bf16.msra.mxu0 0
        %1994 = vmatprep.subr.bf16.mxu0 0
        %1995 = vmatpush2.bf16.msra.mxu0 0
        %1996 = vmatprep.subr.bf16.mxu0 0
        %1997 = vmatpush2.bf16.msra.mxu0 0
        %1998 = vmatprep.subr.bf16.mxu0 0
        %1999 = vmatpush2.bf16.msra.mxu0 0
        %2000 = vmatprep.subr.bf16.mxu0 0
        %2001 = vmatpush2.bf16.msra.mxu0 0
        %2002 = vmatprep.mubr.bf16.mxu0 0
        %2003 = vmatmul.mubr.bf16.gmra.mxu0 %v1928
        %v2004 = vpop.f32.mrf.mxu0
        %v2005 = vadd.f32 %v1048, %v2004
        %v2006 = vpop.f32.mrf.mxu0
        %v2007 = vpop.f32.mrf.mxu0
        %v2008 = vpop.f32.mrf.mxu0
        %2009 = vdwg.mxu0
        %v2010 = vadd.f32 %v928, %v1964
        %v2011 = vxor.u32 %v2010, 2147483648
        %v2012 = vmul.f32 %v2011, 1.442695
        %v2013 = vpow.pop %v2012
        %v2014 = vadd.f32 %v2013, 1.0
        %v2015 = vrcp.pop %v2014
        %v2016 = vmul.f32 1.0, %v2015
        %v2017 = vadd.f32 %v930, %v1966
        %v2018 = vxor.u32 %v2017, 2147483648
        %v2019 = vmul.f32 %v2018, 1.442695
        %v2020 = vpow.pop %v2019
        %v2021 = vadd.f32 %v2020, 1.0
        %v2022 = vrcp.pop %v2021
        %v2023 = vmul.f32 1.0, %v2022
        %v2024 = vmul.f32 %v2016, %v2005
        %v2025 = vadd.f32 %v995, %v2024
        %v2026 = vtanh.pop %v2025
        %v2027 = vsub.f32 1.0, %v2023
        %v2028 = vmul.f32 %v2027, %v2026
        %v2029 = vmul.f32 %v2023, %v1921
        %v2030 = vadd.f32 %v2028, %v2029
        %vm2031 = vcmp.gt.f32.partialorder %v1034, 6.0
        %v2032 = vsel %vm2031, 1.0, 0.0
        %2034 = vset.pattern.permute.xlu0 0
        %2035 = vperm.xlu0 %2034, %v2032
        %v2036 = vpop.permute.xlu0 %2035
        %v2038 = vmul.f32 %v2036, %v2030
        %v2039 = vsub.f32 1.0, %v2032
        %2041 = vset.pattern.permute.xlu0 0
        %2042 = vperm.xlu0 %2041, %v2039
        %v2043 = vpop.permute.xlu0 %2042
        %v2045 = vmul.f32 %v2043, %v1921
        %v2046 = vadd.f32 %v2038, %v2045
        %v2047 = vadd.f32 %v1922, %v2038
        // Predicated region
        $region105: #{zero_shot_forward.1} parent=67 // pred_check
          %p2048 = pneg %p1035
        $region106: #{zero_shot_forward.1} parent=67 // pred_check_branch
          %2050 = sbr.rel (%p2048) target = $region108
        $region107: #{zero_shot_forward.1} parent=67 // pred_region
          %s2051 = scalar_lea.vmem [#allocation2], 48
          %2052 = vst [vmem:[%s2051] sm:$0xff] %v2038
        $region108: #{zero_shot_forward.1} parent=67 // pred_fallthru
          _
        %v2053 = vpack.c.bf16 %v2046, %v2046
        %2054 = vmatprep.subr.bf16.mxu0 %v1154
        %2055 = vmatpush1.bf16.msra.mxu0 %v1153
        %2056 = vmatprep.subr.bf16.mxu0 %v1151
        %2057 = vmatpush1.bf16.msra.mxu0 %v1150
        %2058 = vmatprep.subr.bf16.mxu0 %v1148
        %2059 = vmatpush1.bf16.msra.mxu0 %v1147
        %2060 = vmatprep.subr.bf16.mxu0 %v1145
        %2061 = vmatpush1.bf16.msra.mxu0 %v1144
        %2062 = vmatprep.subr.bf16.mxu0 %v1142
        %2063 = vmatpush1.bf16.msra.mxu0 %v1141
        %2064 = vmatprep.subr.bf16.mxu0 %v1139
        %2065 = vmatpush1.bf16.msra.mxu0 %v1138
        %2066 = vmatprep.subr.bf16.mxu0 %v1136
        %2067 = vmatpush1.bf16.msra.mxu0 %v1135
        %2068 = vmatprep.subr.bf16.mxu0 %v1133
        %2069 = vmatpush1.bf16.msra.mxu0 %v1132
        %2070 = vmatprep.subr.bf16.mxu0 0
        %2071 = vmatpush2.bf16.msra.mxu0 0
        %2072 = vmatprep.subr.bf16.mxu0 0
        %2073 = vmatpush2.bf16.msra.mxu0 0
        %2074 = vmatprep.subr.bf16.mxu0 0
        %2075 = vmatpush2.bf16.msra.mxu0 0
        %2076 = vmatprep.subr.bf16.mxu0 0
        %2077 = vmatpush2.bf16.msra.mxu0 0
        %2078 = vmatprep.subr.bf16.mxu0 0
        %2079 = vmatpush2.bf16.msra.mxu0 0
        %2080 = vmatprep.subr.bf16.mxu0 0
        %2081 = vmatpush2.bf16.msra.mxu0 0
        %2082 = vmatprep.subr.bf16.mxu0 0
        %2083 = vmatpush2.bf16.msra.mxu0 0
        %2084 = vmatprep.subr.bf16.mxu0 0
        %2085 = vmatpush2.bf16.msra.mxu0 0
        %2086 = vmatprep.mubr.bf16.mxu0 0
        %2087 = vmatmul.mubr.bf16.gmra.mxu0 %v2053
        %v2088 = vpop.f32.mrf.mxu0
        %v2089 = vadd.f32 %v1040, %v2088
        %v2090 = vpop.f32.mrf.mxu0
        %v2091 = vadd.f32 %v1044, %v2090
        %v2092 = vpop.f32.mrf.mxu0
        %v2093 = vpop.f32.mrf.mxu0
        %2094 = vdwg.mxu0
        %2095 = vmatprep.subr.bf16.mxu0 0
        %2096 = vmatpush1.bf16.msra.mxu0 %v1155
        %2097 = vmatprep.subr.bf16.mxu0 0
        %2098 = vmatpush1.bf16.msra.mxu0 %v1152
        %2099 = vmatprep.subr.bf16.mxu0 0
        %2100 = vmatpush1.bf16.msra.mxu0 %v1149
        %2101 = vmatprep.subr.bf16.mxu0 0
        %2102 = vmatpush1.bf16.msra.mxu0 %v1146
        %2103 = vmatprep.subr.bf16.mxu0 0
        %2104 = vmatpush1.bf16.msra.mxu0 %v1143
        %2105 = vmatprep.subr.bf16.mxu0 0
        %2106 = vmatpush1.bf16.msra.mxu0 %v1140
        %2107 = vmatprep.subr.bf16.mxu0 0
        %2108 = vmatpush1.bf16.msra.mxu0 %v1137
        %2109 = vmatprep.subr.bf16.mxu0 0
        %2110 = vmatpush1.bf16.msra.mxu0 %v1134
        %2111 = vmatprep.subr.bf16.mxu0 0
        %2112 = vmatpush2.bf16.msra.mxu0 0
        %2113 = vmatprep.subr.bf16.mxu0 0
        %2114 = vmatpush2.bf16.msra.mxu0 0
        %2115 = vmatprep.subr.bf16.mxu0 0
        %2116 = vmatpush2.bf16.msra.mxu0 0
        %2117 = vmatprep.subr.bf16.mxu0 0
        %2118 = vmatpush2.bf16.msra.mxu0 0
        %2119 = vmatprep.subr.bf16.mxu0 0
        %2120 = vmatpush2.bf16.msra.mxu0 0
        %2121 = vmatprep.subr.bf16.mxu0 0
        %2122 = vmatpush2.bf16.msra.mxu0 0
        %2123 = vmatprep.subr.bf16.mxu0 0
        %2124 = vmatpush2.bf16.msra.mxu0 0
        %2125 = vmatprep.subr.bf16.mxu0 0
        %2126 = vmatpush2.bf16.msra.mxu0 0
        %2127 = vmatprep.mubr.bf16.mxu0 0
        %2128 = vmatmul.mubr.bf16.gmra.mxu0 %v2053
        %v2129 = vpop.f32.mrf.mxu0
        %v2130 = vadd.f32 %v1048, %v2129
        %v2131 = vpop.f32.mrf.mxu0
        %v2132 = vpop.f32.mrf.mxu0
        %v2133 = vpop.f32.mrf.mxu0
        %2134 = vdwg.mxu0
        %v2135 = vadd.f32 %v932, %v2089
        %v2136 = vxor.u32 %v2135, 2147483648
        %v2137 = vmul.f32 %v2136, 1.442695
        %v2138 = vpow.pop %v2137
        %v2139 = vadd.f32 %v2138, 1.0
        %v2140 = vrcp.pop %v2139
        %v2141 = vmul.f32 1.0, %v2140
        %v2142 = vadd.f32 %v934, %v2091
        %v2143 = vxor.u32 %v2142, 2147483648
        %v2144 = vmul.f32 %v2143, 1.442695
        %v2145 = vpow.pop %v2144
        %v2146 = vadd.f32 %v2145, 1.0
        %v2147 = vrcp.pop %v2146
        %v2148 = vmul.f32 1.0, %v2147
        %v2149 = vmul.f32 %v2141, %v2130
        %v2150 = vadd.f32 %v998, %v2149
        %v2151 = vtanh.pop %v2150
        %v2152 = vsub.f32 1.0, %v2148
        %v2153 = vmul.f32 %v2152, %v2151
        %v2154 = vmul.f32 %v2148, %v2046
        %v2155 = vadd.f32 %v2153, %v2154
        %vm2156 = vcmp.gt.f32.partialorder %v1034, 7.0
        %v2157 = vsel %vm2156, 1.0, 0.0
        %2159 = vset.pattern.permute.xlu0 0
        %2160 = vperm.xlu0 %2159, %v2157
        %v2161 = vpop.permute.xlu0 %2160
        %v2163 = vmul.f32 %v2161, %v2155
        %v2164 = vadd.f32 %v2047, %v2163
        // Predicated region
        $region109: #{zero_shot_forward.1} parent=67 // pred_check
          %p2165 = pneg %p1035
        $region110: #{zero_shot_forward.1} parent=67 // pred_check_branch
          %2167 = sbr.rel (%p2165) target = $region112
        $region111: #{zero_shot_forward.1} parent=67 // pred_region
          %s2168 = scalar_lea.vmem [#allocation2], 56
          %2169 = vst [vmem:[%s2168] sm:$0xff] %v2163
        $region112: #{zero_shot_forward.1} parent=67 // pred_fallthru
          _
        %p2170 = scmp.eq.s32.totalorder %s25, 1
        // Predicated region
        $region113: #{zero_shot_forward.1} parent=67 // pred_check
          %p2171 = pneg %p2170
        $region114: #{zero_shot_forward.1} parent=67 // pred_check_branch
          %2173 = sbr.rel (%p2171) target = $region116
        $region115: #{zero_shot_forward.1} parent=67 // pred_region
          %v2174 = vmul.f32 %v2164, 0.125
          %v2175 = vlaneseq
          %v2176 = vand.u32 %v2175, 127
          %v2177 = vld [vmem:[%s7] sm:$0xff]
          %v2178 = vld [vmem:[%s7 + $0x8] sm:$0xff]
          %s2179 = scalar_lea.vmem %s7, 16
          %v2180 = vld [vmem:[%s2179] sm:$0xff]
          %v2181 = vld [vmem:[%s2179 + $0x8] sm:$0xff]
          %s2182 = scalar_lea.vmem %s7, 32
          %v2183 = vld [vmem:[%s2182] sm:$0xff]
          %v2184 = vld [vmem:[%s2182 + $0x8] sm:$0xff]
          %s2185 = scalar_lea.vmem %s7, 48
          %v2186 = vld [vmem:[%s2185] sm:$0xff]
          %v2187 = vld [vmem:[%s2185 + $0x8] sm:$0xff]
          %s2188 = scalar_lea.vmem %s7, 64
          %v2189 = vld [vmem:[%s2188] sm:$0xff]
          %v2190 = vld [vmem:[%s2188 + $0x8] sm:$0xff]
          %s2191 = scalar_lea.vmem %s7, 80
          %v2192 = vld [vmem:[%s2191] sm:$0xff]
          %v2193 = vld [vmem:[%s2191 + $0x8] sm:$0xff]
          %s2194 = scalar_lea.vmem %s7, 96
          %v2195 = vld [vmem:[%s2194] sm:$0xff]
          %v2196 = vld [vmem:[%s2194 + $0x8] sm:$0xff]
          %s2197 = scalar_lea.vmem %s7, 112
          %v2198 = vld [vmem:[%s2197] sm:$0xff]
          %v2199 = vld [vmem:[%s2197 + $0x8] sm:$0xff]
          %s2200 = scalar_lea.vmem %s7, 128
          %v2201 = vld [vmem:[%s2200] sm:$0xff]
          %v2202 = vld [vmem:[%s2200 + $0x8] sm:$0xff]
          %s2203 = sld [smem:[#allocation3]]
          %v2204 = vstv %s2203
          %v2205 = vmul.f32 %v2177, %v2204
          %v2206 = vmul.f32 %v2178, %v2204
          %s2207 = sld [smem:[#allocation3 + $0x80]]
          %v2208 = vstv %s2207
          %v2209 = vmul.f32 %v2208, %v2180
          %v2210 = vmul.f32 %v2208, %v2181
          %v2211 = vadd.f32 %v2205, %v2209
          %v2212 = vadd.f32 %v2206, %v2210
          %s2213 = sld [smem:[#allocation3 + $0x100]]
          %v2214 = vstv %s2213
          %v2215 = vmul.f32 %v2214, %v2183
          %v2216 = vmul.f32 %v2214, %v2184
          %v2217 = vadd.f32 %v2211, %v2215
          %v2218 = vadd.f32 %v2212, %v2216
          %s2219 = sld [smem:[#allocation3 + $0x180]]
          %v2220 = vstv %s2219
          %v2221 = vmul.f32 %v2220, %v2186
          %v2222 = vmul.f32 %v2220, %v2187
          %v2223 = vadd.f32 %v2217, %v2221
          %v2224 = vadd.f32 %v2218, %v2222
          %s2225 = sld [smem:[#allocation3 + $0x200]]
          %v2226 = vstv %s2225
          %v2227 = vmul.f32 %v2226, %v2189
          %v2228 = vmul.f32 %v2226, %v2190
          %v2229 = vadd.f32 %v2223, %v2227
          %v2230 = vadd.f32 %v2224, %v2228
          %s2231 = sld [smem:[#allocation3 + $0x280]]
          %v2232 = vstv %s2231
          %v2233 = vmul.f32 %v2232, %v2192
          %v2234 = vmul.f32 %v2232, %v2193
          %v2235 = vadd.f32 %v2229, %v2233
          %v2236 = vadd.f32 %v2230, %v2234
          %s2237 = sld [smem:[#allocation3 + $0x300]]
          %v2238 = vstv %s2237
          %v2239 = vmul.f32 %v2238, %v2195
          %v2240 = vmul.f32 %v2238, %v2196
          %v2241 = vadd.f32 %v2235, %v2239
          %v2242 = vadd.f32 %v2236, %v2240
          %s2243 = sld [smem:[#allocation3 + $0x380]]
          %v2244 = vstv %s2243
          %v2245 = vmul.f32 %v2244, %v2198
          %v2246 = vmul.f32 %v2244, %v2199
          %v2247 = vadd.f32 %v2241, %v2245
          %v2248 = vadd.f32 %v2242, %v2246
          %s2249 = sld [smem:[#allocation3 + $0x400]]
          %v2250 = vstv %s2249
          %v2251 = vmul.f32 %v2250, %v2201
          %v2252 = vmul.f32 %v2250, %v2202
          %v2253 = vadd.f32 %v2247, %v2251
          %v2254 = vadd.f32 %v2248, %v2252
          %s2255 = sld [smem:[#allocation5]]
          %v2256 = vstv %s2255
          %v2257 = vadd.f32 %v2253, %v2256
          %v2258 = vadd.f32 %v2254, %v2256
          %v2259 = vmax.f32 %v2257, 0.0
          %v2260 = vmax.f32 %v2258, 0.0
          %v2261 = vadd.f32 %v2259, %v2260
          %2262 = vadd.xlane.f32.xlu0 %v2261
          %v2263 = vpop.xlane.xlu0 %2262
          %v2264 = vmul.f32 %v2263, 0.00390625
          %vm2265 = vcmp.eq.s32.totalorder %v2176, 0
          %v2266 = vsel %vm2265, %v2264, 0.0
          %v2267 = vadd.f32 %v2266, 0.0
          %s2268 = sld [smem:[#allocation3 + $0x1]]
          %v2269 = vstv %s2268
          %v2270 = vmul.f32 %v2177, %v2269
          %v2271 = vmul.f32 %v2178, %v2269
          %s2272 = sld [smem:[#allocation3 + $0x81]]
          %v2273 = vstv %s2272
          %v2274 = vmul.f32 %v2273, %v2180
          %v2275 = vmul.f32 %v2273, %v2181
          %v2276 = vadd.f32 %v2270, %v2274
          %v2277 = vadd.f32 %v2271, %v2275
          %s2278 = sld [smem:[#allocation3 + $0x101]]
          %v2279 = vstv %s2278
          %v2280 = vmul.f32 %v2279, %v2183
          %v2281 = vmul.f32 %v2279, %v2184
          %v2282 = vadd.f32 %v2276, %v2280
          %v2283 = vadd.f32 %v2277, %v2281
          %s2284 = sld [smem:[#allocation3 + $0x181]]
          %v2285 = vstv %s2284
          %v2286 = vmul.f32 %v2285, %v2186
          %v2287 = vmul.f32 %v2285, %v2187
          %v2288 = vadd.f32 %v2282, %v2286
          %v2289 = vadd.f32 %v2283, %v2287
          %s2290 = sld [smem:[#allocation3 + $0x201]]
          %v2291 = vstv %s2290
          %v2292 = vmul.f32 %v2291, %v2189
          %v2293 = vmul.f32 %v2291, %v2190
          %v2294 = vadd.f32 %v2288, %v2292
          %v2295 = vadd.f32 %v2289, %v2293
          %s2296 = sld [smem:[#allocation3 + $0x281]]
          %v2297 = vstv %s2296
          %v2298 = vmul.f32 %v2297, %v2192
          %v2299 = vmul.f32 %v2297, %v2193
          %v2300 = vadd.f32 %v2294, %v2298
          %v2301 = vadd.f32 %v2295, %v2299
          %s2302 = sld [smem:[#allocation3 + $0x301]]
          %v2303 = vstv %s2302
          %v2304 = vmul.f32 %v2303, %v2195
          %v2305 = vmul.f32 %v2303, %v2196
          %v2306 = vadd.f32 %v2300, %v2304
          %v2307 = vadd.f32 %v2301, %v2305
          %s2308 = sld [smem:[#allocation3 + $0x381]]
          %v2309 = vstv %s2308
          %v2310 = vmul.f32 %v2309, %v2198
          %v2311 = vmul.f32 %v2309, %v2199
          %v2312 = vadd.f32 %v2306, %v2310
          %v2313 = vadd.f32 %v2307, %v2311
          %s2314 = sld [smem:[#allocation3 + $0x401]]
          %v2315 = vstv %s2314
          %v2316 = vmul.f32 %v2315, %v2201
          %v2317 = vmul.f32 %v2315, %v2202
          %v2318 = vadd.f32 %v2312, %v2316
          %v2319 = vadd.f32 %v2313, %v2317
          %s2320 = sld [smem:[#allocation5 + $0x1]]
          %v2321 = vstv %s2320
          %v2322 = vadd.f32 %v2318, %v2321
          %v2323 = vadd.f32 %v2319, %v2321
          %v2324 = vmax.f32 %v2322, 0.0
          %v2325 = vmax.f32 %v2323, 0.0
          %v2326 = vadd.f32 %v2324, %v2325
          %2327 = vadd.xlane.f32.xlu0 %v2326
          %v2328 = vpop.xlane.xlu0 %2327
          %v2329 = vmul.f32 %v2328, 0.00390625
          %vm2330 = vcmp.eq.s32.totalorder %v2176, 1
          %v2331 = vsel %vm2330, %v2329, 0.0
          %v2332 = vadd.f32 %v2267, %v2331
          %s2333 = sld [smem:[#allocation3 + $0x2]]
          %v2334 = vstv %s2333
          %v2335 = vmul.f32 %v2177, %v2334
          %v2336 = vmul.f32 %v2178, %v2334
          %s2337 = sld [smem:[#allocation3 + $0x82]]
          %v2338 = vstv %s2337
          %v2339 = vmul.f32 %v2338, %v2180
          %v2340 = vmul.f32 %v2338, %v2181
          %v2341 = vadd.f32 %v2335, %v2339
          %v2342 = vadd.f32 %v2336, %v2340
          %s2343 = sld [smem:[#allocation3 + $0x102]]
          %v2344 = vstv %s2343
          %v2345 = vmul.f32 %v2344, %v2183
          %v2346 = vmul.f32 %v2344, %v2184
          %v2347 = vadd.f32 %v2341, %v2345
          %v2348 = vadd.f32 %v2342, %v2346
          %s2349 = sld [smem:[#allocation3 + $0x182]]
          %v2350 = vstv %s2349
          %v2351 = vmul.f32 %v2350, %v2186
          %v2352 = vmul.f32 %v2350, %v2187
          %v2353 = vadd.f32 %v2347, %v2351
          %v2354 = vadd.f32 %v2348, %v2352
          %s2355 = sld [smem:[#allocation3 + $0x202]]
          %v2356 = vstv %s2355
          %v2357 = vmul.f32 %v2356, %v2189
          %v2358 = vmul.f32 %v2356, %v2190
          %v2359 = vadd.f32 %v2353, %v2357
          %v2360 = vadd.f32 %v2354, %v2358
          %s2361 = sld [smem:[#allocation3 + $0x282]]
          %v2362 = vstv %s2361
          %v2363 = vmul.f32 %v2362, %v2192
          %v2364 = vmul.f32 %v2362, %v2193
          %v2365 = vadd.f32 %v2359, %v2363
          %v2366 = vadd.f32 %v2360, %v2364
          %s2367 = sld [smem:[#allocation3 + $0x302]]
          %v2368 = vstv %s2367
          %v2369 = vmul.f32 %v2368, %v2195
          %v2370 = vmul.f32 %v2368, %v2196
          %v2371 = vadd.f32 %v2365, %v2369
          %v2372 = vadd.f32 %v2366, %v2370
          %s2373 = sld [smem:[#allocation3 + $0x382]]
          %v2374 = vstv %s2373
          %v2375 = vmul.f32 %v2374, %v2198
          %v2376 = vmul.f32 %v2374, %v2199
          %v2377 = vadd.f32 %v2371, %v2375
          %v2378 = vadd.f32 %v2372, %v2376
          %s2379 = sld [smem:[#allocation3 + $0x402]]
          %v2380 = vstv %s2379
          %v2381 = vmul.f32 %v2380, %v2201
          %v2382 = vmul.f32 %v2380, %v2202
          %v2383 = vadd.f32 %v2377, %v2381
          %v2384 = vadd.f32 %v2378, %v2382
          %s2385 = sld [smem:[#allocation5 + $0x2]]
          %v2386 = vstv %s2385
          %v2387 = vadd.f32 %v2383, %v2386
          %v2388 = vadd.f32 %v2384, %v2386
          %v2389 = vmax.f32 %v2387, 0.0
          %v2390 = vmax.f32 %v2388, 0.0
          %v2391 = vadd.f32 %v2389, %v2390
          %2392 = vadd.xlane.f32.xlu0 %v2391
          %v2393 = vpop.xlane.xlu0 %2392
          %v2394 = vmul.f32 %v2393, 0.00390625
          %vm2395 = vcmp.eq.s32.totalorder %v2176, 2
          %v2396 = vsel %vm2395, %v2394, 0.0
          %v2397 = vadd.f32 %v2332, %v2396
          %s2398 = sld [smem:[#allocation3 + $0x3]]
          %v2399 = vstv %s2398
          %v2400 = vmul.f32 %v2177, %v2399
          %v2401 = vmul.f32 %v2178, %v2399
          %s2402 = sld [smem:[#allocation3 + $0x83]]
          %v2403 = vstv %s2402
          %v2404 = vmul.f32 %v2403, %v2180
          %v2405 = vmul.f32 %v2403, %v2181
          %v2406 = vadd.f32 %v2400, %v2404
          %v2407 = vadd.f32 %v2401, %v2405
          %s2408 = sld [smem:[#allocation3 + $0x103]]
          %v2409 = vstv %s2408
          %v2410 = vmul.f32 %v2409, %v2183
          %v2411 = vmul.f32 %v2409, %v2184
          %v2412 = vadd.f32 %v2406, %v2410
          %v2413 = vadd.f32 %v2407, %v2411
          %s2414 = sld [smem:[#allocation3 + $0x183]]
          %v2415 = vstv %s2414
          %v2416 = vmul.f32 %v2415, %v2186
          %v2417 = vmul.f32 %v2415, %v2187
          %v2418 = vadd.f32 %v2412, %v2416
          %v2419 = vadd.f32 %v2413, %v2417
          %s2420 = sld [smem:[#allocation3 + $0x203]]
          %v2421 = vstv %s2420
          %v2422 = vmul.f32 %v2421, %v2189
          %v2423 = vmul.f32 %v2421, %v2190
          %v2424 = vadd.f32 %v2418, %v2422
          %v2425 = vadd.f32 %v2419, %v2423
          %s2426 = sld [smem:[#allocation3 + $0x283]]
          %v2427 = vstv %s2426
          %v2428 = vmul.f32 %v2427, %v2192
          %v2429 = vmul.f32 %v2427, %v2193
          %v2430 = vadd.f32 %v2424, %v2428
          %v2431 = vadd.f32 %v2425, %v2429
          %s2432 = sld [smem:[#allocation3 + $0x303]]
          %v2433 = vstv %s2432
          %v2434 = vmul.f32 %v2433, %v2195
          %v2435 = vmul.f32 %v2433, %v2196
          %v2436 = vadd.f32 %v2430, %v2434
          %v2437 = vadd.f32 %v2431, %v2435
          %s2438 = sld [smem:[#allocation3 + $0x383]]
          %v2439 = vstv %s2438
          %v2440 = vmul.f32 %v2439, %v2198
          %v2441 = vmul.f32 %v2439, %v2199
          %v2442 = vadd.f32 %v2436, %v2440
          %v2443 = vadd.f32 %v2437, %v2441
          %s2444 = sld [smem:[#allocation3 + $0x403]]
          %v2445 = vstv %s2444
          %v2446 = vmul.f32 %v2445, %v2201
          %v2447 = vmul.f32 %v2445, %v2202
          %v2448 = vadd.f32 %v2442, %v2446
          %v2449 = vadd.f32 %v2443, %v2447
          %s2450 = sld [smem:[#allocation5 + $0x3]]
          %v2451 = vstv %s2450
          %v2452 = vadd.f32 %v2448, %v2451
          %v2453 = vadd.f32 %v2449, %v2451
          %v2454 = vmax.f32 %v2452, 0.0
          %v2455 = vmax.f32 %v2453, 0.0
          %v2456 = vadd.f32 %v2454, %v2455
          %2457 = vadd.xlane.f32.xlu0 %v2456
          %v2458 = vpop.xlane.xlu0 %2457
          %v2459 = vmul.f32 %v2458, 0.00390625
          %vm2460 = vcmp.eq.s32.totalorder %v2176, 3
          %v2461 = vsel %vm2460, %v2459, 0.0
          %v2462 = vadd.f32 %v2397, %v2461
          %s2463 = sld [smem:[#allocation3 + $0x4]]
          %v2464 = vstv %s2463
          %v2465 = vmul.f32 %v2177, %v2464
          %v2466 = vmul.f32 %v2178, %v2464
          %s2467 = sld [smem:[#allocation3 + $0x84]]
          %v2468 = vstv %s2467
          %v2469 = vmul.f32 %v2468, %v2180
          %v2470 = vmul.f32 %v2468, %v2181
          %v2471 = vadd.f32 %v2465, %v2469
          %v2472 = vadd.f32 %v2466, %v2470
          %s2473 = sld [smem:[#allocation3 + $0x104]]
          %v2474 = vstv %s2473
          %v2475 = vmul.f32 %v2474, %v2183
          %v2476 = vmul.f32 %v2474, %v2184
          %v2477 = vadd.f32 %v2471, %v2475
          %v2478 = vadd.f32 %v2472, %v2476
          %s2479 = sld [smem:[#allocation3 + $0x184]]
          %v2480 = vstv %s2479
          %v2481 = vmul.f32 %v2480, %v2186
          %v2482 = vmul.f32 %v2480, %v2187
          %v2483 = vadd.f32 %v2477, %v2481
          %v2484 = vadd.f32 %v2478, %v2482
          %s2485 = sld [smem:[#allocation3 + $0x204]]
          %v2486 = vstv %s2485
          %v2487 = vmul.f32 %v2486, %v2189
          %v2488 = vmul.f32 %v2486, %v2190
          %v2489 = vadd.f32 %v2483, %v2487
          %v2490 = vadd.f32 %v2484, %v2488
          %s2491 = sld [smem:[#allocation3 + $0x284]]
          %v2492 = vstv %s2491
          %v2493 = vmul.f32 %v2492, %v2192
          %v2494 = vmul.f32 %v2492, %v2193
          %v2495 = vadd.f32 %v2489, %v2493
          %v2496 = vadd.f32 %v2490, %v2494
          %s2497 = sld [smem:[#allocation3 + $0x304]]
          %v2498 = vstv %s2497
          %v2499 = vmul.f32 %v2498, %v2195
          %v2500 = vmul.f32 %v2498, %v2196
          %v2501 = vadd.f32 %v2495, %v2499
          %v2502 = vadd.f32 %v2496, %v2500
          %s2503 = sld [smem:[#allocation3 + $0x384]]
          %v2504 = vstv %s2503
          %v2505 = vmul.f32 %v2504, %v2198
          %v2506 = vmul.f32 %v2504, %v2199
          %v2507 = vadd.f32 %v2501, %v2505
          %v2508 = vadd.f32 %v2502, %v2506
          %s2509 = sld [smem:[#allocation3 + $0x404]]
          %v2510 = vstv %s2509
          %v2511 = vmul.f32 %v2510, %v2201
          %v2512 = vmul.f32 %v2510, %v2202
          %v2513 = vadd.f32 %v2507, %v2511
          %v2514 = vadd.f32 %v2508, %v2512
          %s2515 = sld [smem:[#allocation5 + $0x4]]
          %v2516 = vstv %s2515
          %v2517 = vadd.f32 %v2513, %v2516
          %v2518 = vadd.f32 %v2514, %v2516
          %v2519 = vmax.f32 %v2517, 0.0
          %v2520 = vmax.f32 %v2518, 0.0
          %v2521 = vadd.f32 %v2519, %v2520
          %2522 = vadd.xlane.f32.xlu0 %v2521
          %v2523 = vpop.xlane.xlu0 %2522
          %v2524 = vmul.f32 %v2523, 0.00390625
          %vm2525 = vcmp.eq.s32.totalorder %v2176, 4
          %v2526 = vsel %vm2525, %v2524, 0.0
          %v2527 = vadd.f32 %v2462, %v2526
          %s2528 = sld [smem:[#allocation3 + $0x5]]
          %v2529 = vstv %s2528
          %v2530 = vmul.f32 %v2177, %v2529
          %v2531 = vmul.f32 %v2178, %v2529
          %s2532 = sld [smem:[#allocation3 + $0x85]]
          %v2533 = vstv %s2532
          %v2534 = vmul.f32 %v2533, %v2180
          %v2535 = vmul.f32 %v2533, %v2181
          %v2536 = vadd.f32 %v2530, %v2534
          %v2537 = vadd.f32 %v2531, %v2535
          %s2538 = sld [smem:[#allocation3 + $0x105]]
          %v2539 = vstv %s2538
          %v2540 = vmul.f32 %v2539, %v2183
          %v2541 = vmul.f32 %v2539, %v2184
          %v2542 = vadd.f32 %v2536, %v2540
          %v2543 = vadd.f32 %v2537, %v2541
          %s2544 = sld [smem:[#allocation3 + $0x185]]
          %v2545 = vstv %s2544
          %v2546 = vmul.f32 %v2545, %v2186
          %v2547 = vmul.f32 %v2545, %v2187
          %v2548 = vadd.f32 %v2542, %v2546
          %v2549 = vadd.f32 %v2543, %v2547
          %s2550 = sld [smem:[#allocation3 + $0x205]]
          %v2551 = vstv %s2550
          %v2552 = vmul.f32 %v2551, %v2189
          %v2553 = vmul.f32 %v2551, %v2190
          %v2554 = vadd.f32 %v2548, %v2552
          %v2555 = vadd.f32 %v2549, %v2553
          %s2556 = sld [smem:[#allocation3 + $0x285]]
          %v2557 = vstv %s2556
          %v2558 = vmul.f32 %v2557, %v2192
          %v2559 = vmul.f32 %v2557, %v2193
          %v2560 = vadd.f32 %v2554, %v2558
          %v2561 = vadd.f32 %v2555, %v2559
          %s2562 = sld [smem:[#allocation3 + $0x305]]
          %v2563 = vstv %s2562
          %v2564 = vmul.f32 %v2563, %v2195
          %v2565 = vmul.f32 %v2563, %v2196
          %v2566 = vadd.f32 %v2560, %v2564
          %v2567 = vadd.f32 %v2561, %v2565
          %s2568 = sld [smem:[#allocation3 + $0x385]]
          %v2569 = vstv %s2568
          %v2570 = vmul.f32 %v2569, %v2198
          %v2571 = vmul.f32 %v2569, %v2199
          %v2572 = vadd.f32 %v2566, %v2570
          %v2573 = vadd.f32 %v2567, %v2571
          %s2574 = sld [smem:[#allocation3 + $0x405]]
          %v2575 = vstv %s2574
          %v2576 = vmul.f32 %v2575, %v2201
          %v2577 = vmul.f32 %v2575, %v2202
          %v2578 = vadd.f32 %v2572, %v2576
          %v2579 = vadd.f32 %v2573, %v2577
          %s2580 = sld [smem:[#allocation5 + $0x5]]
          %v2581 = vstv %s2580
          %v2582 = vadd.f32 %v2578, %v2581
          %v2583 = vadd.f32 %v2579, %v2581
          %v2584 = vmax.f32 %v2582, 0.0
          %v2585 = vmax.f32 %v2583, 0.0
          %v2586 = vadd.f32 %v2584, %v2585
          %2587 = vadd.xlane.f32.xlu0 %v2586
          %v2588 = vpop.xlane.xlu0 %2587
          %v2589 = vmul.f32 %v2588, 0.00390625
          %vm2590 = vcmp.eq.s32.totalorder %v2176, 5
          %v2591 = vsel %vm2590, %v2589, 0.0
          %v2592 = vadd.f32 %v2527, %v2591
          %s2593 = sld [smem:[#allocation3 + $0x6]]
          %v2594 = vstv %s2593
          %v2595 = vmul.f32 %v2177, %v2594
          %v2596 = vmul.f32 %v2178, %v2594
          %s2597 = sld [smem:[#allocation3 + $0x86]]
          %v2598 = vstv %s2597
          %v2599 = vmul.f32 %v2598, %v2180
          %v2600 = vmul.f32 %v2598, %v2181
          %v2601 = vadd.f32 %v2595, %v2599
          %v2602 = vadd.f32 %v2596, %v2600
          %s2603 = sld [smem:[#allocation3 + $0x106]]
          %v2604 = vstv %s2603
          %v2605 = vmul.f32 %v2604, %v2183
          %v2606 = vmul.f32 %v2604, %v2184
          %v2607 = vadd.f32 %v2601, %v2605
          %v2608 = vadd.f32 %v2602, %v2606
          %s2609 = sld [smem:[#allocation3 + $0x186]]
          %v2610 = vstv %s2609
          %v2611 = vmul.f32 %v2610, %v2186
          %v2612 = vmul.f32 %v2610, %v2187
          %v2613 = vadd.f32 %v2607, %v2611
          %v2614 = vadd.f32 %v2608, %v2612
          %s2615 = sld [smem:[#allocation3 + $0x206]]
          %v2616 = vstv %s2615
          %v2617 = vmul.f32 %v2616, %v2189
          %v2618 = vmul.f32 %v2616, %v2190
          %v2619 = vadd.f32 %v2613, %v2617
          %v2620 = vadd.f32 %v2614, %v2618
          %s2621 = sld [smem:[#allocation3 + $0x286]]
          %v2622 = vstv %s2621
          %v2623 = vmul.f32 %v2622, %v2192
          %v2624 = vmul.f32 %v2622, %v2193
          %v2625 = vadd.f32 %v2619, %v2623
          %v2626 = vadd.f32 %v2620, %v2624
          %s2627 = sld [smem:[#allocation3 + $0x306]]
          %v2628 = vstv %s2627
          %v2629 = vmul.f32 %v2628, %v2195
          %v2630 = vmul.f32 %v2628, %v2196
          %v2631 = vadd.f32 %v2625, %v2629
          %v2632 = vadd.f32 %v2626, %v2630
          %s2633 = sld [smem:[#allocation3 + $0x386]]
          %v2634 = vstv %s2633
          %v2635 = vmul.f32 %v2634, %v2198
          %v2636 = vmul.f32 %v2634, %v2199
          %v2637 = vadd.f32 %v2631, %v2635
          %v2638 = vadd.f32 %v2632, %v2636
          %s2639 = sld [smem:[#allocation3 + $0x406]]
          %v2640 = vstv %s2639
          %v2641 = vmul.f32 %v2640, %v2201
          %v2642 = vmul.f32 %v2640, %v2202
          %v2643 = vadd.f32 %v2637, %v2641
          %v2644 = vadd.f32 %v2638, %v2642
          %s2645 = sld [smem:[#allocation5 + $0x6]]
          %v2646 = vstv %s2645
          %v2647 = vadd.f32 %v2643, %v2646
          %v2648 = vadd.f32 %v2644, %v2646
          %v2649 = vmax.f32 %v2647, 0.0
          %v2650 = vmax.f32 %v2648, 0.0
          %v2651 = vadd.f32 %v2649, %v2650
          %2652 = vadd.xlane.f32.xlu0 %v2651
          %v2653 = vpop.xlane.xlu0 %2652
          %v2654 = vmul.f32 %v2653, 0.00390625
          %vm2655 = vcmp.eq.s32.totalorder %v2176, 6
          %v2656 = vsel %vm2655, %v2654, 0.0
          %v2657 = vadd.f32 %v2592, %v2656
          %s2658 = sld [smem:[#allocation3 + $0x7]]
          %v2659 = vstv %s2658
          %v2660 = vmul.f32 %v2177, %v2659
          %v2661 = vmul.f32 %v2178, %v2659
          %s2662 = sld [smem:[#allocation3 + $0x87]]
          %v2663 = vstv %s2662
          %v2664 = vmul.f32 %v2663, %v2180
          %v2665 = vmul.f32 %v2663, %v2181
          %v2666 = vadd.f32 %v2660, %v2664
          %v2667 = vadd.f32 %v2661, %v2665
          %s2668 = sld [smem:[#allocation3 + $0x107]]
          %v2669 = vstv %s2668
          %v2670 = vmul.f32 %v2669, %v2183
          %v2671 = vmul.f32 %v2669, %v2184
          %v2672 = vadd.f32 %v2666, %v2670
          %v2673 = vadd.f32 %v2667, %v2671
          %s2674 = sld [smem:[#allocation3 + $0x187]]
          %v2675 = vstv %s2674
          %v2676 = vmul.f32 %v2675, %v2186
          %v2677 = vmul.f32 %v2675, %v2187
          %v2678 = vadd.f32 %v2672, %v2676
          %v2679 = vadd.f32 %v2673, %v2677
          %s2680 = sld [smem:[#allocation3 + $0x207]]
          %v2681 = vstv %s2680
          %v2682 = vmul.f32 %v2681, %v2189
          %v2683 = vmul.f32 %v2681, %v2190
          %v2684 = vadd.f32 %v2678, %v2682
          %v2685 = vadd.f32 %v2679, %v2683
          %s2686 = sld [smem:[#allocation3 + $0x287]]
          %v2687 = vstv %s2686
          %v2688 = vmul.f32 %v2687, %v2192
          %v2689 = vmul.f32 %v2687, %v2193
          %v2690 = vadd.f32 %v2684, %v2688
          %v2691 = vadd.f32 %v2685, %v2689
          %s2692 = sld [smem:[#allocation3 + $0x307]]
          %v2693 = vstv %s2692
          %v2694 = vmul.f32 %v2693, %v2195
          %v2695 = vmul.f32 %v2693, %v2196
          %v2696 = vadd.f32 %v2690, %v2694
          %v2697 = vadd.f32 %v2691, %v2695
          %s2698 = sld [smem:[#allocation3 + $0x387]]
          %v2699 = vstv %s2698
          %v2700 = vmul.f32 %v2699, %v2198
          %v2701 = vmul.f32 %v2699, %v2199
          %v2702 = vadd.f32 %v2696, %v2700
          %v2703 = vadd.f32 %v2697, %v2701
          %s2704 = sld [smem:[#allocation3 + $0x407]]
          %v2705 = vstv %s2704
          %v2706 = vmul.f32 %v2705, %v2201
          %v2707 = vmul.f32 %v2705, %v2202
          %v2708 = vadd.f32 %v2702, %v2706
          %v2709 = vadd.f32 %v2703, %v2707
          %s2710 = sld [smem:[#allocation5 + $0x7]]
          %v2711 = vstv %s2710
          %v2712 = vadd.f32 %v2708, %v2711
          %v2713 = vadd.f32 %v2709, %v2711
          %v2714 = vmax.f32 %v2712, 0.0
          %v2715 = vmax.f32 %v2713, 0.0
          %v2716 = vadd.f32 %v2714, %v2715
          %2717 = vadd.xlane.f32.xlu0 %v2716
          %v2718 = vpop.xlane.xlu0 %2717
          %v2719 = vmul.f32 %v2718, 0.00390625
          %vm2720 = vcmp.eq.s32.totalorder %v2176, 7
          %v2721 = vsel %vm2720, %v2719, 0.0
          %v2722 = vadd.f32 %v2657, %v2721
          %s2723 = sld [smem:[#allocation3 + $0x8]]
          %v2724 = vstv %s2723
          %v2725 = vmul.f32 %v2177, %v2724
          %v2726 = vmul.f32 %v2178, %v2724
          %s2727 = sld [smem:[#allocation3 + $0x88]]
          %v2728 = vstv %s2727
          %v2729 = vmul.f32 %v2728, %v2180
          %v2730 = vmul.f32 %v2728, %v2181
          %v2731 = vadd.f32 %v2725, %v2729
          %v2732 = vadd.f32 %v2726, %v2730
          %s2733 = sld [smem:[#allocation3 + $0x108]]
          %v2734 = vstv %s2733
          %v2735 = vmul.f32 %v2734, %v2183
          %v2736 = vmul.f32 %v2734, %v2184
          %v2737 = vadd.f32 %v2731, %v2735
          %v2738 = vadd.f32 %v2732, %v2736
          %s2739 = sld [smem:[#allocation3 + $0x188]]
          %v2740 = vstv %s2739
          %v2741 = vmul.f32 %v2740, %v2186
          %v2742 = vmul.f32 %v2740, %v2187
          %v2743 = vadd.f32 %v2737, %v2741
          %v2744 = vadd.f32 %v2738, %v2742
          %s2745 = sld [smem:[#allocation3 + $0x208]]
          %v2746 = vstv %s2745
          %v2747 = vmul.f32 %v2746, %v2189
          %v2748 = vmul.f32 %v2746, %v2190
          %v2749 = vadd.f32 %v2743, %v2747
          %v2750 = vadd.f32 %v2744, %v2748
          %s2751 = sld [smem:[#allocation3 + $0x288]]
          %v2752 = vstv %s2751
          %v2753 = vmul.f32 %v2752, %v2192
          %v2754 = vmul.f32 %v2752, %v2193
          %v2755 = vadd.f32 %v2749, %v2753
          %v2756 = vadd.f32 %v2750, %v2754
          %s2757 = sld [smem:[#allocation3 + $0x308]]
          %v2758 = vstv %s2757
          %v2759 = vmul.f32 %v2758, %v2195
          %v2760 = vmul.f32 %v2758, %v2196
          %v2761 = vadd.f32 %v2755, %v2759
          %v2762 = vadd.f32 %v2756, %v2760
          %s2763 = sld [smem:[#allocation3 + $0x388]]
          %v2764 = vstv %s2763
          %v2765 = vmul.f32 %v2764, %v2198
          %v2766 = vmul.f32 %v2764, %v2199
          %v2767 = vadd.f32 %v2761, %v2765
          %v2768 = vadd.f32 %v2762, %v2766
          %s2769 = sld [smem:[#allocation3 + $0x408]]
          %v2770 = vstv %s2769
          %v2771 = vmul.f32 %v2770, %v2201
          %v2772 = vmul.f32 %v2770, %v2202
          %v2773 = vadd.f32 %v2767, %v2771
          %v2774 = vadd.f32 %v2768, %v2772
          %s2775 = sld [smem:[#allocation5 + $0x8]]
          %v2776 = vstv %s2775
          %v2777 = vadd.f32 %v2773, %v2776
          %v2778 = vadd.f32 %v2774, %v2776
          %v2779 = vmax.f32 %v2777, 0.0
          %v2780 = vmax.f32 %v2778, 0.0
          %v2781 = vadd.f32 %v2779, %v2780
          %2782 = vadd.xlane.f32.xlu0 %v2781
          %v2783 = vpop.xlane.xlu0 %2782
          %v2784 = vmul.f32 %v2783, 0.00390625
          %vm2785 = vcmp.eq.s32.totalorder %v2176, 8
          %v2786 = vsel %vm2785, %v2784, 0.0
          %v2787 = vadd.f32 %v2722, %v2786
          %s2788 = sld [smem:[#allocation3 + $0x9]]
          %v2789 = vstv %s2788
          %v2790 = vmul.f32 %v2177, %v2789
          %v2791 = vmul.f32 %v2178, %v2789
          %s2792 = sld [smem:[#allocation3 + $0x89]]
          %v2793 = vstv %s2792
          %v2794 = vmul.f32 %v2793, %v2180
          %v2795 = vmul.f32 %v2793, %v2181
          %v2796 = vadd.f32 %v2790, %v2794
          %v2797 = vadd.f32 %v2791, %v2795
          %s2798 = sld [smem:[#allocation3 + $0x109]]
          %v2799 = vstv %s2798
          %v2800 = vmul.f32 %v2799, %v2183
          %v2801 = vmul.f32 %v2799, %v2184
          %v2802 = vadd.f32 %v2796, %v2800
          %v2803 = vadd.f32 %v2797, %v2801
          %s2804 = sld [smem:[#allocation3 + $0x189]]
          %v2805 = vstv %s2804
          %v2806 = vmul.f32 %v2805, %v2186
          %v2807 = vmul.f32 %v2805, %v2187
          %v2808 = vadd.f32 %v2802, %v2806
          %v2809 = vadd.f32 %v2803, %v2807
          %s2810 = sld [smem:[#allocation3 + $0x209]]
          %v2811 = vstv %s2810
          %v2812 = vmul.f32 %v2811, %v2189
          %v2813 = vmul.f32 %v2811, %v2190
          %v2814 = vadd.f32 %v2808, %v2812
          %v2815 = vadd.f32 %v2809, %v2813
          %s2816 = sld [smem:[#allocation3 + $0x289]]
          %v2817 = vstv %s2816
          %v2818 = vmul.f32 %v2817, %v2192
          %v2819 = vmul.f32 %v2817, %v2193
          %v2820 = vadd.f32 %v2814, %v2818
          %v2821 = vadd.f32 %v2815, %v2819
          %s2822 = sld [smem:[#allocation3 + $0x309]]
          %v2823 = vstv %s2822
          %v2824 = vmul.f32 %v2823, %v2195
          %v2825 = vmul.f32 %v2823, %v2196
          %v2826 = vadd.f32 %v2820, %v2824
          %v2827 = vadd.f32 %v2821, %v2825
          %s2828 = sld [smem:[#allocation3 + $0x389]]
          %v2829 = vstv %s2828
          %v2830 = vmul.f32 %v2829, %v2198
          %v2831 = vmul.f32 %v2829, %v2199
          %v2832 = vadd.f32 %v2826, %v2830
          %v2833 = vadd.f32 %v2827, %v2831
          %s2834 = sld [smem:[#allocation3 + $0x409]]
          %v2835 = vstv %s2834
          %v2836 = vmul.f32 %v2835, %v2201
          %v2837 = vmul.f32 %v2835, %v2202
          %v2838 = vadd.f32 %v2832, %v2836
          %v2839 = vadd.f32 %v2833, %v2837
          %s2840 = sld [smem:[#allocation5 + $0x9]]
          %v2841 = vstv %s2840
          %v2842 = vadd.f32 %v2838, %v2841
          %v2843 = vadd.f32 %v2839, %v2841
          %v2844 = vmax.f32 %v2842, 0.0
          %v2845 = vmax.f32 %v2843, 0.0
          %v2846 = vadd.f32 %v2844, %v2845
          %2847 = vadd.xlane.f32.xlu0 %v2846
          %v2848 = vpop.xlane.xlu0 %2847
          %v2849 = vmul.f32 %v2848, 0.00390625
          %vm2850 = vcmp.eq.s32.totalorder %v2176, 9
          %v2851 = vsel %vm2850, %v2849, 0.0
          %v2852 = vadd.f32 %v2787, %v2851
          %s2853 = sld [smem:[#allocation3 + $0xa]]
          %v2854 = vstv %s2853
          %v2855 = vmul.f32 %v2177, %v2854
          %v2856 = vmul.f32 %v2178, %v2854
          %s2857 = sld [smem:[#allocation3 + $0x8a]]
          %v2858 = vstv %s2857
          %v2859 = vmul.f32 %v2858, %v2180
          %v2860 = vmul.f32 %v2858, %v2181
          %v2861 = vadd.f32 %v2855, %v2859
          %v2862 = vadd.f32 %v2856, %v2860
          %s2863 = sld [smem:[#allocation3 + $0x10a]]
          %v2864 = vstv %s2863
          %v2865 = vmul.f32 %v2864, %v2183
          %v2866 = vmul.f32 %v2864, %v2184
          %v2867 = vadd.f32 %v2861, %v2865
          %v2868 = vadd.f32 %v2862, %v2866
          %s2869 = sld [smem:[#allocation3 + $0x18a]]
          %v2870 = vstv %s2869
          %v2871 = vmul.f32 %v2870, %v2186
          %v2872 = vmul.f32 %v2870, %v2187
          %v2873 = vadd.f32 %v2867, %v2871
          %v2874 = vadd.f32 %v2868, %v2872
          %s2875 = sld [smem:[#allocation3 + $0x20a]]
          %v2876 = vstv %s2875
          %v2877 = vmul.f32 %v2876, %v2189
          %v2878 = vmul.f32 %v2876, %v2190
          %v2879 = vadd.f32 %v2873, %v2877
          %v2880 = vadd.f32 %v2874, %v2878
          %s2881 = sld [smem:[#allocation3 + $0x28a]]
          %v2882 = vstv %s2881
          %v2883 = vmul.f32 %v2882, %v2192
          %v2884 = vmul.f32 %v2882, %v2193
          %v2885 = vadd.f32 %v2879, %v2883
          %v2886 = vadd.f32 %v2880, %v2884
          %s2887 = sld [smem:[#allocation3 + $0x30a]]
          %v2888 = vstv %s2887
          %v2889 = vmul.f32 %v2888, %v2195
          %v2890 = vmul.f32 %v2888, %v2196
          %v2891 = vadd.f32 %v2885, %v2889
          %v2892 = vadd.f32 %v2886, %v2890
          %s2893 = sld [smem:[#allocation3 + $0x38a]]
          %v2894 = vstv %s2893
          %v2895 = vmul.f32 %v2894, %v2198
          %v2896 = vmul.f32 %v2894, %v2199
          %v2897 = vadd.f32 %v2891, %v2895
          %v2898 = vadd.f32 %v2892, %v2896
          %s2899 = sld [smem:[#allocation3 + $0x40a]]
          %v2900 = vstv %s2899
          %v2901 = vmul.f32 %v2900, %v2201
          %v2902 = vmul.f32 %v2900, %v2202
          %v2903 = vadd.f32 %v2897, %v2901
          %v2904 = vadd.f32 %v2898, %v2902
          %s2905 = sld [smem:[#allocation5 + $0xa]]
          %v2906 = vstv %s2905
          %v2907 = vadd.f32 %v2903, %v2906
          %v2908 = vadd.f32 %v2904, %v2906
          %v2909 = vmax.f32 %v2907, 0.0
          %v2910 = vmax.f32 %v2908, 0.0
          %v2911 = vadd.f32 %v2909, %v2910
          %2912 = vadd.xlane.f32.xlu0 %v2911
          %v2913 = vpop.xlane.xlu0 %2912
          %v2914 = vmul.f32 %v2913, 0.00390625
          %vm2915 = vcmp.eq.s32.totalorder %v2176, 10
          %v2916 = vsel %vm2915, %v2914, 0.0
          %v2917 = vadd.f32 %v2852, %v2916
          %s2918 = sld [smem:[#allocation3 + $0xb]]
          %v2919 = vstv %s2918
          %v2920 = vmul.f32 %v2177, %v2919
          %v2921 = vmul.f32 %v2178, %v2919
          %s2922 = sld [smem:[#allocation3 + $0x8b]]
          %v2923 = vstv %s2922
          %v2924 = vmul.f32 %v2923, %v2180
          %v2925 = vmul.f32 %v2923, %v2181
          %v2926 = vadd.f32 %v2920, %v2924
          %v2927 = vadd.f32 %v2921, %v2925
          %s2928 = sld [smem:[#allocation3 + $0x10b]]
          %v2929 = vstv %s2928
          %v2930 = vmul.f32 %v2929, %v2183
          %v2931 = vmul.f32 %v2929, %v2184
          %v2932 = vadd.f32 %v2926, %v2930
          %v2933 = vadd.f32 %v2927, %v2931
          %s2934 = sld [smem:[#allocation3 + $0x18b]]
          %v2935 = vstv %s2934
          %v2936 = vmul.f32 %v2935, %v2186
          %v2937 = vmul.f32 %v2935, %v2187
          %v2938 = vadd.f32 %v2932, %v2936
          %v2939 = vadd.f32 %v2933, %v2937
          %s2940 = sld [smem:[#allocation3 + $0x20b]]
          %v2941 = vstv %s2940
          %v2942 = vmul.f32 %v2941, %v2189
          %v2943 = vmul.f32 %v2941, %v2190
          %v2944 = vadd.f32 %v2938, %v2942
          %v2945 = vadd.f32 %v2939, %v2943
          %s2946 = sld [smem:[#allocation3 + $0x28b]]
          %v2947 = vstv %s2946
          %v2948 = vmul.f32 %v2947, %v2192
          %v2949 = vmul.f32 %v2947, %v2193
          %v2950 = vadd.f32 %v2944, %v2948
          %v2951 = vadd.f32 %v2945, %v2949
          %s2952 = sld [smem:[#allocation3 + $0x30b]]
          %v2953 = vstv %s2952
          %v2954 = vmul.f32 %v2953, %v2195
          %v2955 = vmul.f32 %v2953, %v2196
          %v2956 = vadd.f32 %v2950, %v2954
          %v2957 = vadd.f32 %v2951, %v2955
          %s2958 = sld [smem:[#allocation3 + $0x38b]]
          %v2959 = vstv %s2958
          %v2960 = vmul.f32 %v2959, %v2198
          %v2961 = vmul.f32 %v2959, %v2199
          %v2962 = vadd.f32 %v2956, %v2960
          %v2963 = vadd.f32 %v2957, %v2961
          %s2964 = sld [smem:[#allocation3 + $0x40b]]
          %v2965 = vstv %s2964
          %v2966 = vmul.f32 %v2965, %v2201
          %v2967 = vmul.f32 %v2965, %v2202
          %v2968 = vadd.f32 %v2962, %v2966
          %v2969 = vadd.f32 %v2963, %v2967
          %s2970 = sld [smem:[#allocation5 + $0xb]]
          %v2971 = vstv %s2970
          %v2972 = vadd.f32 %v2968, %v2971
          %v2973 = vadd.f32 %v2969, %v2971
          %v2974 = vmax.f32 %v2972, 0.0
          %v2975 = vmax.f32 %v2973, 0.0
          %v2976 = vadd.f32 %v2974, %v2975
          %2977 = vadd.xlane.f32.xlu0 %v2976
          %v2978 = vpop.xlane.xlu0 %2977
          %v2979 = vmul.f32 %v2978, 0.00390625
          %vm2980 = vcmp.eq.s32.totalorder %v2176, 11
          %v2981 = vsel %vm2980, %v2979, 0.0
          %v2982 = vadd.f32 %v2917, %v2981
          %s2983 = sld [smem:[#allocation3 + $0xc]]
          %v2984 = vstv %s2983
          %v2985 = vmul.f32 %v2177, %v2984
          %v2986 = vmul.f32 %v2178, %v2984
          %s2987 = sld [smem:[#allocation3 + $0x8c]]
          %v2988 = vstv %s2987
          %v2989 = vmul.f32 %v2988, %v2180
          %v2990 = vmul.f32 %v2988, %v2181
          %v2991 = vadd.f32 %v2985, %v2989
          %v2992 = vadd.f32 %v2986, %v2990
          %s2993 = sld [smem:[#allocation3 + $0x10c]]
          %v2994 = vstv %s2993
          %v2995 = vmul.f32 %v2994, %v2183
          %v2996 = vmul.f32 %v2994, %v2184
          %v2997 = vadd.f32 %v2991, %v2995
          %v2998 = vadd.f32 %v2992, %v2996
          %s2999 = sld [smem:[#allocation3 + $0x18c]]
          %v3000 = vstv %s2999
          %v3001 = vmul.f32 %v3000, %v2186
          %v3002 = vmul.f32 %v3000, %v2187
          %v3003 = vadd.f32 %v2997, %v3001
          %v3004 = vadd.f32 %v2998, %v3002
          %s3005 = sld [smem:[#allocation3 + $0x20c]]
          %v3006 = vstv %s3005
          %v3007 = vmul.f32 %v3006, %v2189
          %v3008 = vmul.f32 %v3006, %v2190
          %v3009 = vadd.f32 %v3003, %v3007
          %v3010 = vadd.f32 %v3004, %v3008
          %s3011 = sld [smem:[#allocation3 + $0x28c]]
          %v3012 = vstv %s3011
          %v3013 = vmul.f32 %v3012, %v2192
          %v3014 = vmul.f32 %v3012, %v2193
          %v3015 = vadd.f32 %v3009, %v3013
          %v3016 = vadd.f32 %v3010, %v3014
          %s3017 = sld [smem:[#allocation3 + $0x30c]]
          %v3018 = vstv %s3017
          %v3019 = vmul.f32 %v3018, %v2195
          %v3020 = vmul.f32 %v3018, %v2196
          %v3021 = vadd.f32 %v3015, %v3019
          %v3022 = vadd.f32 %v3016, %v3020
          %s3023 = sld [smem:[#allocation3 + $0x38c]]
          %v3024 = vstv %s3023
          %v3025 = vmul.f32 %v3024, %v2198
          %v3026 = vmul.f32 %v3024, %v2199
          %v3027 = vadd.f32 %v3021, %v3025
          %v3028 = vadd.f32 %v3022, %v3026
          %s3029 = sld [smem:[#allocation3 + $0x40c]]
          %v3030 = vstv %s3029
          %v3031 = vmul.f32 %v3030, %v2201
          %v3032 = vmul.f32 %v3030, %v2202
          %v3033 = vadd.f32 %v3027, %v3031
          %v3034 = vadd.f32 %v3028, %v3032
          %s3035 = sld [smem:[#allocation5 + $0xc]]
          %v3036 = vstv %s3035
          %v3037 = vadd.f32 %v3033, %v3036
          %v3038 = vadd.f32 %v3034, %v3036
          %v3039 = vmax.f32 %v3037, 0.0
          %v3040 = vmax.f32 %v3038, 0.0
          %v3041 = vadd.f32 %v3039, %v3040
          %3042 = vadd.xlane.f32.xlu0 %v3041
          %v3043 = vpop.xlane.xlu0 %3042
          %v3044 = vmul.f32 %v3043, 0.00390625
          %vm3045 = vcmp.eq.s32.totalorder %v2176, 12
          %v3046 = vsel %vm3045, %v3044, 0.0
          %v3047 = vadd.f32 %v2982, %v3046
          %s3048 = sld [smem:[#allocation3 + $0xd]]
          %v3049 = vstv %s3048
          %v3050 = vmul.f32 %v2177, %v3049
          %v3051 = vmul.f32 %v2178, %v3049
          %s3052 = sld [smem:[#allocation3 + $0x8d]]
          %v3053 = vstv %s3052
          %v3054 = vmul.f32 %v3053, %v2180
          %v3055 = vmul.f32 %v3053, %v2181
          %v3056 = vadd.f32 %v3050, %v3054
          %v3057 = vadd.f32 %v3051, %v3055
          %s3058 = sld [smem:[#allocation3 + $0x10d]]
          %v3059 = vstv %s3058
          %v3060 = vmul.f32 %v3059, %v2183
          %v3061 = vmul.f32 %v3059, %v2184
          %v3062 = vadd.f32 %v3056, %v3060
          %v3063 = vadd.f32 %v3057, %v3061
          %s3064 = sld [smem:[#allocation3 + $0x18d]]
          %v3065 = vstv %s3064
          %v3066 = vmul.f32 %v3065, %v2186
          %v3067 = vmul.f32 %v3065, %v2187
          %v3068 = vadd.f32 %v3062, %v3066
          %v3069 = vadd.f32 %v3063, %v3067
          %s3070 = sld [smem:[#allocation3 + $0x20d]]
          %v3071 = vstv %s3070
          %v3072 = vmul.f32 %v3071, %v2189
          %v3073 = vmul.f32 %v3071, %v2190
          %v3074 = vadd.f32 %v3068, %v3072
          %v3075 = vadd.f32 %v3069, %v3073
          %s3076 = sld [smem:[#allocation3 + $0x28d]]
          %v3077 = vstv %s3076
          %v3078 = vmul.f32 %v3077, %v2192
          %v3079 = vmul.f32 %v3077, %v2193
          %v3080 = vadd.f32 %v3074, %v3078
          %v3081 = vadd.f32 %v3075, %v3079
          %s3082 = sld [smem:[#allocation3 + $0x30d]]
          %v3083 = vstv %s3082
          %v3084 = vmul.f32 %v3083, %v2195
          %v3085 = vmul.f32 %v3083, %v2196
          %v3086 = vadd.f32 %v3080, %v3084
          %v3087 = vadd.f32 %v3081, %v3085
          %s3088 = sld [smem:[#allocation3 + $0x38d]]
          %v3089 = vstv %s3088
          %v3090 = vmul.f32 %v3089, %v2198
          %v3091 = vmul.f32 %v3089, %v2199
          %v3092 = vadd.f32 %v3086, %v3090
          %v3093 = vadd.f32 %v3087, %v3091
          %s3094 = sld [smem:[#allocation3 + $0x40d]]
          %v3095 = vstv %s3094
          %v3096 = vmul.f32 %v3095, %v2201
          %v3097 = vmul.f32 %v3095, %v2202
          %v3098 = vadd.f32 %v3092, %v3096
          %v3099 = vadd.f32 %v3093, %v3097
          %s3100 = sld [smem:[#allocation5 + $0xd]]
          %v3101 = vstv %s3100
          %v3102 = vadd.f32 %v3098, %v3101
          %v3103 = vadd.f32 %v3099, %v3101
          %v3104 = vmax.f32 %v3102, 0.0
          %v3105 = vmax.f32 %v3103, 0.0
          %v3106 = vadd.f32 %v3104, %v3105
          %3107 = vadd.xlane.f32.xlu0 %v3106
          %v3108 = vpop.xlane.xlu0 %3107
          %v3109 = vmul.f32 %v3108, 0.00390625
          %vm3110 = vcmp.eq.s32.totalorder %v2176, 13
          %v3111 = vsel %vm3110, %v3109, 0.0
          %v3112 = vadd.f32 %v3047, %v3111
          %s3113 = sld [smem:[#allocation3 + $0xe]]
          %v3114 = vstv %s3113
          %v3115 = vmul.f32 %v2177, %v3114
          %v3116 = vmul.f32 %v2178, %v3114
          %s3117 = sld [smem:[#allocation3 + $0x8e]]
          %v3118 = vstv %s3117
          %v3119 = vmul.f32 %v3118, %v2180
          %v3120 = vmul.f32 %v3118, %v2181
          %v3121 = vadd.f32 %v3115, %v3119
          %v3122 = vadd.f32 %v3116, %v3120
          %s3123 = sld [smem:[#allocation3 + $0x10e]]
          %v3124 = vstv %s3123
          %v3125 = vmul.f32 %v3124, %v2183
          %v3126 = vmul.f32 %v3124, %v2184
          %v3127 = vadd.f32 %v3121, %v3125
          %v3128 = vadd.f32 %v3122, %v3126
          %s3129 = sld [smem:[#allocation3 + $0x18e]]
          %v3130 = vstv %s3129
          %v3131 = vmul.f32 %v3130, %v2186
          %v3132 = vmul.f32 %v3130, %v2187
          %v3133 = vadd.f32 %v3127, %v3131
          %v3134 = vadd.f32 %v3128, %v3132
          %s3135 = sld [smem:[#allocation3 + $0x20e]]
          %v3136 = vstv %s3135
          %v3137 = vmul.f32 %v3136, %v2189
          %v3138 = vmul.f32 %v3136, %v2190
          %v3139 = vadd.f32 %v3133, %v3137
          %v3140 = vadd.f32 %v3134, %v3138
          %s3141 = sld [smem:[#allocation3 + $0x28e]]
          %v3142 = vstv %s3141
          %v3143 = vmul.f32 %v3142, %v2192
          %v3144 = vmul.f32 %v3142, %v2193
          %v3145 = vadd.f32 %v3139, %v3143
          %v3146 = vadd.f32 %v3140, %v3144
          %s3147 = sld [smem:[#allocation3 + $0x30e]]
          %v3148 = vstv %s3147
          %v3149 = vmul.f32 %v3148, %v2195
          %v3150 = vmul.f32 %v3148, %v2196
          %v3151 = vadd.f32 %v3145, %v3149
          %v3152 = vadd.f32 %v3146, %v3150
          %s3153 = sld [smem:[#allocation3 + $0x38e]]
          %v3154 = vstv %s3153
          %v3155 = vmul.f32 %v3154, %v2198
          %v3156 = vmul.f32 %v3154, %v2199
          %v3157 = vadd.f32 %v3151, %v3155
          %v3158 = vadd.f32 %v3152, %v3156
          %s3159 = sld [smem:[#allocation3 + $0x40e]]
          %v3160 = vstv %s3159
          %v3161 = vmul.f32 %v3160, %v2201
          %v3162 = vmul.f32 %v3160, %v2202
          %v3163 = vadd.f32 %v3157, %v3161
          %v3164 = vadd.f32 %v3158, %v3162
          %s3165 = sld [smem:[#allocation5 + $0xe]]
          %v3166 = vstv %s3165
          %v3167 = vadd.f32 %v3163, %v3166
          %v3168 = vadd.f32 %v3164, %v3166
          %v3169 = vmax.f32 %v3167, 0.0
          %v3170 = vmax.f32 %v3168, 0.0
          %v3171 = vadd.f32 %v3169, %v3170
          %3172 = vadd.xlane.f32.xlu0 %v3171
          %v3173 = vpop.xlane.xlu0 %3172
          %v3174 = vmul.f32 %v3173, 0.00390625
          %vm3175 = vcmp.eq.s32.totalorder %v2176, 14
          %v3176 = vsel %vm3175, %v3174, 0.0
          %v3177 = vadd.f32 %v3112, %v3176
          %s3178 = sld [smem:[#allocation3 + $0xf]]
          %v3179 = vstv %s3178
          %v3180 = vmul.f32 %v2177, %v3179
          %v3181 = vmul.f32 %v2178, %v3179
          %s3182 = sld [smem:[#allocation3 + $0x8f]]
          %v3183 = vstv %s3182
          %v3184 = vmul.f32 %v3183, %v2180
          %v3185 = vmul.f32 %v3183, %v2181
          %v3186 = vadd.f32 %v3180, %v3184
          %v3187 = vadd.f32 %v3181, %v3185
          %s3188 = sld [smem:[#allocation3 + $0x10f]]
          %v3189 = vstv %s3188
          %v3190 = vmul.f32 %v3189, %v2183
          %v3191 = vmul.f32 %v3189, %v2184
          %v3192 = vadd.f32 %v3186, %v3190
          %v3193 = vadd.f32 %v3187, %v3191
          %s3194 = sld [smem:[#allocation3 + $0x18f]]
          %v3195 = vstv %s3194
          %v3196 = vmul.f32 %v3195, %v2186
          %v3197 = vmul.f32 %v3195, %v2187
          %v3198 = vadd.f32 %v3192, %v3196
          %v3199 = vadd.f32 %v3193, %v3197
          %s3200 = sld [smem:[#allocation3 + $0x20f]]
          %v3201 = vstv %s3200
          %v3202 = vmul.f32 %v3201, %v2189
          %v3203 = vmul.f32 %v3201, %v2190
          %v3204 = vadd.f32 %v3198, %v3202
          %v3205 = vadd.f32 %v3199, %v3203
          %s3206 = sld [smem:[#allocation3 + $0x28f]]
          %v3207 = vstv %s3206
          %v3208 = vmul.f32 %v3207, %v2192
          %v3209 = vmul.f32 %v3207, %v2193
          %v3210 = vadd.f32 %v3204, %v3208
          %v3211 = vadd.f32 %v3205, %v3209
          %s3212 = sld [smem:[#allocation3 + $0x30f]]
          %v3213 = vstv %s3212
          %v3214 = vmul.f32 %v3213, %v2195
          %v3215 = vmul.f32 %v3213, %v2196
          %v3216 = vadd.f32 %v3210, %v3214
          %v3217 = vadd.f32 %v3211, %v3215
          %s3218 = sld [smem:[#allocation3 + $0x38f]]
          %v3219 = vstv %s3218
          %v3220 = vmul.f32 %v3219, %v2198
          %v3221 = vmul.f32 %v3219, %v2199
          %v3222 = vadd.f32 %v3216, %v3220
          %v3223 = vadd.f32 %v3217, %v3221
          %s3224 = sld [smem:[#allocation3 + $0x40f]]
          %v3225 = vstv %s3224
          %v3226 = vmul.f32 %v3225, %v2201
          %v3227 = vmul.f32 %v3225, %v2202
          %v3228 = vadd.f32 %v3222, %v3226
          %v3229 = vadd.f32 %v3223, %v3227
          %s3230 = sld [smem:[#allocation5 + $0xf]]
          %v3231 = vstv %s3230
          %v3232 = vadd.f32 %v3228, %v3231
          %v3233 = vadd.f32 %v3229, %v3231
          %v3234 = vmax.f32 %v3232, 0.0
          %v3235 = vmax.f32 %v3233, 0.0
          %v3236 = vadd.f32 %v3234, %v3235
          %3237 = vadd.xlane.f32.xlu0 %v3236
          %v3238 = vpop.xlane.xlu0 %3237
          %v3239 = vmul.f32 %v3238, 0.00390625
          %vm3240 = vcmp.eq.s32.totalorder %v2176, 15
          %v3241 = vsel %vm3240, %v3239, 0.0
          %v3242 = vadd.f32 %v3177, %v3241
          %v3243 = vpack.c.bf16 %v3242, %v3242
          %v3244 = vld [vmem:[%s10] sm:$0xf]
          %v3245 = vld [vmem:[%s10 + $0x4] sm:$0xf]
          %v3246 = vld [vmem:[%s10 + $0x8] sm:$0xf]
          %v3247 = vld [vmem:[%s10 + $0xc] sm:$0xf]
          %v3248 = vld [vmem:[%s10 + $0x10] sm:$0xf]
          %v3249 = vld [vmem:[%s10 + $0x14] sm:$0xf]
          %v3250 = vld [vmem:[%s10 + $0x18] sm:$0xf]
          %v3251 = vld [vmem:[%s10 + $0x1c] sm:$0xf]
          %v3252 = vld [vmem:[%s10 + $0x20] sm:$0xf]
          %v3253 = vld [vmem:[%s10 + $0x24] sm:$0xf]
          %v3254 = vld [vmem:[%s10 + $0x28] sm:$0xf]
          %v3255 = vld [vmem:[%s10 + $0x2c] sm:$0xf]
          %v3256 = vld [vmem:[%s10 + $0x30] sm:$0xf]
          %v3257 = vld [vmem:[%s10 + $0x34] sm:$0xf]
          %v3258 = vld [vmem:[%s10 + $0x38] sm:$0xf]
          %v3259 = vld [vmem:[%s10 + $0x3c] sm:$0xf]
          %v3260 = vld [vmem:[%s11] sm:$0x1]
          %v3262 = vlaneseq
          %v3263 = vshrl.u32 %v3262, 7
          %v3264 = vsub.s32 0, %v3263
          %v3265 = vrot.slane %v3260, %v3264
          %v3283 = vunpack.c.l.b16 %v3244
          %v3284 = vunpack.c.l.b16 %v3245
          %v3285 = vunpack.c.l.b16 %v3246
          %v3286 = vunpack.c.l.b16 %v3247
          %v3287 = vunpack.c.l.b16 %v3248
          %v3288 = vunpack.c.l.b16 %v3249
          %v3289 = vunpack.c.l.b16 %v3250
          %v3290 = vunpack.c.l.b16 %v3251
          %v3291 = vunpack.c.l.b16 %v3252
          %v3292 = vunpack.c.l.b16 %v3253
          %v3293 = vunpack.c.l.b16 %v3254
          %v3294 = vunpack.c.l.b16 %v3255
          %v3295 = vunpack.c.l.b16 %v3256
          %v3296 = vunpack.c.l.b16 %v3257
          %v3297 = vunpack.c.l.b16 %v3258
          %v3298 = vunpack.c.l.b16 %v3259
          %v3299 = vpack.c.b16 %v3284, %v3283
          %v3300 = vpack.c.b16 %v3286, %v3285
          %v3301 = vpack.c.b16 %v3288, %v3287
          %v3302 = vpack.c.b16 %v3290, %v3289
          %v3303 = vpack.c.b16 %v3292, %v3291
          %v3304 = vpack.c.b16 %v3294, %v3293
          %v3305 = vpack.c.b16 %v3296, %v3295
          %v3306 = vpack.c.b16 %v3298, %v3297
          %3315 = vmatprep.subr.bf16.mxu0 0
          %3316 = vmatpush1.bf16.msra.mxu0 %v3306
          %3317 = vmatprep.subr.bf16.mxu0 0
          %3318 = vmatpush1.bf16.msra.mxu0 %v3305
          %3319 = vmatprep.subr.bf16.mxu0 0
          %3320 = vmatpush1.bf16.msra.mxu0 %v3304
          %3321 = vmatprep.subr.bf16.mxu0 0
          %3322 = vmatpush1.bf16.msra.mxu0 %v3303
          %3323 = vmatprep.subr.bf16.mxu0 0
          %3324 = vmatpush1.bf16.msra.mxu0 %v3302
          %3325 = vmatprep.subr.bf16.mxu0 0
          %3326 = vmatpush1.bf16.msra.mxu0 %v3301
          %3327 = vmatprep.subr.bf16.mxu0 0
          %3328 = vmatpush1.bf16.msra.mxu0 %v3300
          %3329 = vmatprep.subr.bf16.mxu0 0
          %3330 = vmatpush1.bf16.msra.mxu0 %v3299
          %3331 = vmatprep.subr.bf16.mxu0 0
          %3332 = vmatpush2.bf16.msra.mxu0 0
          %3333 = vmatprep.subr.bf16.mxu0 0
          %3334 = vmatpush2.bf16.msra.mxu0 0
          %3335 = vmatprep.subr.bf16.mxu0 0
          %3336 = vmatpush2.bf16.msra.mxu0 0
          %3337 = vmatprep.subr.bf16.mxu0 0
          %3338 = vmatpush2.bf16.msra.mxu0 0
          %3339 = vmatprep.subr.bf16.mxu0 0
          %3340 = vmatpush2.bf16.msra.mxu0 0
          %3341 = vmatprep.subr.bf16.mxu0 0
          %3342 = vmatpush2.bf16.msra.mxu0 0
          %3343 = vmatprep.subr.bf16.mxu0 0
          %3344 = vmatpush2.bf16.msra.mxu0 0
          %3345 = vmatprep.subr.bf16.mxu0 0
          %3346 = vmatpush2.bf16.msra.mxu0 0
          %3347 = vmatprep.mubr.bf16.mxu0 0
          %3348 = vmatmul.mubr.bf16.gmra.mxu0 %v3243
          %v3349 = vpop.f32.mrf.mxu0
          %v3350 = vadd.f32 %v3265, %v3349
          %v3351 = vpop.f32.mrf.mxu0
          %v3352 = vpop.f32.mrf.mxu0
          %v3353 = vpop.f32.mrf.mxu0
          %3354 = vdwg.mxu0
          %v3355 = vmul.f32 %v2174, %v3350
          %3356 = vadd.xlane.f32.xlu0 %v3355
          %v3357 = vpop.xlane.xlu0 %3356
          %3358 = vst [vmem:[%s12] sm:$0xff] %v3357
        $region116: #{zero_shot_forward.1} parent=67 // pred_fallthru
          _
        // Predicated region
        $region117: #{zero_shot_forward.1} parent=67 // pred_check
          %p3359 = pneg %p310
        $region118: #{zero_shot_forward.1} parent=67 // pred_check_branch
          %3361 = sbr.rel (%p3359) target = $region120
        $region119: #{zero_shot_forward.1} parent=67 // pred_region
          _
        $region120: #{zero_shot_forward.1} parent=67 // pred_fallthru
          _
        // Predicated region
        $region121: #{zero_shot_forward.1} parent=67 // pred_check
          %p3362 = pneg %p310
        $region122: #{zero_shot_forward.1} parent=67 // pred_check_branch
          %3364 = sbr.rel (%p3362) target = $region124
        $region123: #{zero_shot_forward.1} parent=67 // pred_region
          _
        $region124: #{zero_shot_forward.1} parent=67 // pred_fallthru
          _
      $region68: #{zero_shot_forward.1} parent=5 // pred_fallthru
        _
      %p3365 = scmp.le.s32.totalorder 2, %s20
      // Predicated region
      $region125: #{zero_shot_forward.1} parent=5 // pred_check
        %p3366 = pneg %p3365
      $region126: #{zero_shot_forward.1} parent=5 // pred_check_branch
        %3368 = sbr.rel (%p3366) target = $region128
      $region127: #{zero_shot_forward.1} parent=5 // pred_region
        %s3369 = ssub.s32 %s20, 2
      $region128: #{zero_shot_forward.1} parent=5 // pred_fallthru
        _
    $region6: #{zero_shot_forward.1} parent=1 // loop_footer
      %s24 = sadd.s32 1, %s20
    $region7: #{zero_shot_forward.1} parent=1 // loop_footer_branch
      %19 = sbr.rel target = $region3
    $region8: #{zero_shot_forward.1} parent=1 // loop_exit
      _
    %3370 = vsyncpa [#allocation4], 1
    %s3371 = scalar_lea.sflag [#allocation4], 1
    %3372 = vsyncpa %s3371, 1
    %3373 = vsyncpa [#allocation6], 1

</llo_original>
